<compile_context>
chip_gen: v5e
topology: v5e:2x2
jax: 0.10.0
libtpu: 0.0.40
codegen_flags: <defaults>
</compile_context>

<pallas_src>
import functools

import jax
import jax.numpy as jnp
from jax import lax
from jax.experimental import pallas as pl
from jax.experimental.pallas import tpu as pltpu


# ----------------------------------------------------------------------------
# small helpers
# ----------------------------------------------------------------------------
def _round_up(x, m):
    return ((x + m - 1) // m) * m


def _pick_tile(n, pref, align):
    """Largest tile <= pref that is a multiple of `align` and divides n
    (n is assumed to be a multiple of `align`)."""
    t = min(pref, n)
    t = max((t // align) * align, align)
    while n % t:
        t -= align
    return t


def _pick_tt(T):
    for tt in (32, 16, 8, 4, 2, 1):
        if T % tt == 0:
            return tt
    return 1


# ----------------------------------------------------------------------------
# Tiled matmul + bias kernel:  y = x @ w + b     (bf16 inputs, f32 accumulate)
# Used for: hoisted GRU input projection, decoder context projection, vocab head.
# ----------------------------------------------------------------------------
def _proj_kernel(x_ref, w_ref, b_ref, o_ref):
    o_ref[...] = (jnp.dot(x_ref[...], w_ref[...],
                          preferred_element_type=jnp.float32)
                  + b_ref[...])


def matmul_bias(x, w, b, *, tm_pref=256, tn_pref=512):
    """x: (N, K), w: (K, M), b: (M,) -> (N, M) f32. N % 8 == 0, K,M % 128 == 0."""
    N, K = x.shape
    M = w.shape[1]
    tm = _pick_tile(N, tm_pref, 8)
    tn = _pick_tile(M, tn_pref, 128)
    return pl.pallas_call(
        _proj_kernel,
        out_shape=jax.ShapeDtypeStruct((N, M), jnp.float32),
        grid_spec=pltpu.PrefetchScalarGridSpec(
            num_scalar_prefetch=0,
            grid=(N // tm, M // tn),
            in_specs=[
                pl.BlockSpec((tm, K), lambda i, j: (i, 0)),
                pl.BlockSpec((K, tn), lambda i, j: (0, j)),
                pl.BlockSpec((1, tn), lambda i, j: (0, j)),
            ],
            out_specs=pl.BlockSpec((tm, tn), lambda i, j: (i, j)),
        ),
        compiler_params=pltpu.CompilerParams(
            dimension_semantics=("parallel", "parallel"),
            vmem_limit_bytes=32 * 1024 * 1024),
    )(x.astype(jnp.bfloat16), w.astype(jnp.bfloat16),
      b.reshape(1, -1).astype(jnp.float32))


# ----------------------------------------------------------------------------
# GRU recurrence kernel. GI (input projection incl. b_ih) is precomputed; the
# constant-over-time context projection is added in-kernel as a per-batch bias.
# Hidden state is carried in VMEM scratch across grid iterations; `tt` timesteps
# are processed per grid step with an unrolled inner loop.
#   collect=True  -> outputs (T,Bp,Hp) + final hidden (Bp,Hp)   [decoder]
#   collect=False -> final hidden (Bp,Hp) only                  [encoder]
# ----------------------------------------------------------------------------
def _gru_kernel(gi_ref, ctx_ref, whh_ref, bhh_ref, h0_ref, *rest, tt, hp, collect):
    if collect:
        out_ref, hT_ref, h_scratch = rest
    else:
        hT_ref, h_scratch = rest
        out_ref = None

    @pl.when(pl.program_id(0) == 0)
    def _():
        h_scratch[...] = h0_ref[...]

    w = whh_ref[...]        # (Hp, 3Hp) bf16, loaded once per grid step
    bhh = bhh_ref[...]      # (1, 3Hp) f32   (recurrent bias, goes with gh)
    ctx = ctx_ref[...]      # (Bp, 3Hp) f32  (decoder context projection, goes with gi)

    def step(i, h):
        gh = jnp.dot(h.astype(jnp.bfloat16), w,
                     preferred_element_type=jnp.float32) + bhh
        gi = gi_ref[i] + ctx                 # (Bp, 3Hp), lane-aligned gate slices
        r = jax.nn.sigmoid(gi[:, 0:hp] + gh[:, 0:hp])
        z = jax.nn.sigmoid(gi[:, hp:2 * hp] + gh[:, hp:2 * hp])
        n = jnp.tanh(gi[:, 2 * hp:3 * hp] + r * gh[:, 2 * hp:3 * hp])
        h_new = (1.0 - z) * n + z * h
        if collect:
            out_ref[i] = h_new
        return h_new

    h_final = lax.fori_loop(0, tt, step, h_scratch[...], unroll=True)
    h_scratch[...] = h_final
    hT_ref[...] = h_final                    # resident output block; last write wins


def gru_forward(gi, ctx, whh, bhh, h0, *, collect):
    """gi: (T, Bp, 3Hp) f32; ctx: (Bp, 3Hp) f32; whh: (Hp, 3Hp) bf16;
    bhh: (3Hp,) f32; h0: (Bp, Hp) f32.
    Returns (outputs (T,Bp,Hp), hT (Bp,Hp)) if collect else hT."""
    T, Bp, G3 = gi.shape
    Hp = whh.shape[0]
    tt = _pick_tt(T)
    kernel = functools.partial(_gru_kernel, tt=tt, hp=Hp, collect=collect)

    in_specs = [
        pl.BlockSpec((tt, Bp, G3), lambda t: (t, 0, 0)),   # GI time block
        pl.BlockSpec((Bp, G3), lambda t: (0, 0)),          # context bias
        pl.BlockSpec((Hp, G3), lambda t: (0, 0)),          # W_hh (packed)
        pl.BlockSpec((1, G3), lambda t: (0, 0)),           # b_hh (packed)
        pl.BlockSpec((Bp, Hp), lambda t: (0, 0)),          # h0
    ]
    hT_shape = jax.ShapeDtypeStruct((Bp, Hp), jnp.float32)
    hT_spec = pl.BlockSpec((Bp, Hp), lambda t: (0, 0))
    if collect:
        out_shape = (jax.ShapeDtypeStruct((T, Bp, Hp), jnp.float32), hT_shape)
        out_specs = (pl.BlockSpec((tt, Bp, Hp), lambda t: (t, 0, 0)), hT_spec)
    else:
        out_shape = hT_shape
        out_specs = hT_spec

    return pl.pallas_call(
        kernel,
        out_shape=out_shape,
        grid_spec=pltpu.PrefetchScalarGridSpec(
            num_scalar_prefetch=0,
            grid=(T // tt,),
            in_specs=in_specs,
            out_specs=out_specs,
            scratch_shapes=[pltpu.VMEM((Bp, Hp), jnp.float32)],
        ),
        compiler_params=pltpu.CompilerParams(
            dimension_semantics=("arbitrary",),
            vmem_limit_bytes=32 * 1024 * 1024),
    )(gi, ctx, whh, bhh.reshape(1, -1), h0)


# ----------------------------------------------------------------------------
# Parameter packing: pre-transpose, gate-rearrange, zero-pad, cast to bf16.
# Gate g of the padded layout occupies columns [g*Hp, g*Hp + H); padded hidden
# units have zero weights/biases so they stay exactly 0 through the recurrence.
# ----------------------------------------------------------------------------
def _pack_w_in(w, in_dim, in_pad, h, h_pad):
    """w: (3h, in_dim) torch-GRU layout -> (in_pad, 3*h_pad), pre-transposed."""
    out = jnp.zeros((in_pad, 3 * h_pad), jnp.float32)
    for g in range(3):
        out = out.at[:in_dim, g * h_pad:g * h_pad + h].set(
            w[g * h:(g + 1) * h, :].T)
    return out


def _pack_bias(b, h, h_pad):
    out = jnp.zeros((3 * h_pad,), jnp.float32)
    for g in range(3):
        out = out.at[g * h_pad:g * h_pad + h].set(b[g * h:(g + 1) * h])
    return out


def _pad2(a, r, c):
    return jnp.zeros((r, c), jnp.float32).at[:a.shape[0], :a.shape[1]].set(a)


def prepare_params(params):
    H = params["enc_whh"].shape[-1]
    E = params["enc_embed"].shape[-1]
    V = params["out_w"].shape[0]
    Hp, Ep, Vp = _round_up(H, 128), _round_up(E, 128), _round_up(V, 128)

    dec_wih = params["dec_wih"]          # (3H, E+H): [:, :E] = emb part, [:, E:] = context part
    w_emb, w_ctx = dec_wih[:, :E], dec_wih[:, E:]

    return {
        "H": H, "E": E, "V": V, "Hp": Hp, "Ep": Ep, "Vp": Vp,
        "enc_wih": _pack_w_in(params["enc_wih"], E, Ep, H, Hp).astype(jnp.bfloat16),
        "enc_whh": _pack_w_in(params["enc_whh"], H, Hp, H, Hp).astype(jnp.bfloat16),
        "enc_bih": _pack_bias(params["enc_bih"], H, Hp),
        "enc_bhh": _pack_bias(params["enc_bhh"], H, Hp),
        "dec_wemb": _pack_w_in(w_emb, E, Ep, H, Hp).astype(jnp.bfloat16),
        "dec_wctx": _pack_w_in(w_ctx, H, Hp, H, Hp).astype(jnp.bfloat16),
        "dec_whh": _pack_w_in(params["dec_whh"], H, Hp, H, Hp).astype(jnp.bfloat16),
        "dec_bih": _pack_bias(params["dec_bih"], H, Hp),
        "dec_bhh": _pack_bias(params["dec_bhh"], H, Hp),
        "out_w": _pad2(params["out_w"].T, Hp, Vp).astype(jnp.bfloat16),
        "out_b": jnp.zeros((Vp,), jnp.float32).at[:V].set(params["out_b"]),
    }


# ----------------------------------------------------------------------------
# Forward pass (matches the PyTorch EncoderDecoder semantics)
# ----------------------------------------------------------------------------
def _embed_time_major_padded(embed_table, tokens, Bp, Fp):
    """tokens: (B, T) int32 -> (T, Bp, Fp) f32, zero-padded."""
    B, T = tokens.shape
    emb = jnp.take(embed_table, tokens, axis=0)                  # (B, T, E) - glue gather
    x = jnp.transpose(emb, (1, 0, 2)).astype(jnp.float32)        # (T, B, E)
    return jnp.zeros((T, Bp, Fp), jnp.float32).at[:, :B, :x.shape[-1]].set(x)


def encoder_forward(params, pp, enc_x):
    B, T = enc_x.shape
    Bp = _round_up(B, 8)
    Hp, Ep = pp["Hp"], pp["Ep"]
    x_p = _embed_time_major_padded(params["enc_embed"], enc_x, Bp, Ep)
    # hoisted input projection: one big matmul over all timesteps
    gi = matmul_bias(x_p.reshape(T * Bp, Ep), pp["enc_wih"], pp["enc_bih"])
    gi = gi.reshape(T, Bp, 3 * Hp)
    h0 = jnp.zeros((Bp, Hp), jnp.float32)
    zero_ctx = jnp.zeros((Bp, 3 * Hp), jnp.float32)
    # encoder: only the final hidden state is needed downstream
    hT = gru_forward(gi, zero_ctx, pp["enc_whh"], pp["enc_bhh"], h0, collect=False)
    return hT


def decoder_forward(params, pp, dec_x, state_p):
    """state_p: (Bp, Hp) padded encoder final hidden (= decoder h0 and context)."""
    B, T = dec_x.shape
    Bp = state_p.shape[0]
    Hp, Ep, Vp = pp["Hp"], pp["Ep"], pp["Vp"]

    x_p = _embed_time_major_padded(params["dec_embed"], dec_x, Bp, Ep)
    # embedding part of the input projection (all timesteps at once, incl. b_ih)
    gi = matmul_bias(x_p.reshape(T * Bp, Ep), pp["dec_wemb"], pp["dec_bih"])
    gi = gi.reshape(T, Bp, 3 * Hp)
    # context part: constant over T -> computed ONCE, added inside the GRU kernel
    gi_ctx = matmul_bias(state_p, pp["dec_wctx"], jnp.zeros((3 * Hp,), jnp.float32))

    outs, hT = gru_forward(gi, gi_ctx, pp["dec_whh"], pp["dec_bhh"], state_p,
                           collect=True)

    # dense vocab head on all timesteps at once (tiled Pallas matmul)
    logits_p = matmul_bias(outs.reshape(T * Bp, Hp), pp["out_w"], pp["out_b"])
    logits = logits_p.reshape(T, Bp, Vp).transpose(1, 0, 2)[:B, :, :pp["V"]]
    return logits, hT


def encoder_decoder_forward(params, enc_x, dec_x):
    pp = prepare_params(params)
    enc_hT = encoder_forward(params, pp, enc_x)        # decoder.init_state == enc state
    logits, dec_hT = decoder_forward(params, pp, dec_x, enc_hT)
    B = enc_x.shape[0]
    state = dec_hT[:B, :pp["H"]][None]                 # (num_layers=1, B, H)
    return logits, state


# ----------------------------------------------------------------------------
# Deterministic parameter init (PyTorch-GRU shaped)
# ----------------------------------------------------------------------------
def init_params(key, vocab, embed, hidden):
    keys = jax.random.split(key, 12)
    s = 1.0 / jnp.sqrt(hidden)

    def u(k, shape):
        return jax.random.uniform(k, shape, jnp.float32, -s, s)

    return {
        "enc_embed": u(keys[0], (vocab, embed)),
        "enc_wih": u(keys[1], (3 * hidden, embed)),
        "enc_whh": u(keys[2], (3 * hidden, hidden)),
        "enc_bih": u(keys[3], (3 * hidden,)),
        "enc_bhh": u(keys[4], (3 * hidden,)),
        "dec_embed": u(keys[5], (vocab, embed)),
        "dec_wih": u(keys[6], (3 * hidden, embed + hidden)),
        "dec_whh": u(keys[7], (3 * hidden, hidden)),
        "dec_bih": u(keys[8], (3 * hidden,)),
        "dec_bhh": u(keys[9], (3 * hidden,)),
        "out_w": u(keys[10], (vocab, hidden)),
        "out_b": u(keys[11], (vocab,)),
    }


if __name__ == "__main__":
    VOCAB, EMBED, HIDDEN = 16, 32, 32
    B, T = 2, 8

    key = jax.random.PRNGKey(0)
    kp, ke, kd = jax.random.split(key, 3)
    params = init_params(kp, VOCAB, EMBED, HIDDEN)

    enc_x = jax.random.randint(ke, (B, T), 0, VOCAB, dtype=jnp.int32)
    dec_x = jax.random.randint(kd, (B, T), 0, VOCAB, dtype=jnp.int32)

    logits, state = jax.jit(encoder_decoder_forward)(params, enc_x, dec_x)
    jax.block_until_ready((logits, state))

    assert logits.shape == (B, T, VOCAB)
    assert state.shape == (1, B, HIDDEN)
    print("KERNEL_OK")
</pallas_src>

<mosaic_0001>
module attributes {stable_mosaic.version = 11 : i64} {
  func.func @_proj_kernel(%arg0: i32, %arg1: i32, %arg2: memref<64x128xbf16, #tpu.memory_space<vmem>>, %arg3: memref<128x384xbf16, #tpu.memory_space<vmem>>, %arg4: memref<1x384xf32, #tpu.memory_space<vmem>>, %arg5: memref<64x384xf32, #tpu.memory_space<vmem>>) attributes {dimension_semantics = [#tpu.dimension_semantics<parallel>, #tpu.dimension_semantics<parallel>], iteration_bounds = array<i64: 1, 1>, scalar_prefetch = 0 : i64, scratch_operands = 0 : i64, tpu.core_type = #tpu.core_type<tc>, window_params = [{transform_indices = @transform_0, window_bounds = array<i64: 64, 128>}, {transform_indices = @transform_1, window_bounds = array<i64: 128, 384>}, {transform_indices = @transform_2, window_bounds = array<i64: 1, 384>}, {transform_indices = @transform_3, window_bounds = array<i64: 64, 384>}]} {
    %c0 = arith.constant 0 : index
    %c0_0 = arith.constant 0 : index
    %0 = vector.load %arg2[%c0, %c0_0] : memref<64x128xbf16, #tpu.memory_space<vmem>>, vector<64x128xbf16>
    %c0_1 = arith.constant 0 : index
    %c0_2 = arith.constant 0 : index
    %1 = vector.load %arg3[%c0_1, %c0_2] : memref<128x384xbf16, #tpu.memory_space<vmem>>, vector<128x384xbf16>
    %cst = arith.constant dense<0.000000e+00> : vector<64x384xf32>
    %2 = tpu.matmul %0, %1, %cst {dimension_numbers = #tpu.dot_dimension_numbers<[1], [0], [0], [1], [0, 0, 1, 1], [], []>} : vector<64x128xbf16>, vector<128x384xbf16>, vector<64x384xf32> -> vector<64x384xf32>
    %c0_3 = arith.constant 0 : index
    %c0_4 = arith.constant 0 : index
    %3 = vector.load %arg4[%c0_3, %c0_4] : memref<1x384xf32, #tpu.memory_space<vmem>>, vector<1x384xf32>
    %4 = vector.broadcast %3 : vector<1x384xf32> to vector<64x384xf32>
    %5 = arith.addf %2, %4 : vector<64x384xf32>
    %c0_5 = arith.constant 0 : index
    %c0_6 = arith.constant 0 : index
    %6 = vector.load %arg5[%c0_5, %c0_6] : memref<64x384xf32, #tpu.memory_space<vmem>>, vector<64x384xf32>
    tpu.vector_store %arg5[%c0_5, %c0_6], %5 {strides = array<i32>} : memref<64x384xf32, #tpu.memory_space<vmem>>, vector<64x384xf32>,
    return
  }
  func.func @transform_0(%arg0: i32, %arg1: i32) -> (i32, i32) {
    %c0_i32 = arith.constant 0 : i32
    %c0_i32_0 = arith.constant 0 : i32
    return %arg0, %c0_i32 : i32, i32
  }
  func.func @transform_1(%arg0: i32, %arg1: i32) -> (i32, i32) {
    %c0_i32 = arith.constant 0 : i32
    %c0_i32_0 = arith.constant 0 : i32
    return %c0_i32, %arg1 : i32, i32
  }
  func.func @transform_2(%arg0: i32, %arg1: i32) -> (i32, i32) {
    %c0_i32 = arith.constant 0 : i32
    %c0_i32_0 = arith.constant 0 : i32
    return %c0_i32, %arg1 : i32, i32
  }
  func.func @transform_3(%arg0: i32, %arg1: i32) -> (i32, i32) {
    %c0_i32 = arith.constant 0 : i32
    return %arg0, %arg1 : i32, i32
  }
}

module attributes {stable_mosaic.version = 11 : i64} {
  func.func @_gru_kernel(%arg0: i32, %arg1: memref<8x8x384xf32, #tpu.memory_space<vmem>>, %arg2: memref<8x384xf32, #tpu.memory_space<vmem>>, %arg3: memref<128x384xbf16, #tpu.memory_space<vmem>>, %arg4: memref<1x384xf32, #tpu.memory_space<vmem>>, %arg5: memref<8x128xf32, #tpu.memory_space<vmem>>, %arg6: memref<8x128xf32, #tpu.memory_space<vmem>>, %arg7: memref<8x128xf32, #tpu.memory_space<vmem>>) attributes {dimension_semantics = [#tpu.dimension_semantics<arbitrary>], iteration_bounds = array<i64: 1>, scalar_prefetch = 0 : i64, scratch_operands = 1 : i64, tpu.core_type = #tpu.core_type<tc>, window_params = [{transform_indices = @transform_0, window_bounds = array<i64: 8, 8, 384>}, {pipeline_mode = #tpu.pipeline_mode<synchronous>, transform_indices = @transform_1, window_bounds = array<i64: 8, 384>}, {pipeline_mode = #tpu.pipeline_mode<synchronous>, transform_indices = @transform_2, window_bounds = array<i64: 128, 384>}, {pipeline_mode = #tpu.pipeline_mode<synchronous>, transform_indices = @transform_3, window_bounds = array<i64: 1, 384>}, {pipeline_mode = #tpu.pipeline_mode<synchronous>, transform_indices = @transform_4, window_bounds = array<i64: 8, 128>}, {pipeline_mode = #tpu.pipeline_mode<synchronous>, transform_indices = @transform_5, window_bounds = array<i64: 8, 128>}]} {
    %c0_i32 = arith.constant 0 : i32
    %0 = arith.cmpi eq, %arg0, %c0_i32 : i32
    %1 = arith.extui %0 : i1 to i32
    %c0_i32_0 = arith.constant 0 : i32
    %2 = arith.cmpi ne, %1, %c0_i32_0 : i32
    scf.if %2 {
      %c0_60 = arith.constant 0 : index
      %c0_61 = arith.constant 0 : index
      %281 = vector.load %arg5[%c0_60, %c0_61] : memref<8x128xf32, #tpu.memory_space<vmem>>, vector<8x128xf32>
      %c0_62 = arith.constant 0 : index
      %c0_63 = arith.constant 0 : index
      %282 = vector.load %arg7[%c0_62, %c0_63] : memref<8x128xf32, #tpu.memory_space<vmem>>, vector<8x128xf32>
      tpu.vector_store %arg7[%c0_62, %c0_63], %281 {strides = array<i32>} : memref<8x128xf32, #tpu.memory_space<vmem>>, vector<8x128xf32>,
    } else {
    }
    %c0 = arith.constant 0 : index
    %c0_1 = arith.constant 0 : index
    %3 = vector.load %arg3[%c0, %c0_1] : memref<128x384xbf16, #tpu.memory_space<vmem>>, vector<128x384xbf16>
    %c0_2 = arith.constant 0 : index
    %c0_3 = arith.constant 0 : index
    %4 = vector.load %arg4[%c0_2, %c0_3] : memref<1x384xf32, #tpu.memory_space<vmem>>, vector<1x384xf32>
    %c0_4 = arith.constant 0 : index
    %c0_5 = arith.constant 0 : index
    %5 = vector.load %arg2[%c0_4, %c0_5] : memref<8x384xf32, #tpu.memory_space<vmem>>, vector<8x384xf32>
    %c0_6 = arith.constant 0 : index
    %c0_7 = arith.constant 0 : index
    %6 = vector.load %arg7[%c0_6, %c0_7] : memref<8x128xf32, #tpu.memory_space<vmem>>, vector<8x128xf32>
    %c0_i32_8 = arith.constant 0 : i32
    %7 = arith.truncf %6 : vector<8x128xf32> to vector<8x128xbf16>
    %cst = arith.constant dense<0.000000e+00> : vector<8x384xf32>
    %8 = tpu.matmul %7, %3, %cst {dimension_numbers = #tpu.dot_dimension_numbers<[1], [0], [0], [1], [0, 0, 1, 1], [], []>} : vector<8x128xbf16>, vector<128x384xbf16>, vector<8x384xf32> -> vector<8x384xf32>
    %9 = vector.broadcast %4 : vector<1x384xf32> to vector<8x384xf32>
    %10 = arith.addf %8, %9 : vector<8x384xf32>
    %11 = arith.index_cast %c0_i32_8 : i32 to index
    %c0_9 = arith.constant 0 : index
    %c0_10 = arith.constant 0 : index
    %12 = vector.load %arg1[%11, %c0_9, %c0_10] : memref<8x8x384xf32, #tpu.memory_space<vmem>>, vector<1x8x384xf32>
    %13 = vector.shape_cast %12 : vector<1x8x384xf32> to vector<8x384xf32>
    %14 = arith.addf %13, %5 : vector<8x384xf32>
    %15 = vector.extract_strided_slice %14 {offsets = [0, 0], sizes = [8, 128], strides = [1, 1]} : vector<8x384xf32> to vector<8x128xf32>
    %16 = vector.extract_strided_slice %10 {offsets = [0, 0], sizes = [8, 128], strides = [1, 1]} : vector<8x384xf32> to vector<8x128xf32>
    %17 = arith.addf %15, %16 : vector<8x128xf32>
    %18 = arith.negf %17 : vector<8x128xf32>
    %19 = math.exp %18 : vector<8x128xf32>
    %cst_11 = arith.constant 1.000000e+00 : f32
    %20 = vector.broadcast %cst_11 : f32 to vector<8x128xf32>
    %21 = arith.addf %20, %19 : vector<8x128xf32>
    %22 = arith.divf %20, %21 : vector<8x128xf32>
    %23 = vector.extract_strided_slice %14 {offsets = [0, 128], sizes = [8, 128], strides = [1, 1]} : vector<8x384xf32> to vector<8x128xf32>
    %24 = vector.extract_strided_slice %10 {offsets = [0, 128], sizes = [8, 128], strides = [1, 1]} : vector<8x384xf32> to vector<8x128xf32>
    %25 = arith.addf %23, %24 : vector<8x128xf32>
    %26 = arith.negf %25 : vector<8x128xf32>
    %27 = math.exp %26 : vector<8x128xf32>
    %cst_12 = arith.constant 1.000000e+00 : f32
    %28 = vector.broadcast %cst_12 : f32 to vector<8x128xf32>
    %29 = arith.addf %28, %27 : vector<8x128xf32>
    %30 = arith.divf %28, %29 : vector<8x128xf32>
    %31 = vector.extract_strided_slice %14 {offsets = [0, 256], sizes = [8, 128], strides = [1, 1]} : vector<8x384xf32> to vector<8x128xf32>
    %32 = vector.extract_strided_slice %10 {offsets = [0, 256], sizes = [8, 128], strides = [1, 1]} : vector<8x384xf32> to vector<8x128xf32>
    %33 = arith.mulf %22, %32 : vector<8x128xf32>
    %34 = arith.addf %31, %33 : vector<8x128xf32>
    %35 = math.tanh %34 : vector<8x128xf32>
    %cst_13 = arith.constant 1.000000e+00 : f32
    %36 = vector.broadcast %cst_13 : f32 to vector<8x128xf32>
    %37 = arith.subf %36, %30 : vector<8x128xf32>
    %38 = arith.mulf %37, %35 : vector<8x128xf32>
    %39 = arith.mulf %30, %6 : vector<8x128xf32>
    %40 = arith.addf %38, %39 : vector<8x128xf32>
    %c1_i32 = arith.constant 1 : i32
    %41 = arith.truncf %40 : vector<8x128xf32> to vector<8x128xbf16>
    %cst_14 = arith.constant dense<0.000000e+00> : vector<8x384xf32>
    %42 = tpu.matmul %41, %3, %cst_14 {dimension_numbers = #tpu.dot_dimension_numbers<[1], [0], [0], [1], [0, 0, 1, 1], [], []>} : vector<8x128xbf16>, vector<128x384xbf16>, vector<8x384xf32> -> vector<8x384xf32>
    %43 = vector.broadcast %4 : vector<1x384xf32> to vector<8x384xf32>
    %44 = arith.addf %42, %43 : vector<8x384xf32>
    %45 = arith.index_cast %c1_i32 : i32 to index
    %c0_15 = arith.constant 0 : index
    %c0_16 = arith.constant 0 : index
    %46 = vector.load %arg1[%45, %c0_15, %c0_16] : memref<8x8x384xf32, #tpu.memory_space<vmem>>, vector<1x8x384xf32>
    %47 = vector.shape_cast %46 : vector<1x8x384xf32> to vector<8x384xf32>
    %48 = arith.addf %47, %5 : vector<8x384xf32>
    %49 = vector.extract_strided_slice %48 {offsets = [0, 0], sizes = [8, 128], strides = [1, 1]} : vector<8x384xf32> to vector<8x128xf32>
    %50 = vector.extract_strided_slice %44 {offsets = [0, 0], sizes = [8, 128], strides = [1, 1]} : vector<8x384xf32> to vector<8x128xf32>
    %51 = arith.addf %49, %50 : vector<8x128xf32>
    %52 = arith.negf %51 : vector<8x128xf32>
    %53 = math.exp %52 : vector<8x128xf32>
    %cst_17 = arith.constant 1.000000e+00 : f32
    %54 = vector.broadcast %cst_17 : f32 to vector<8x128xf32>
    %55 = arith.addf %54, %53 : vector<8x128xf32>
    %56 = arith.divf %54, %55 : vector<8x128xf32>
    %57 = vector.extract_strided_slice %48 {offsets = [0, 128], sizes = [8, 128], strides = [1, 1]} : vector<8x384xf32> to vector<8x128xf32>
    %58 = vector.extract_strided_slice %44 {offsets = [0, 128], sizes = [8, 128], strides = [1, 1]} : vector<8x384xf32> to vector<8x128xf32>
    %59 = arith.addf %57, %58 : vector<8x128xf32>
    %60 = arith.negf %59 : vector<8x128xf32>
    %61 = math.exp %60 : vector<8x128xf32>
    %cst_18 = arith.constant 1.000000e+00 : f32
    %62 = vector.broadcast %cst_18 : f32 to vector<8x128xf32>
    %63 = arith.addf %62, %61 : vector<8x128xf32>
    %64 = arith.divf %62, %63 : vector<8x128xf32>
    %65 = vector.extract_strided_slice %48 {offsets = [0, 256], sizes = [8, 128], strides = [1, 1]} : vector<8x384xf32> to vector<8x128xf32>
    %66 = vector.extract_strided_slice %44 {offsets = [0, 256], sizes = [8, 128], strides = [1, 1]} : vector<8x384xf32> to vector<8x128xf32>
    %67 = arith.mulf %56, %66 : vector<8x128xf32>
    %68 = arith.addf %65, %67 : vector<8x128xf32>
    %69 = math.tanh %68 : vector<8x128xf32>
    %cst_19 = arith.constant 1.000000e+00 : f32
    %70 = vector.broadcast %cst_19 : f32 to vector<8x128xf32>
    %71 = arith.subf %70, %64 : vector<8x128xf32>
    %72 = arith.mulf %71, %69 : vector<8x128xf32>
    %73 = arith.mulf %64, %40 : vector<8x128xf32>
    %74 = arith.addf %72, %73 : vector<8x128xf32>
    %c2_i32 = arith.constant 2 : i32
    %75 = arith.truncf %74 : vector<8x128xf32> to vector<8x128xbf16>
    %cst_20 = arith.constant dense<0.000000e+00> : vector<8x384xf32>
    %76 = tpu.matmul %75, %3, %cst_20 {dimension_numbers = #tpu.dot_dimension_numbers<[1], [0], [0], [1], [0, 0, 1, 1], [], []>} : vector<8x128xbf16>, vector<128x384xbf16>, vector<8x384xf32> -> vector<8x384xf32>
    %77 = vector.broadcast %4 : vector<1x384xf32> to vector<8x384xf32>
    %78 = arith.addf %76, %77 : vector<8x384xf32>
    %79 = arith.index_cast %c2_i32 : i32 to index
    %c0_21 = arith.constant 0 : index
    %c0_22 = arith.constant 0 : index
    %80 = vector.load %arg1[%79, %c0_21, %c0_22] : memref<8x8x384xf32, #tpu.memory_space<vmem>>, vector<1x8x384xf32>
    %81 = vector.shape_cast %80 : vector<1x8x384xf32> to vector<8x384xf32>
    %82 = arith.addf %81, %5 : vector<8x384xf32>
    %83 = vector.extract_strided_slice %82 {offsets = [0, 0], sizes = [8, 128], strides = [1, 1]} : vector<8x384xf32> to vector<8x128xf32>
    %84 = vector.extract_strided_slice %78 {offsets = [0, 0], sizes = [8, 128], strides = [1, 1]} : vector<8x384xf32> to vector<8x128xf32>
    %85 = arith.addf %83, %84 : vector<8x128xf32>
    %86 = arith.negf %85 : vector<8x128xf32>
    %87 = math.exp %86 : vector<8x128xf32>
    %cst_23 = arith.constant 1.000000e+00 : f32
    %88 = vector.broadcast %cst_23 : f32 to vector<8x128xf32>
    %89 = arith.addf %88, %87 : vector<8x128xf32>
    %90 = arith.divf %88, %89 : vector<8x128xf32>
    %91 = vector.extract_strided_slice %82 {offsets = [0, 128], sizes = [8, 128], strides = [1, 1]} : vector<8x384xf32> to vector<8x128xf32>
    %92 = vector.extract_strided_slice %78 {offsets = [0, 128], sizes = [8, 128], strides = [1, 1]} : vector<8x384xf32> to vector<8x128xf32>
    %93 = arith.addf %91, %92 : vector<8x128xf32>
    %94 = arith.negf %93 : vector<8x128xf32>
    %95 = math.exp %94 : vector<8x128xf32>
    %cst_24 = arith.constant 1.000000e+00 : f32
    %96 = vector.broadcast %cst_24 : f32 to vector<8x128xf32>
    %97 = arith.addf %96, %95 : vector<8x128xf32>
    %98 = arith.divf %96, %97 : vector<8x128xf32>
    %99 = vector.extract_strided_slice %82 {offsets = [0, 256], sizes = [8, 128], strides = [1, 1]} : vector<8x384xf32> to vector<8x128xf32>
    %100 = vector.extract_strided_slice %78 {offsets = [0, 256], sizes = [8, 128], strides = [1, 1]} : vector<8x384xf32> to vector<8x128xf32>
    %101 = arith.mulf %90, %100 : vector<8x128xf32>
    %102 = arith.addf %99, %101 : vector<8x128xf32>
    %103 = math.tanh %102 : vector<8x128xf32>
    %cst_25 = arith.constant 1.000000e+00 : f32
    %104 = vector.broadcast %cst_25 : f32 to vector<8x128xf32>
    %105 = arith.subf %104, %98 : vector<8x128xf32>
    %106 = arith.mulf %105, %103 : vector<8x128xf32>
    %107 = arith.mulf %98, %74 : vector<8x128xf32>
    %108 = arith.addf %106, %107 : vector<8x128xf32>
    %c3_i32 = arith.constant 3 : i32
    %109 = arith.truncf %108 : vector<8x128xf32> to vector<8x128xbf16>
    %cst_26 = arith.constant dense<0.000000e+00> : vector<8x384xf32>
    %110 = tpu.matmul %109, %3, %cst_26 {dimension_numbers = #tpu.dot_dimension_numbers<[1], [0], [0], [1], [0, 0, 1, 1], [], []>} : vector<8x128xbf16>, vector<128x384xbf16>, vector<8x384xf32> -> vector<8x384xf32>
    %111 = vector.broadcast %4 : vector<1x384xf32> to vector<8x384xf32>
    %112 = arith.addf %110, %111 : vector<8x384xf32>
    %113 = arith.index_cast %c3_i32 : i32 to index
    %c0_27 = arith.constant 0 : index
    %c0_28 = arith.constant 0 : index
    %114 = vector.load %arg1[%113, %c0_27, %c0_28] : memref<8x8x384xf32, #tpu.memory_space<vmem>>, vector<1x8x384xf32>
    %115 = vector.shape_cast %114 : vector<1x8x384xf32> to vector<8x384xf32>
    %116 = arith.addf %115, %5 : vector<8x384xf32>
    %117 = vector.extract_strided_slice %116 {offsets = [0, 0], sizes = [8, 128], strides = [1, 1]} : vector<8x384xf32> to vector<8x128xf32>
    %118 = vector.extract_strided_slice %112 {offsets = [0, 0], sizes = [8, 128], strides = [1, 1]} : vector<8x384xf32> to vector<8x128xf32>
    %119 = arith.addf %117, %118 : vector<8x128xf32>
    %120 = arith.negf %119 : vector<8x128xf32>
    %121 = math.exp %120 : vector<8x128xf32>
    %cst_29 = arith.constant 1.000000e+00 : f32
    %122 = vector.broadcast %cst_29 : f32 to vector<8x128xf32>
    %123 = arith.addf %122, %121 : vector<8x128xf32>
    %124 = arith.divf %122, %123 : vector<8x128xf32>
    %125 = vector.extract_strided_slice %116 {offsets = [0, 128], sizes = [8, 128], strides = [1, 1]} : vector<8x384xf32> to vector<8x128xf32>
    %126 = vector.extract_strided_slice %112 {offsets = [0, 128], sizes = [8, 128], strides = [1, 1]} : vector<8x384xf32> to vector<8x128xf32>
    %127 = arith.addf %125, %126 : vector<8x128xf32>
    %128 = arith.negf %127 : vector<8x128xf32>
    %129 = math.exp %128 : vector<8x128xf32>
    %cst_30 = arith.constant 1.000000e+00 : f32
    %130 = vector.broadcast %cst_30 : f32 to vector<8x128xf32>
    %131 = arith.addf %130, %129 : vector<8x128xf32>
    %132 = arith.divf %130, %131 : vector<8x128xf32>
    %133 = vector.extract_strided_slice %116 {offsets = [0, 256], sizes = [8, 128], strides = [1, 1]} : vector<8x384xf32> to vector<8x128xf32>
    %134 = vector.extract_strided_slice %112 {offsets = [0, 256], sizes = [8, 128], strides = [1, 1]} : vector<8x384xf32> to vector<8x128xf32>
    %135 = arith.mulf %124, %134 : vector<8x128xf32>
    %136 = arith.addf %133, %135 : vector<8x128xf32>
    %137 = math.tanh %136 : vector<8x128xf32>
    %cst_31 = arith.constant 1.000000e+00 : f32
    %138 = vector.broadcast %cst_31 : f32 to vector<8x128xf32>
    %139 = arith.subf %138, %132 : vector<8x128xf32>
    %140 = arith.mulf %139, %137 : vector<8x128xf32>
    %141 = arith.mulf %132, %108 : vector<8x128xf32>
    %142 = arith.addf %140, %141 : vector<8x128xf32>
    %c4_i32 = arith.constant 4 : i32
    %143 = arith.truncf %142 : vector<8x128xf32> to vector<8x128xbf16>
    %cst_32 = arith.constant dense<0.000000e+00> : vector<8x384xf32>
    %144 = tpu.matmul %143, %3, %cst_32 {dimension_numbers = #tpu.dot_dimension_numbers<[1], [0], [0], [1], [0, 0, 1, 1], [], []>} : vector<8x128xbf16>, vector<128x384xbf16>, vector<8x384xf32> -> vector<8x384xf32>
    %145 = vector.broadcast %4 : vector<1x384xf32> to vector<8x384xf32>
    %146 = arith.addf %144, %145 : vector<8x384xf32>
    %147 = arith.index_cast %c4_i32 : i32 to index
    %c0_33 = arith.constant 0 : index
    %c0_34 = arith.constant 0 : index
    %148 = vector.load %arg1[%147, %c0_33, %c0_34] : memref<8x8x384xf32, #tpu.memory_space<vmem>>, vector<1x8x384xf32>
    %149 = vector.shape_cast %148 : vector<1x8x384xf32> to vector<8x384xf32>
    %150 = arith.addf %149, %5 : vector<8x384xf32>
    %151 = vector.extract_strided_slice %150 {offsets = [0, 0], sizes = [8, 128], strides = [1, 1]} : vector<8x384xf32> to vector<8x128xf32>
    %152 = vector.extract_strided_slice %146 {offsets = [0, 0], sizes = [8, 128], strides = [1, 1]} : vector<8x384xf32> to vector<8x128xf32>
    %153 = arith.addf %151, %152 : vector<8x128xf32>
    %154 = arith.negf %153 : vector<8x128xf32>
    %155 = math.exp %154 : vector<8x128xf32>
    %cst_35 = arith.constant 1.000000e+00 : f32
    %156 = vector.broadcast %cst_35 : f32 to vector<8x128xf32>
    %157 = arith.addf %156, %155 : vector<8x128xf32>
    %158 = arith.divf %156, %157 : vector<8x128xf32>
    %159 = vector.extract_strided_slice %150 {offsets = [0, 128], sizes = [8, 128], strides = [1, 1]} : vector<8x384xf32> to vector<8x128xf32>
    %160 = vector.extract_strided_slice %146 {offsets = [0, 128], sizes = [8, 128], strides = [1, 1]} : vector<8x384xf32> to vector<8x128xf32>
    %161 = arith.addf %159, %160 : vector<8x128xf32>
    %162 = arith.negf %161 : vector<8x128xf32>
    %163 = math.exp %162 : vector<8x128xf32>
    %cst_36 = arith.constant 1.000000e+00 : f32
    %164 = vector.broadcast %cst_36 : f32 to vector<8x128xf32>
    %165 = arith.addf %164, %163 : vector<8x128xf32>
    %166 = arith.divf %164, %165 : vector<8x128xf32>
    %167 = vector.extract_strided_slice %150 {offsets = [0, 256], sizes = [8, 128], strides = [1, 1]} : vector<8x384xf32> to vector<8x128xf32>
    %168 = vector.extract_strided_slice %146 {offsets = [0, 256], sizes = [8, 128], strides = [1, 1]} : vector<8x384xf32> to vector<8x128xf32>
    %169 = arith.mulf %158, %168 : vector<8x128xf32>
    %170 = arith.addf %167, %169 : vector<8x128xf32>
    %171 = math.tanh %170 : vector<8x128xf32>
    %cst_37 = arith.constant 1.000000e+00 : f32
    %172 = vector.broadcast %cst_37 : f32 to vector<8x128xf32>
    %173 = arith.subf %172, %166 : vector<8x128xf32>
    %174 = arith.mulf %173, %171 : vector<8x128xf32>
    %175 = arith.mulf %166, %142 : vector<8x128xf32>
    %176 = arith.addf %174, %175 : vector<8x128xf32>
    %c5_i32 = arith.constant 5 : i32
    %177 = arith.truncf %176 : vector<8x128xf32> to vector<8x128xbf16>
    %cst_38 = arith.constant dense<0.000000e+00> : vector<8x384xf32>
    %178 = tpu.matmul %177, %3, %cst_38 {dimension_numbers = #tpu.dot_dimension_numbers<[1], [0], [0], [1], [0, 0, 1, 1], [], []>} : vector<8x128xbf16>, vector<128x384xbf16>, vector<8x384xf32> -> vector<8x384xf32>
    %179 = vector.broadcast %4 : vector<1x384xf32> to vector<8x384xf32>
    %180 = arith.addf %178, %179 : vector<8x384xf32>
    %181 = arith.index_cast %c5_i32 : i32 to index
    %c0_39 = arith.constant 0 : index
    %c0_40 = arith.constant 0 : index
    %182 = vector.load %arg1[%181, %c0_39, %c0_40] : memref<8x8x384xf32, #tpu.memory_space<vmem>>, vector<1x8x384xf32>
    %183 = vector.shape_cast %182 : vector<1x8x384xf32> to vector<8x384xf32>
    %184 = arith.addf %183, %5 : vector<8x384xf32>
    %185 = vector.extract_strided_slice %184 {offsets = [0, 0], sizes = [8, 128], strides = [1, 1]} : vector<8x384xf32> to vector<8x128xf32>
    %186 = vector.extract_strided_slice %180 {offsets = [0, 0], sizes = [8, 128], strides = [1, 1]} : vector<8x384xf32> to vector<8x128xf32>
    %187 = arith.addf %185, %186 : vector<8x128xf32>
    %188 = arith.negf %187 : vector<8x128xf32>
    %189 = math.exp %188 : vector<8x128xf32>
    %cst_41 = arith.constant 1.000000e+00 : f32
    %190 = vector.broadcast %cst_41 : f32 to vector<8x128xf32>
    %191 = arith.addf %190, %189 : vector<8x128xf32>
    %192 = arith.divf %190, %191 : vector<8x128xf32>
    %193 = vector.extract_strided_slice %184 {offsets = [0, 128], sizes = [8, 128], strides = [1, 1]} : vector<8x384xf32> to vector<8x128xf32>
    %194 = vector.extract_strided_slice %180 {offsets = [0, 128], sizes = [8, 128], strides = [1, 1]} : vector<8x384xf32> to vector<8x128xf32>
    %195 = arith.addf %193, %194 : vector<8x128xf32>
    %196 = arith.negf %195 : vector<8x128xf32>
    %197 = math.exp %196 : vector<8x128xf32>
    %cst_42 = arith.constant 1.000000e+00 : f32
    %198 = vector.broadcast %cst_42 : f32 to vector<8x128xf32>
    %199 = arith.addf %198, %197 : vector<8x128xf32>
    %200 = arith.divf %198, %199 : vector<8x128xf32>
    %201 = vector.extract_strided_slice %184 {offsets = [0, 256], sizes = [8, 128], strides = [1, 1]} : vector<8x384xf32> to vector<8x128xf32>
    %202 = vector.extract_strided_slice %180 {offsets = [0, 256], sizes = [8, 128], strides = [1, 1]} : vector<8x384xf32> to vector<8x128xf32>
    %203 = arith.mulf %192, %202 : vector<8x128xf32>
    %204 = arith.addf %201, %203 : vector<8x128xf32>
    %205 = math.tanh %204 : vector<8x128xf32>
    %cst_43 = arith.constant 1.000000e+00 : f32
    %206 = vector.broadcast %cst_43 : f32 to vector<8x128xf32>
    %207 = arith.subf %206, %200 : vector<8x128xf32>
    %208 = arith.mulf %207, %205 : vector<8x128xf32>
    %209 = arith.mulf %200, %176 : vector<8x128xf32>
    %210 = arith.addf %208, %209 : vector<8x128xf32>
    %c6_i32 = arith.constant 6 : i32
    %211 = arith.truncf %210 : vector<8x128xf32> to vector<8x128xbf16>
    %cst_44 = arith.constant dense<0.000000e+00> : vector<8x384xf32>
    %212 = tpu.matmul %211, %3, %cst_44 {dimension_numbers = #tpu.dot_dimension_numbers<[1], [0], [0], [1], [0, 0, 1, 1], [], []>} : vector<8x128xbf16>, vector<128x384xbf16>, vector<8x384xf32> -> vector<8x384xf32>
    %213 = vector.broadcast %4 : vector<1x384xf32> to vector<8x384xf32>
    %214 = arith.addf %212, %213 : vector<8x384xf32>
    %215 = arith.index_cast %c6_i32 : i32 to index
    %c0_45 = arith.constant 0 : index
    %c0_46 = arith.constant 0 : index
    %216 = vector.load %arg1[%215, %c0_45, %c0_46] : memref<8x8x384xf32, #tpu.memory_space<vmem>>, vector<1x8x384xf32>
    %217 = vector.shape_cast %216 : vector<1x8x384xf32> to vector<8x384xf32>
    %218 = arith.addf %217, %5 : vector<8x384xf32>
    %219 = vector.extract_strided_slice %218 {offsets = [0, 0], sizes = [8, 128], strides = [1, 1]} : vector<8x384xf32> to vector<8x128xf32>
    %220 = vector.extract_strided_slice %214 {offsets = [0, 0], sizes = [8, 128], strides = [1, 1]} : vector<8x384xf32> to vector<8x128xf32>
    %221 = arith.addf %219, %220 : vector<8x128xf32>
    %222 = arith.negf %221 : vector<8x128xf32>
    %223 = math.exp %222 : vector<8x128xf32>
    %cst_47 = arith.constant 1.000000e+00 : f32
    %224 = vector.broadcast %cst_47 : f32 to vector<8x128xf32>
    %225 = arith.addf %224, %223 : vector<8x128xf32>
    %226 = arith.divf %224, %225 : vector<8x128xf32>
    %227 = vector.extract_strided_slice %218 {offsets = [0, 128], sizes = [8, 128], strides = [1, 1]} : vector<8x384xf32> to vector<8x128xf32>
    %228 = vector.extract_strided_slice %214 {offsets = [0, 128], sizes = [8, 128], strides = [1, 1]} : vector<8x384xf32> to vector<8x128xf32>
    %229 = arith.addf %227, %228 : vector<8x128xf32>
    %230 = arith.negf %229 : vector<8x128xf32>
    %231 = math.exp %230 : vector<8x128xf32>
    %cst_48 = arith.constant 1.000000e+00 : f32
    %232 = vector.broadcast %cst_48 : f32 to vector<8x128xf32>
    %233 = arith.addf %232, %231 : vector<8x128xf32>
    %234 = arith.divf %232, %233 : vector<8x128xf32>
    %235 = vector.extract_strided_slice %218 {offsets = [0, 256], sizes = [8, 128], strides = [1, 1]} : vector<8x384xf32> to vector<8x128xf32>
    %236 = vector.extract_strided_slice %214 {offsets = [0, 256], sizes = [8, 128], strides = [1, 1]} : vector<8x384xf32> to vector<8x128xf32>
    %237 = arith.mulf %226, %236 : vector<8x128xf32>
    %238 = arith.addf %235, %237 : vector<8x128xf32>
    %239 = math.tanh %238 : vector<8x128xf32>
    %cst_49 = arith.constant 1.000000e+00 : f32
    %240 = vector.broadcast %cst_49 : f32 to vector<8x128xf32>
    %241 = arith.subf %240, %234 : vector<8x128xf32>
    %242 = arith.mulf %241, %239 : vector<8x128xf32>
    %243 = arith.mulf %234, %210 : vector<8x128xf32>
    %244 = arith.addf %242, %243 : vector<8x128xf32>
    %c7_i32 = arith.constant 7 : i32
    %245 = arith.truncf %244 : vector<8x128xf32> to vector<8x128xbf16>
    %cst_50 = arith.constant dense<0.000000e+00> : vector<8x384xf32>
    %246 = tpu.matmul %245, %3, %cst_50 {dimension_numbers = #tpu.dot_dimension_numbers<[1], [0], [0], [1], [0, 0, 1, 1], [], []>} : vector<8x128xbf16>, vector<128x384xbf16>, vector<8x384xf32> -> vector<8x384xf32>
    %247 = vector.broadcast %4 : vector<1x384xf32> to vector<8x384xf32>
    %248 = arith.addf %246, %247 : vector<8x384xf32>
    %249 = arith.index_cast %c7_i32 : i32 to index
    %c0_51 = arith.constant 0 : index
    %c0_52 = arith.constant 0 : index
    %250 = vector.load %arg1[%249, %c0_51, %c0_52] : memref<8x8x384xf32, #tpu.memory_space<vmem>>, vector<1x8x384xf32>
    %251 = vector.shape_cast %250 : vector<1x8x384xf32> to vector<8x384xf32>
    %252 = arith.addf %251, %5 : vector<8x384xf32>
    %253 = vector.extract_strided_slice %252 {offsets = [0, 0], sizes = [8, 128], strides = [1, 1]} : vector<8x384xf32> to vector<8x128xf32>
    %254 = vector.extract_strided_slice %248 {offsets = [0, 0], sizes = [8, 128], strides = [1, 1]} : vector<8x384xf32> to vector<8x128xf32>
    %255 = arith.addf %253, %254 : vector<8x128xf32>
    %256 = arith.negf %255 : vector<8x128xf32>
    %257 = math.exp %256 : vector<8x128xf32>
    %cst_53 = arith.constant 1.000000e+00 : f32
    %258 = vector.broadcast %cst_53 : f32 to vector<8x128xf32>
    %259 = arith.addf %258, %257 : vector<8x128xf32>
    %260 = arith.divf %258, %259 : vector<8x128xf32>
    %261 = vector.extract_strided_slice %252 {offsets = [0, 128], sizes = [8, 128], strides = [1, 1]} : vector<8x384xf32> to vector<8x128xf32>
    %262 = vector.extract_strided_slice %248 {offsets = [0, 128], sizes = [8, 128], strides = [1, 1]} : vector<8x384xf32> to vector<8x128xf32>
    %263 = arith.addf %261, %262 : vector<8x128xf32>
    %264 = arith.negf %263 : vector<8x128xf32>
    %265 = math.exp %264 : vector<8x128xf32>
    %cst_54 = arith.constant 1.000000e+00 : f32
    %266 = vector.broadcast %cst_54 : f32 to vector<8x128xf32>
    %267 = arith.addf %266, %265 : vector<8x128xf32>
    %268 = arith.divf %266, %267 : vector<8x128xf32>
    %269 = vector.extract_strided_slice %252 {offsets = [0, 256], sizes = [8, 128], strides = [1, 1]} : vector<8x384xf32> to vector<8x128xf32>
    %270 = vector.extract_strided_slice %248 {offsets = [0, 256], sizes = [8, 128], strides = [1, 1]} : vector<8x384xf32> to vector<8x128xf32>
    %271 = arith.mulf %260, %270 : vector<8x128xf32>
    %272 = arith.addf %269, %271 : vector<8x128xf32>
    %273 = math.tanh %272 : vector<8x128xf32>
    %cst_55 = arith.constant 1.000000e+00 : f32
    %274 = vector.broadcast %cst_55 : f32 to vector<8x128xf32>
    %275 = arith.subf %274, %268 : vector<8x128xf32>
    %276 = arith.mulf %275, %273 : vector<8x128xf32>
    %277 = arith.mulf %268, %244 : vector<8x128xf32>
    %278 = arith.addf %276, %277 : vector<8x128xf32>
    %c8_i32 = arith.constant 8 : i32
    %c0_56 = arith.constant 0 : index
    %c0_57 = arith.constant 0 : index
    %279 = vector.load %arg7[%c0_56, %c0_57] : memref<8x128xf32, #tpu.memory_space<vmem>>, vector<8x128xf32>
    tpu.vector_store %arg7[%c0_56, %c0_57], %278 {strides = array<i32>} : memref<8x128xf32, #tpu.memory_space<vmem>>, vector<8x128xf32>,
    %c0_58 = arith.constant 0 : index
    %c0_59 = arith.constant 0 : index
    %280 = vector.load %arg6[%c0_58, %c0_59] : memref<8x128xf32, #tpu.memory_space<vmem>>, vector<8x128xf32>
    tpu.vector_store %arg6[%c0_58, %c0_59], %278 {strides = array<i32>} : memref<8x128xf32, #tpu.memory_space<vmem>>, vector<8x128xf32>,
    return
  }
  func.func @transform_0(%arg0: i32) -> (i32, i32, i32) {
    %c0_i32 = arith.constant 0 : i32
    %c0_i32_0 = arith.constant 0 : i32
    %c0_i32_1 = arith.constant 0 : i32
    return %arg0, %c0_i32, %c0_i32_0 : i32, i32, i32
  }
  func.func @transform_1(%arg0: i32) -> (i32, i32) {
    %c0_i32 = arith.constant 0 : i32
    %c0_i32_0 = arith.constant 0 : i32
    %c0_i32_1 = arith.constant 0 : i32
    return %c0_i32, %c0_i32_0 : i32, i32
  }
  func.func @transform_2(%arg0: i32) -> (i32, i32) {
    %c0_i32 = arith.constant 0 : i32
    %c0_i32_0 = arith.constant 0 : i32
    %c0_i32_1 = arith.constant 0 : i32
    return %c0_i32, %c0_i32_0 : i32, i32
  }
  func.func @transform_3(%arg0: i32) -> (i32, i32) {
    %c0_i32 = arith.constant 0 : i32
    %c0_i32_0 = arith.constant 0 : i32
    %c0_i32_1 = arith.constant 0 : i32
    return %c0_i32, %c0_i32_0 : i32, i32
  }
  func.func @transform_4(%arg0: i32) -> (i32, i32) {
    %c0_i32 = arith.constant 0 : i32
    %c0_i32_0 = arith.constant 0 : i32
    %c0_i32_1 = arith.constant 0 : i32
    return %c0_i32, %c0_i32_0 : i32, i32
  }
  func.func @transform_5(%arg0: i32) -> (i32, i32) {
    %c0_i32 = arith.constant 0 : i32
    %c0_i32_0 = arith.constant 0 : i32
    %c0_i32_1 = arith.constant 0 : i32
    return %c0_i32, %c0_i32_0 : i32, i32
  }
}

module attributes {stable_mosaic.version = 11 : i64} {
  func.func @_proj_kernel(%arg0: i32, %arg1: i32, %arg2: memref<8x128xbf16, #tpu.memory_space<vmem>>, %arg3: memref<128x384xbf16, #tpu.memory_space<vmem>>, %arg4: memref<1x384xf32, #tpu.memory_space<vmem>>, %arg5: memref<8x384xf32, #tpu.memory_space<vmem>>) attributes {dimension_semantics = [#tpu.dimension_semantics<parallel>, #tpu.dimension_semantics<parallel>], iteration_bounds = array<i64: 1, 1>, scalar_prefetch = 0 : i64, scratch_operands = 0 : i64, tpu.core_type = #tpu.core_type<tc>, window_params = [{transform_indices = @transform_0, window_bounds = array<i64: 8, 128>}, {transform_indices = @transform_1, window_bounds = array<i64: 128, 384>}, {transform_indices = @transform_2, window_bounds = array<i64: 1, 384>}, {transform_indices = @transform_3, window_bounds = array<i64: 8, 384>}]} {
    %c0 = arith.constant 0 : index
    %c0_0 = arith.constant 0 : index
    %0 = vector.load %arg2[%c0, %c0_0] : memref<8x128xbf16, #tpu.memory_space<vmem>>, vector<8x128xbf16>
    %c0_1 = arith.constant 0 : index
    %c0_2 = arith.constant 0 : index
    %1 = vector.load %arg3[%c0_1, %c0_2] : memref<128x384xbf16, #tpu.memory_space<vmem>>, vector<128x384xbf16>
    %cst = arith.constant dense<0.000000e+00> : vector<8x384xf32>
    %2 = tpu.matmul %0, %1, %cst {dimension_numbers = #tpu.dot_dimension_numbers<[1], [0], [0], [1], [0, 0, 1, 1], [], []>} : vector<8x128xbf16>, vector<128x384xbf16>, vector<8x384xf32> -> vector<8x384xf32>
    %c0_3 = arith.constant 0 : index
    %c0_4 = arith.constant 0 : index
    %3 = vector.load %arg4[%c0_3, %c0_4] : memref<1x384xf32, #tpu.memory_space<vmem>>, vector<1x384xf32>
    %4 = vector.broadcast %3 : vector<1x384xf32> to vector<8x384xf32>
    %5 = arith.addf %2, %4 : vector<8x384xf32>
    %c0_5 = arith.constant 0 : index
    %c0_6 = arith.constant 0 : index
    %6 = vector.load %arg5[%c0_5, %c0_6] : memref<8x384xf32, #tpu.memory_space<vmem>>, vector<8x384xf32>
    tpu.vector_store %arg5[%c0_5, %c0_6], %5 {strides = array<i32>} : memref<8x384xf32, #tpu.memory_space<vmem>>, vector<8x384xf32>,
    return
  }
  func.func @transform_0(%arg0: i32, %arg1: i32) -> (i32, i32) {
    %c0_i32 = arith.constant 0 : i32
    %c0_i32_0 = arith.constant 0 : i32
    return %arg0, %c0_i32 : i32, i32
  }
  func.func @transform_1(%arg0: i32, %arg1: i32) -> (i32, i32) {
    %c0_i32 = arith.constant 0 : i32
    %c0_i32_0 = arith.constant 0 : i32
    return %c0_i32, %arg1 : i32, i32
  }
  func.func @transform_2(%arg0: i32, %arg1: i32) -> (i32, i32) {
    %c0_i32 = arith.constant 0 : i32
    %c0_i32_0 = arith.constant 0 : i32
    return %c0_i32, %arg1 : i32, i32
  }
  func.func @transform_3(%arg0: i32, %arg1: i32) -> (i32, i32) {
    %c0_i32 = arith.constant 0 : i32
    return %arg0, %arg1 : i32, i32
  }
}

module attributes {stable_mosaic.version = 11 : i64} {
  func.func @_gru_kernel(%arg0: i32, %arg1: memref<8x8x384xf32, #tpu.memory_space<vmem>>, %arg2: memref<8x384xf32, #tpu.memory_space<vmem>>, %arg3: memref<128x384xbf16, #tpu.memory_space<vmem>>, %arg4: memref<1x384xf32, #tpu.memory_space<vmem>>, %arg5: memref<8x128xf32, #tpu.memory_space<vmem>>, %arg6: memref<8x8x128xf32, #tpu.memory_space<vmem>>, %arg7: memref<8x128xf32, #tpu.memory_space<vmem>>, %arg8: memref<8x128xf32, #tpu.memory_space<vmem>>) attributes {dimension_semantics = [#tpu.dimension_semantics<arbitrary>], iteration_bounds = array<i64: 1>, scalar_prefetch = 0 : i64, scratch_operands = 1 : i64, tpu.core_type = #tpu.core_type<tc>, window_params = [{transform_indices = @transform_0, window_bounds = array<i64: 8, 8, 384>}, {pipeline_mode = #tpu.pipeline_mode<synchronous>, transform_indices = @transform_1, window_bounds = array<i64: 8, 384>}, {pipeline_mode = #tpu.pipeline_mode<synchronous>, transform_indices = @transform_2, window_bounds = array<i64: 128, 384>}, {pipeline_mode = #tpu.pipeline_mode<synchronous>, transform_indices = @transform_3, window_bounds = array<i64: 1, 384>}, {pipeline_mode = #tpu.pipeline_mode<synchronous>, transform_indices = @transform_4, window_bounds = array<i64: 8, 128>}, {transform_indices = @transform_5, window_bounds = array<i64: 8, 8, 128>}, {pipeline_mode = #tpu.pipeline_mode<synchronous>, transform_indices = @transform_6, window_bounds = array<i64: 8, 128>}]} {
    %c0_i32 = arith.constant 0 : i32
    %0 = arith.cmpi eq, %arg0, %c0_i32 : i32
    %1 = arith.extui %0 : i1 to i32
    %c0_i32_0 = arith.constant 0 : i32
    %2 = arith.cmpi ne, %1, %c0_i32_0 : i32
    scf.if %2 {
      %c0_76 = arith.constant 0 : index
      %c0_77 = arith.constant 0 : index
      %313 = vector.load %arg5[%c0_76, %c0_77] : memref<8x128xf32, #tpu.memory_space<vmem>>, vector<8x128xf32>
      %c0_78 = arith.constant 0 : index
      %c0_79 = arith.constant 0 : index
      %314 = vector.load %arg8[%c0_78, %c0_79] : memref<8x128xf32, #tpu.memory_space<vmem>>, vector<8x128xf32>
      tpu.vector_store %arg8[%c0_78, %c0_79], %313 {strides = array<i32>} : memref<8x128xf32, #tpu.memory_space<vmem>>, vector<8x128xf32>,
    } else {
    }
    %c0 = arith.constant 0 : index
    %c0_1 = arith.constant 0 : index
    %3 = vector.load %arg3[%c0, %c0_1] : memref<128x384xbf16, #tpu.memory_space<vmem>>, vector<128x384xbf16>
    %c0_2 = arith.constant 0 : index
    %c0_3 = arith.constant 0 : index
    %4 = vector.load %arg4[%c0_2, %c0_3] : memref<1x384xf32, #tpu.memory_space<vmem>>, vector<1x384xf32>
    %c0_4 = arith.constant 0 : index
    %c0_5 = arith.constant 0 : index
    %5 = vector.load %arg2[%c0_4, %c0_5] : memref<8x384xf32, #tpu.memory_space<vmem>>, vector<8x384xf32>
    %c0_6 = arith.constant 0 : index
    %c0_7 = arith.constant 0 : index
    %6 = vector.load %arg8[%c0_6, %c0_7] : memref<8x128xf32, #tpu.memory_space<vmem>>, vector<8x128xf32>
    %c0_i32_8 = arith.constant 0 : i32
    %7 = arith.truncf %6 : vector<8x128xf32> to vector<8x128xbf16>
    %cst = arith.constant dense<0.000000e+00> : vector<8x384xf32>
    %8 = tpu.matmul %7, %3, %cst {dimension_numbers = #tpu.dot_dimension_numbers<[1], [0], [0], [1], [0, 0, 1, 1], [], []>} : vector<8x128xbf16>, vector<128x384xbf16>, vector<8x384xf32> -> vector<8x384xf32>
    %9 = vector.broadcast %4 : vector<1x384xf32> to vector<8x384xf32>
    %10 = arith.addf %8, %9 : vector<8x384xf32>
    %11 = arith.index_cast %c0_i32_8 : i32 to index
    %c0_9 = arith.constant 0 : index
    %c0_10 = arith.constant 0 : index
    %12 = vector.load %arg1[%11, %c0_9, %c0_10] : memref<8x8x384xf32, #tpu.memory_space<vmem>>, vector<1x8x384xf32>
    %13 = vector.shape_cast %12 : vector<1x8x384xf32> to vector<8x384xf32>
    %14 = arith.addf %13, %5 : vector<8x384xf32>
    %15 = vector.extract_strided_slice %14 {offsets = [0, 0], sizes = [8, 128], strides = [1, 1]} : vector<8x384xf32> to vector<8x128xf32>
    %16 = vector.extract_strided_slice %10 {offsets = [0, 0], sizes = [8, 128], strides = [1, 1]} : vector<8x384xf32> to vector<8x128xf32>
    %17 = arith.addf %15, %16 : vector<8x128xf32>
    %18 = arith.negf %17 : vector<8x128xf32>
    %19 = math.exp %18 : vector<8x128xf32>
    %cst_11 = arith.constant 1.000000e+00 : f32
    %20 = vector.broadcast %cst_11 : f32 to vector<8x128xf32>
    %21 = arith.addf %20, %19 : vector<8x128xf32>
    %22 = arith.divf %20, %21 : vector<8x128xf32>
    %23 = vector.extract_strided_slice %14 {offsets = [0, 128], sizes = [8, 128], strides = [1, 1]} : vector<8x384xf32> to vector<8x128xf32>
    %24 = vector.extract_strided_slice %10 {offsets = [0, 128], sizes = [8, 128], strides = [1, 1]} : vector<8x384xf32> to vector<8x128xf32>
    %25 = arith.addf %23, %24 : vector<8x128xf32>
    %26 = arith.negf %25 : vector<8x128xf32>
    %27 = math.exp %26 : vector<8x128xf32>
    %cst_12 = arith.constant 1.000000e+00 : f32
    %28 = vector.broadcast %cst_12 : f32 to vector<8x128xf32>
    %29 = arith.addf %28, %27 : vector<8x128xf32>
    %30 = arith.divf %28, %29 : vector<8x128xf32>
    %31 = vector.extract_strided_slice %14 {offsets = [0, 256], sizes = [8, 128], strides = [1, 1]} : vector<8x384xf32> to vector<8x128xf32>
    %32 = vector.extract_strided_slice %10 {offsets = [0, 256], sizes = [8, 128], strides = [1, 1]} : vector<8x384xf32> to vector<8x128xf32>
    %33 = arith.mulf %22, %32 : vector<8x128xf32>
    %34 = arith.addf %31, %33 : vector<8x128xf32>
    %35 = math.tanh %34 : vector<8x128xf32>
    %cst_13 = arith.constant 1.000000e+00 : f32
    %36 = vector.broadcast %cst_13 : f32 to vector<8x128xf32>
    %37 = arith.subf %36, %30 : vector<8x128xf32>
    %38 = arith.mulf %37, %35 : vector<8x128xf32>
    %39 = arith.mulf %30, %6 : vector<8x128xf32>
    %40 = arith.addf %38, %39 : vector<8x128xf32>
    %41 = arith.index_cast %c0_i32_8 : i32 to index
    %c0_14 = arith.constant 0 : index
    %c0_15 = arith.constant 0 : index
    %42 = vector.load %arg6[%41, %c0_14, %c0_15] : memref<8x8x128xf32, #tpu.memory_space<vmem>>, vector<1x8x128xf32>
    %43 = vector.shape_cast %42 : vector<1x8x128xf32> to vector<8x128xf32>
    %44 = vector.shape_cast %40 : vector<8x128xf32> to vector<1x8x128xf32>
    tpu.vector_store %arg6[%41, %c0_14, %c0_15], %44 {strides = array<i32>} : memref<8x8x128xf32, #tpu.memory_space<vmem>>, vector<1x8x128xf32>,
    %c1_i32 = arith.constant 1 : i32
    %45 = arith.truncf %40 : vector<8x128xf32> to vector<8x128xbf16>
    %cst_16 = arith.constant dense<0.000000e+00> : vector<8x384xf32>
    %46 = tpu.matmul %45, %3, %cst_16 {dimension_numbers = #tpu.dot_dimension_numbers<[1], [0], [0], [1], [0, 0, 1, 1], [], []>} : vector<8x128xbf16>, vector<128x384xbf16>, vector<8x384xf32> -> vector<8x384xf32>
    %47 = vector.broadcast %4 : vector<1x384xf32> to vector<8x384xf32>
    %48 = arith.addf %46, %47 : vector<8x384xf32>
    %49 = arith.index_cast %c1_i32 : i32 to index
    %c0_17 = arith.constant 0 : index
    %c0_18 = arith.constant 0 : index
    %50 = vector.load %arg1[%49, %c0_17, %c0_18] : memref<8x8x384xf32, #tpu.memory_space<vmem>>, vector<1x8x384xf32>
    %51 = vector.shape_cast %50 : vector<1x8x384xf32> to vector<8x384xf32>
    %52 = arith.addf %51, %5 : vector<8x384xf32>
    %53 = vector.extract_strided_slice %52 {offsets = [0, 0], sizes = [8, 128], strides = [1, 1]} : vector<8x384xf32> to vector<8x128xf32>
    %54 = vector.extract_strided_slice %48 {offsets = [0, 0], sizes = [8, 128], strides = [1, 1]} : vector<8x384xf32> to vector<8x128xf32>
    %55 = arith.addf %53, %54 : vector<8x128xf32>
    %56 = arith.negf %55 : vector<8x128xf32>
    %57 = math.exp %56 : vector<8x128xf32>
    %cst_19 = arith.constant 1.000000e+00 : f32
    %58 = vector.broadcast %cst_19 : f32 to vector<8x128xf32>
    %59 = arith.addf %58, %57 : vector<8x128xf32>
    %60 = arith.divf %58, %59 : vector<8x128xf32>
    %61 = vector.extract_strided_slice %52 {offsets = [0, 128], sizes = [8, 128], strides = [1, 1]} : vector<8x384xf32> to vector<8x128xf32>
    %62 = vector.extract_strided_slice %48 {offsets = [0, 128], sizes = [8, 128], strides = [1, 1]} : vector<8x384xf32> to vector<8x128xf32>
    %63 = arith.addf %61, %62 : vector<8x128xf32>
    %64 = arith.negf %63 : vector<8x128xf32>
    %65 = math.exp %64 : vector<8x128xf32>
    %cst_20 = arith.constant 1.000000e+00 : f32
    %66 = vector.broadcast %cst_20 : f32 to vector<8x128xf32>
    %67 = arith.addf %66, %65 : vector<8x128xf32>
    %68 = arith.divf %66, %67 : vector<8x128xf32>
    %69 = vector.extract_strided_slice %52 {offsets = [0, 256], sizes = [8, 128], strides = [1, 1]} : vector<8x384xf32> to vector<8x128xf32>
    %70 = vector.extract_strided_slice %48 {offsets = [0, 256], sizes = [8, 128], strides = [1, 1]} : vector<8x384xf32> to vector<8x128xf32>
    %71 = arith.mulf %60, %70 : vector<8x128xf32>
    %72 = arith.addf %69, %71 : vector<8x128xf32>
    %73 = math.tanh %72 : vector<8x128xf32>
    %cst_21 = arith.constant 1.000000e+00 : f32
    %74 = vector.broadcast %cst_21 : f32 to vector<8x128xf32>
    %75 = arith.subf %74, %68 : vector<8x128xf32>
    %76 = arith.mulf %75, %73 : vector<8x128xf32>
    %77 = arith.mulf %68, %40 : vector<8x128xf32>
    %78 = arith.addf %76, %77 : vector<8x128xf32>
    %79 = arith.index_cast %c1_i32 : i32 to index
    %c0_22 = arith.constant 0 : index
    %c0_23 = arith.constant 0 : index
    %80 = vector.load %arg6[%79, %c0_22, %c0_23] : memref<8x8x128xf32, #tpu.memory_space<vmem>>, vector<1x8x128xf32>
    %81 = vector.shape_cast %80 : vector<1x8x128xf32> to vector<8x128xf32>
    %82 = vector.shape_cast %78 : vector<8x128xf32> to vector<1x8x128xf32>
    tpu.vector_store %arg6[%79, %c0_22, %c0_23], %82 {strides = array<i32>} : memref<8x8x128xf32, #tpu.memory_space<vmem>>, vector<1x8x128xf32>,
    %c2_i32 = arith.constant 2 : i32
    %83 = arith.truncf %78 : vector<8x128xf32> to vector<8x128xbf16>
    %cst_24 = arith.constant dense<0.000000e+00> : vector<8x384xf32>
    %84 = tpu.matmul %83, %3, %cst_24 {dimension_numbers = #tpu.dot_dimension_numbers<[1], [0], [0], [1], [0, 0, 1, 1], [], []>} : vector<8x128xbf16>, vector<128x384xbf16>, vector<8x384xf32> -> vector<8x384xf32>
    %85 = vector.broadcast %4 : vector<1x384xf32> to vector<8x384xf32>
    %86 = arith.addf %84, %85 : vector<8x384xf32>
    %87 = arith.index_cast %c2_i32 : i32 to index
    %c0_25 = arith.constant 0 : index
    %c0_26 = arith.constant 0 : index
    %88 = vector.load %arg1[%87, %c0_25, %c0_26] : memref<8x8x384xf32, #tpu.memory_space<vmem>>, vector<1x8x384xf32>
    %89 = vector.shape_cast %88 : vector<1x8x384xf32> to vector<8x384xf32>
    %90 = arith.addf %89, %5 : vector<8x384xf32>
    %91 = vector.extract_strided_slice %90 {offsets = [0, 0], sizes = [8, 128], strides = [1, 1]} : vector<8x384xf32> to vector<8x128xf32>
    %92 = vector.extract_strided_slice %86 {offsets = [0, 0], sizes = [8, 128], strides = [1, 1]} : vector<8x384xf32> to vector<8x128xf32>
    %93 = arith.addf %91, %92 : vector<8x128xf32>
    %94 = arith.negf %93 : vector<8x128xf32>
    %95 = math.exp %94 : vector<8x128xf32>
    %cst_27 = arith.constant 1.000000e+00 : f32
    %96 = vector.broadcast %cst_27 : f32 to vector<8x128xf32>
    %97 = arith.addf %96, %95 : vector<8x128xf32>
    %98 = arith.divf %96, %97 : vector<8x128xf32>
    %99 = vector.extract_strided_slice %90 {offsets = [0, 128], sizes = [8, 128], strides = [1, 1]} : vector<8x384xf32> to vector<8x128xf32>
    %100 = vector.extract_strided_slice %86 {offsets = [0, 128], sizes = [8, 128], strides = [1, 1]} : vector<8x384xf32> to vector<8x128xf32>
    %101 = arith.addf %99, %100 : vector<8x128xf32>
    %102 = arith.negf %101 : vector<8x128xf32>
    %103 = math.exp %102 : vector<8x128xf32>
    %cst_28 = arith.constant 1.000000e+00 : f32
    %104 = vector.broadcast %cst_28 : f32 to vector<8x128xf32>
    %105 = arith.addf %104, %103 : vector<8x128xf32>
    %106 = arith.divf %104, %105 : vector<8x128xf32>
    %107 = vector.extract_strided_slice %90 {offsets = [0, 256], sizes = [8, 128], strides = [1, 1]} : vector<8x384xf32> to vector<8x128xf32>
    %108 = vector.extract_strided_slice %86 {offsets = [0, 256], sizes = [8, 128], strides = [1, 1]} : vector<8x384xf32> to vector<8x128xf32>
    %109 = arith.mulf %98, %108 : vector<8x128xf32>
    %110 = arith.addf %107, %109 : vector<8x128xf32>
    %111 = math.tanh %110 : vector<8x128xf32>
    %cst_29 = arith.constant 1.000000e+00 : f32
    %112 = vector.broadcast %cst_29 : f32 to vector<8x128xf32>
    %113 = arith.subf %112, %106 : vector<8x128xf32>
    %114 = arith.mulf %113, %111 : vector<8x128xf32>
    %115 = arith.mulf %106, %78 : vector<8x128xf32>
    %116 = arith.addf %114, %115 : vector<8x128xf32>
    %117 = arith.index_cast %c2_i32 : i32 to index
    %c0_30 = arith.constant 0 : index
    %c0_31 = arith.constant 0 : index
    %118 = vector.load %arg6[%117, %c0_30, %c0_31] : memref<8x8x128xf32, #tpu.memory_space<vmem>>, vector<1x8x128xf32>
    %119 = vector.shape_cast %118 : vector<1x8x128xf32> to vector<8x128xf32>
    %120 = vector.shape_cast %116 : vector<8x128xf32> to vector<1x8x128xf32>
    tpu.vector_store %arg6[%117, %c0_30, %c0_31], %120 {strides = array<i32>} : memref<8x8x128xf32, #tpu.memory_space<vmem>>, vector<1x8x128xf32>,
    %c3_i32 = arith.constant 3 : i32
    %121 = arith.truncf %116 : vector<8x128xf32> to vector<8x128xbf16>
    %cst_32 = arith.constant dense<0.000000e+00> : vector<8x384xf32>
    %122 = tpu.matmul %121, %3, %cst_32 {dimension_numbers = #tpu.dot_dimension_numbers<[1], [0], [0], [1], [0, 0, 1, 1], [], []>} : vector<8x128xbf16>, vector<128x384xbf16>, vector<8x384xf32> -> vector<8x384xf32>
    %123 = vector.broadcast %4 : vector<1x384xf32> to vector<8x384xf32>
    %124 = arith.addf %122, %123 : vector<8x384xf32>
    %125 = arith.index_cast %c3_i32 : i32 to index
    %c0_33 = arith.constant 0 : index
    %c0_34 = arith.constant 0 : index
    %126 = vector.load %arg1[%125, %c0_33, %c0_34] : memref<8x8x384xf32, #tpu.memory_space<vmem>>, vector<1x8x384xf32>
    %127 = vector.shape_cast %126 : vector<1x8x384xf32> to vector<8x384xf32>
    %128 = arith.addf %127, %5 : vector<8x384xf32>
    %129 = vector.extract_strided_slice %128 {offsets = [0, 0], sizes = [8, 128], strides = [1, 1]} : vector<8x384xf32> to vector<8x128xf32>
    %130 = vector.extract_strided_slice %124 {offsets = [0, 0], sizes = [8, 128], strides = [1, 1]} : vector<8x384xf32> to vector<8x128xf32>
    %131 = arith.addf %129, %130 : vector<8x128xf32>
    %132 = arith.negf %131 : vector<8x128xf32>
    %133 = math.exp %132 : vector<8x128xf32>
    %cst_35 = arith.constant 1.000000e+00 : f32
    %134 = vector.broadcast %cst_35 : f32 to vector<8x128xf32>
    %135 = arith.addf %134, %133 : vector<8x128xf32>
    %136 = arith.divf %134, %135 : vector<8x128xf32>
    %137 = vector.extract_strided_slice %128 {offsets = [0, 128], sizes = [8, 128], strides = [1, 1]} : vector<8x384xf32> to vector<8x128xf32>
    %138 = vector.extract_strided_slice %124 {offsets = [0, 128], sizes = [8, 128], strides = [1, 1]} : vector<8x384xf32> to vector<8x128xf32>
    %139 = arith.addf %137, %138 : vector<8x128xf32>
    %140 = arith.negf %139 : vector<8x128xf32>
    %141 = math.exp %140 : vector<8x128xf32>
    %cst_36 = arith.constant 1.000000e+00 : f32
    %142 = vector.broadcast %cst_36 : f32 to vector<8x128xf32>
    %143 = arith.addf %142, %141 : vector<8x128xf32>
    %144 = arith.divf %142, %143 : vector<8x128xf32>
    %145 = vector.extract_strided_slice %128 {offsets = [0, 256], sizes = [8, 128], strides = [1, 1]} : vector<8x384xf32> to vector<8x128xf32>
    %146 = vector.extract_strided_slice %124 {offsets = [0, 256], sizes = [8, 128], strides = [1, 1]} : vector<8x384xf32> to vector<8x128xf32>
    %147 = arith.mulf %136, %146 : vector<8x128xf32>
    %148 = arith.addf %145, %147 : vector<8x128xf32>
    %149 = math.tanh %148 : vector<8x128xf32>
    %cst_37 = arith.constant 1.000000e+00 : f32
    %150 = vector.broadcast %cst_37 : f32 to vector<8x128xf32>
    %151 = arith.subf %150, %144 : vector<8x128xf32>
    %152 = arith.mulf %151, %149 : vector<8x128xf32>
    %153 = arith.mulf %144, %116 : vector<8x128xf32>
    %154 = arith.addf %152, %153 : vector<8x128xf32>
    %155 = arith.index_cast %c3_i32 : i32 to index
    %c0_38 = arith.constant 0 : index
    %c0_39 = arith.constant 0 : index
    %156 = vector.load %arg6[%155, %c0_38, %c0_39] : memref<8x8x128xf32, #tpu.memory_space<vmem>>, vector<1x8x128xf32>
    %157 = vector.shape_cast %156 : vector<1x8x128xf32> to vector<8x128xf32>
    %158 = vector.shape_cast %154 : vector<8x128xf32> to vector<1x8x128xf32>
    tpu.vector_store %arg6[%155, %c0_38, %c0_39], %158 {strides = array<i32>} : memref<8x8x128xf32, #tpu.memory_space<vmem>>, vector<1x8x128xf32>,
    %c4_i32 = arith.constant 4 : i32
    %159 = arith.truncf %154 : vector<8x128xf32> to vector<8x128xbf16>
    %cst_40 = arith.constant dense<0.000000e+00> : vector<8x384xf32>
    %160 = tpu.matmul %159, %3, %cst_40 {dimension_numbers = #tpu.dot_dimension_numbers<[1], [0], [0], [1], [0, 0, 1, 1], [], []>} : vector<8x128xbf16>, vector<128x384xbf16>, vector<8x384xf32> -> vector<8x384xf32>
    %161 = vector.broadcast %4 : vector<1x384xf32> to vector<8x384xf32>
    %162 = arith.addf %160, %161 : vector<8x384xf32>
    %163 = arith.index_cast %c4_i32 : i32 to index
    %c0_41 = arith.constant 0 : index
    %c0_42 = arith.constant 0 : index
    %164 = vector.load %arg1[%163, %c0_41, %c0_42] : memref<8x8x384xf32, #tpu.memory_space<vmem>>, vector<1x8x384xf32>
    %165 = vector.shape_cast %164 : vector<1x8x384xf32> to vector<8x384xf32>
    %166 = arith.addf %165, %5 : vector<8x384xf32>
    %167 = vector.extract_strided_slice %166 {offsets = [0, 0], sizes = [8, 128], strides = [1, 1]} : vector<8x384xf32> to vector<8x128xf32>
    %168 = vector.extract_strided_slice %162 {offsets = [0, 0], sizes = [8, 128], strides = [1, 1]} : vector<8x384xf32> to vector<8x128xf32>
    %169 = arith.addf %167, %168 : vector<8x128xf32>
    %170 = arith.negf %169 : vector<8x128xf32>
    %171 = math.exp %170 : vector<8x128xf32>
    %cst_43 = arith.constant 1.000000e+00 : f32
    %172 = vector.broadcast %cst_43 : f32 to vector<8x128xf32>
    %173 = arith.addf %172, %171 : vector<8x128xf32>
    %174 = arith.divf %172, %173 : vector<8x128xf32>
    %175 = vector.extract_strided_slice %166 {offsets = [0, 128], sizes = [8, 128], strides = [1, 1]} : vector<8x384xf32> to vector<8x128xf32>
    %176 = vector.extract_strided_slice %162 {offsets = [0, 128], sizes = [8, 128], strides = [1, 1]} : vector<8x384xf32> to vector<8x128xf32>
    %177 = arith.addf %175, %176 : vector<8x128xf32>
    %178 = arith.negf %177 : vector<8x128xf32>
    %179 = math.exp %178 : vector<8x128xf32>
    %cst_44 = arith.constant 1.000000e+00 : f32
    %180 = vector.broadcast %cst_44 : f32 to vector<8x128xf32>
    %181 = arith.addf %180, %179 : vector<8x128xf32>
    %182 = arith.divf %180, %181 : vector<8x128xf32>
    %183 = vector.extract_strided_slice %166 {offsets = [0, 256], sizes = [8, 128], strides = [1, 1]} : vector<8x384xf32> to vector<8x128xf32>
    %184 = vector.extract_strided_slice %162 {offsets = [0, 256], sizes = [8, 128], strides = [1, 1]} : vector<8x384xf32> to vector<8x128xf32>
    %185 = arith.mulf %174, %184 : vector<8x128xf32>
    %186 = arith.addf %183, %185 : vector<8x128xf32>
    %187 = math.tanh %186 : vector<8x128xf32>
    %cst_45 = arith.constant 1.000000e+00 : f32
    %188 = vector.broadcast %cst_45 : f32 to vector<8x128xf32>
    %189 = arith.subf %188, %182 : vector<8x128xf32>
    %190 = arith.mulf %189, %187 : vector<8x128xf32>
    %191 = arith.mulf %182, %154 : vector<8x128xf32>
    %192 = arith.addf %190, %191 : vector<8x128xf32>
    %193 = arith.index_cast %c4_i32 : i32 to index
    %c0_46 = arith.constant 0 : index
    %c0_47 = arith.constant 0 : index
    %194 = vector.load %arg6[%193, %c0_46, %c0_47] : memref<8x8x128xf32, #tpu.memory_space<vmem>>, vector<1x8x128xf32>
    %195 = vector.shape_cast %194 : vector<1x8x128xf32> to vector<8x128xf32>
    %196 = vector.shape_cast %192 : vector<8x128xf32> to vector<1x8x128xf32>
    tpu.vector_store %arg6[%193, %c0_46, %c0_47], %196 {strides = array<i32>} : memref<8x8x128xf32, #tpu.memory_space<vmem>>, vector<1x8x128xf32>,
    %c5_i32 = arith.constant 5 : i32
    %197 = arith.truncf %192 : vector<8x128xf32> to vector<8x128xbf16>
    %cst_48 = arith.constant dense<0.000000e+00> : vector<8x384xf32>
    %198 = tpu.matmul %197, %3, %cst_48 {dimension_numbers = #tpu.dot_dimension_numbers<[1], [0], [0], [1], [0, 0, 1, 1], [], []>} : vector<8x128xbf16>, vector<128x384xbf16>, vector<8x384xf32> -> vector<8x384xf32>
    %199 = vector.broadcast %4 : vector<1x384xf32> to vector<8x384xf32>
    %200 = arith.addf %198, %199 : vector<8x384xf32>
    %201 = arith.index_cast %c5_i32 : i32 to index
    %c0_49 = arith.constant 0 : index
    %c0_50 = arith.constant 0 : index
    %202 = vector.load %arg1[%201, %c0_49, %c0_50] : memref<8x8x384xf32, #tpu.memory_space<vmem>>, vector<1x8x384xf32>
    %203 = vector.shape_cast %202 : vector<1x8x384xf32> to vector<8x384xf32>
    %204 = arith.addf %203, %5 : vector<8x384xf32>
    %205 = vector.extract_strided_slice %204 {offsets = [0, 0], sizes = [8, 128], strides = [1, 1]} : vector<8x384xf32> to vector<8x128xf32>
    %206 = vector.extract_strided_slice %200 {offsets = [0, 0], sizes = [8, 128], strides = [1, 1]} : vector<8x384xf32> to vector<8x128xf32>
    %207 = arith.addf %205, %206 : vector<8x128xf32>
    %208 = arith.negf %207 : vector<8x128xf32>
    %209 = math.exp %208 : vector<8x128xf32>
    %cst_51 = arith.constant 1.000000e+00 : f32
    %210 = vector.broadcast %cst_51 : f32 to vector<8x128xf32>
    %211 = arith.addf %210, %209 : vector<8x128xf32>
    %212 = arith.divf %210, %211 : vector<8x128xf32>
    %213 = vector.extract_strided_slice %204 {offsets = [0, 128], sizes = [8, 128], strides = [1, 1]} : vector<8x384xf32> to vector<8x128xf32>
    %214 = vector.extract_strided_slice %200 {offsets = [0, 128], sizes = [8, 128], strides = [1, 1]} : vector<8x384xf32> to vector<8x128xf32>
    %215 = arith.addf %213, %214 : vector<8x128xf32>
    %216 = arith.negf %215 : vector<8x128xf32>
    %217 = math.exp %216 : vector<8x128xf32>
    %cst_52 = arith.constant 1.000000e+00 : f32
    %218 = vector.broadcast %cst_52 : f32 to vector<8x128xf32>
    %219 = arith.addf %218, %217 : vector<8x128xf32>
    %220 = arith.divf %218, %219 : vector<8x128xf32>
    %221 = vector.extract_strided_slice %204 {offsets = [0, 256], sizes = [8, 128], strides = [1, 1]} : vector<8x384xf32> to vector<8x128xf32>
    %222 = vector.extract_strided_slice %200 {offsets = [0, 256], sizes = [8, 128], strides = [1, 1]} : vector<8x384xf32> to vector<8x128xf32>
    %223 = arith.mulf %212, %222 : vector<8x128xf32>
    %224 = arith.addf %221, %223 : vector<8x128xf32>
    %225 = math.tanh %224 : vector<8x128xf32>
    %cst_53 = arith.constant 1.000000e+00 : f32
    %226 = vector.broadcast %cst_53 : f32 to vector<8x128xf32>
    %227 = arith.subf %226, %220 : vector<8x128xf32>
    %228 = arith.mulf %227, %225 : vector<8x128xf32>
    %229 = arith.mulf %220, %192 : vector<8x128xf32>
    %230 = arith.addf %228, %229 : vector<8x128xf32>
    %231 = arith.index_cast %c5_i32 : i32 to index
    %c0_54 = arith.constant 0 : index
    %c0_55 = arith.constant 0 : index
    %232 = vector.load %arg6[%231, %c0_54, %c0_55] : memref<8x8x128xf32, #tpu.memory_space<vmem>>, vector<1x8x128xf32>
    %233 = vector.shape_cast %232 : vector<1x8x128xf32> to vector<8x128xf32>
    %234 = vector.shape_cast %230 : vector<8x128xf32> to vector<1x8x128xf32>
    tpu.vector_store %arg6[%231, %c0_54, %c0_55], %234 {strides = array<i32>} : memref<8x8x128xf32, #tpu.memory_space<vmem>>, vector<1x8x128xf32>,
    %c6_i32 = arith.constant 6 : i32
    %235 = arith.truncf %230 : vector<8x128xf32> to vector<8x128xbf16>
    %cst_56 = arith.constant dense<0.000000e+00> : vector<8x384xf32>
    %236 = tpu.matmul %235, %3, %cst_56 {dimension_numbers = #tpu.dot_dimension_numbers<[1], [0], [0], [1], [0, 0, 1, 1], [], []>} : vector<8x128xbf16>, vector<128x384xbf16>, vector<8x384xf32> -> vector<8x384xf32>
    %237 = vector.broadcast %4 : vector<1x384xf32> to vector<8x384xf32>
    %238 = arith.addf %236, %237 : vector<8x384xf32>
    %239 = arith.index_cast %c6_i32 : i32 to index
    %c0_57 = arith.constant 0 : index
    %c0_58 = arith.constant 0 : index
    %240 = vector.load %arg1[%239, %c0_57, %c0_58] : memref<8x8x384xf32, #tpu.memory_space<vmem>>, vector<1x8x384xf32>
    %241 = vector.shape_cast %240 : vector<1x8x384xf32> to vector<8x384xf32>
    %242 = arith.addf %241, %5 : vector<8x384xf32>
    %243 = vector.extract_strided_slice %242 {offsets = [0, 0], sizes = [8, 128], strides = [1, 1]} : vector<8x384xf32> to vector<8x128xf32>
    %244 = vector.extract_strided_slice %238 {offsets = [0, 0], sizes = [8, 128], strides = [1, 1]} : vector<8x384xf32> to vector<8x128xf32>
    %245 = arith.addf %243, %244 : vector<8x128xf32>
    %246 = arith.negf %245 : vector<8x128xf32>
    %247 = math.exp %246 : vector<8x128xf32>
    %cst_59 = arith.constant 1.000000e+00 : f32
    %248 = vector.broadcast %cst_59 : f32 to vector<8x128xf32>
    %249 = arith.addf %248, %247 : vector<8x128xf32>
    %250 = arith.divf %248, %249 : vector<8x128xf32>
    %251 = vector.extract_strided_slice %242 {offsets = [0, 128], sizes = [8, 128], strides = [1, 1]} : vector<8x384xf32> to vector<8x128xf32>
    %252 = vector.extract_strided_slice %238 {offsets = [0, 128], sizes = [8, 128], strides = [1, 1]} : vector<8x384xf32> to vector<8x128xf32>
    %253 = arith.addf %251, %252 : vector<8x128xf32>
    %254 = arith.negf %253 : vector<8x128xf32>
    %255 = math.exp %254 : vector<8x128xf32>
    %cst_60 = arith.constant 1.000000e+00 : f32
    %256 = vector.broadcast %cst_60 : f32 to vector<8x128xf32>
    %257 = arith.addf %256, %255 : vector<8x128xf32>
    %258 = arith.divf %256, %257 : vector<8x128xf32>
    %259 = vector.extract_strided_slice %242 {offsets = [0, 256], sizes = [8, 128], strides = [1, 1]} : vector<8x384xf32> to vector<8x128xf32>
    %260 = vector.extract_strided_slice %238 {offsets = [0, 256], sizes = [8, 128], strides = [1, 1]} : vector<8x384xf32> to vector<8x128xf32>
    %261 = arith.mulf %250, %260 : vector<8x128xf32>
    %262 = arith.addf %259, %261 : vector<8x128xf32>
    %263 = math.tanh %262 : vector<8x128xf32>
    %cst_61 = arith.constant 1.000000e+00 : f32
    %264 = vector.broadcast %cst_61 : f32 to vector<8x128xf32>
    %265 = arith.subf %264, %258 : vector<8x128xf32>
    %266 = arith.mulf %265, %263 : vector<8x128xf32>
    %267 = arith.mulf %258, %230 : vector<8x128xf32>
    %268 = arith.addf %266, %267 : vector<8x128xf32>
    %269 = arith.index_cast %c6_i32 : i32 to index
    %c0_62 = arith.constant 0 : index
    %c0_63 = arith.constant 0 : index
    %270 = vector.load %arg6[%269, %c0_62, %c0_63] : memref<8x8x128xf32, #tpu.memory_space<vmem>>, vector<1x8x128xf32>
    %271 = vector.shape_cast %270 : vector<1x8x128xf32> to vector<8x128xf32>
    %272 = vector.shape_cast %268 : vector<8x128xf32> to vector<1x8x128xf32>
    tpu.vector_store %arg6[%269, %c0_62, %c0_63], %272 {strides = array<i32>} : memref<8x8x128xf32, #tpu.memory_space<vmem>>, vector<1x8x128xf32>,
    %c7_i32 = arith.constant 7 : i32
    %273 = arith.truncf %268 : vector<8x128xf32> to vector<8x128xbf16>
    %cst_64 = arith.constant dense<0.000000e+00> : vector<8x384xf32>
    %274 = tpu.matmul %273, %3, %cst_64 {dimension_numbers = #tpu.dot_dimension_numbers<[1], [0], [0], [1], [0, 0, 1, 1], [], []>} : vector<8x128xbf16>, vector<128x384xbf16>, vector<8x384xf32> -> vector<8x384xf32>
    %275 = vector.broadcast %4 : vector<1x384xf32> to vector<8x384xf32>
    %276 = arith.addf %274, %275 : vector<8x384xf32>
    %277 = arith.index_cast %c7_i32 : i32 to index
    %c0_65 = arith.constant 0 : index
    %c0_66 = arith.constant 0 : index
    %278 = vector.load %arg1[%277, %c0_65, %c0_66] : memref<8x8x384xf32, #tpu.memory_space<vmem>>, vector<1x8x384xf32>
    %279 = vector.shape_cast %278 : vector<1x8x384xf32> to vector<8x384xf32>
    %280 = arith.addf %279, %5 : vector<8x384xf32>
    %281 = vector.extract_strided_slice %280 {offsets = [0, 0], sizes = [8, 128], strides = [1, 1]} : vector<8x384xf32> to vector<8x128xf32>
    %282 = vector.extract_strided_slice %276 {offsets = [0, 0], sizes = [8, 128], strides = [1, 1]} : vector<8x384xf32> to vector<8x128xf32>
    %283 = arith.addf %281, %282 : vector<8x128xf32>
    %284 = arith.negf %283 : vector<8x128xf32>
    %285 = math.exp %284 : vector<8x128xf32>
    %cst_67 = arith.constant 1.000000e+00 : f32
    %286 = vector.broadcast %cst_67 : f32 to vector<8x128xf32>
    %287 = arith.addf %286, %285 : vector<8x128xf32>
    %288 = arith.divf %286, %287 : vector<8x128xf32>
    %289 = vector.extract_strided_slice %280 {offsets = [0, 128], sizes = [8, 128], strides = [1, 1]} : vector<8x384xf32> to vector<8x128xf32>
    %290 = vector.extract_strided_slice %276 {offsets = [0, 128], sizes = [8, 128], strides = [1, 1]} : vector<8x384xf32> to vector<8x128xf32>
    %291 = arith.addf %289, %290 : vector<8x128xf32>
    %292 = arith.negf %291 : vector<8x128xf32>
    %293 = math.exp %292 : vector<8x128xf32>
    %cst_68 = arith.constant 1.000000e+00 : f32
    %294 = vector.broadcast %cst_68 : f32 to vector<8x128xf32>
    %295 = arith.addf %294, %293 : vector<8x128xf32>
    %296 = arith.divf %294, %295 : vector<8x128xf32>
    %297 = vector.extract_strided_slice %280 {offsets = [0, 256], sizes = [8, 128], strides = [1, 1]} : vector<8x384xf32> to vector<8x128xf32>
    %298 = vector.extract_strided_slice %276 {offsets = [0, 256], sizes = [8, 128], strides = [1, 1]} : vector<8x384xf32> to vector<8x128xf32>
    %299 = arith.mulf %288, %298 : vector<8x128xf32>
    %300 = arith.addf %297, %299 : vector<8x128xf32>
    %301 = math.tanh %300 : vector<8x128xf32>
    %cst_69 = arith.constant 1.000000e+00 : f32
    %302 = vector.broadcast %cst_69 : f32 to vector<8x128xf32>
    %303 = arith.subf %302, %296 : vector<8x128xf32>
    %304 = arith.mulf %303, %301 : vector<8x128xf32>
    %305 = arith.mulf %296, %268 : vector<8x128xf32>
    %306 = arith.addf %304, %305 : vector<8x128xf32>
    %307 = arith.index_cast %c7_i32 : i32 to index
    %c0_70 = arith.constant 0 : index
    %c0_71 = arith.constant 0 : index
    %308 = vector.load %arg6[%307, %c0_70, %c0_71] : memref<8x8x128xf32, #tpu.memory_space<vmem>>, vector<1x8x128xf32>
    %309 = vector.shape_cast %308 : vector<1x8x128xf32> to vector<8x128xf32>
    %310 = vector.shape_cast %306 : vector<8x128xf32> to vector<1x8x128xf32>
    tpu.vector_store %arg6[%307, %c0_70, %c0_71], %310 {strides = array<i32>} : memref<8x8x128xf32, #tpu.memory_space<vmem>>, vector<1x8x128xf32>,
    %c8_i32 = arith.constant 8 : i32
    %c0_72 = arith.constant 0 : index
    %c0_73 = arith.constant 0 : index
    %311 = vector.load %arg8[%c0_72, %c0_73] : memref<8x128xf32, #tpu.memory_space<vmem>>, vector<8x128xf32>
    tpu.vector_store %arg8[%c0_72, %c0_73], %306 {strides = array<i32>} : memref<8x128xf32, #tpu.memory_space<vmem>>, vector<8x128xf32>,
    %c0_74 = arith.constant 0 : index
    %c0_75 = arith.constant 0 : index
    %312 = vector.load %arg7[%c0_74, %c0_75] : memref<8x128xf32, #tpu.memory_space<vmem>>, vector<8x128xf32>
    tpu.vector_store %arg7[%c0_74, %c0_75], %306 {strides = array<i32>} : memref<8x128xf32, #tpu.memory_space<vmem>>, vector<8x128xf32>,
    return
  }
  func.func @transform_0(%arg0: i32) -> (i32, i32, i32) {
    %c0_i32 = arith.constant 0 : i32
    %c0_i32_0 = arith.constant 0 : i32
    %c0_i32_1 = arith.constant 0 : i32
    return %arg0, %c0_i32, %c0_i32_0 : i32, i32, i32
  }
  func.func @transform_1(%arg0: i32) -> (i32, i32) {
    %c0_i32 = arith.constant 0 : i32
    %c0_i32_0 = arith.constant 0 : i32
    %c0_i32_1 = arith.constant 0 : i32
    return %c0_i32, %c0_i32_0 : i32, i32
  }
  func.func @transform_2(%arg0: i32) -> (i32, i32) {
    %c0_i32 = arith.constant 0 : i32
    %c0_i32_0 = arith.constant 0 : i32
    %c0_i32_1 = arith.constant 0 : i32
    return %c0_i32, %c0_i32_0 : i32, i32
  }
  func.func @transform_3(%arg0: i32) -> (i32, i32) {
    %c0_i32 = arith.constant 0 : i32
    %c0_i32_0 = arith.constant 0 : i32
    %c0_i32_1 = arith.constant 0 : i32
    return %c0_i32, %c0_i32_0 : i32, i32
  }
  func.func @transform_4(%arg0: i32) -> (i32, i32) {
    %c0_i32 = arith.constant 0 : i32
    %c0_i32_0 = arith.constant 0 : i32
    %c0_i32_1 = arith.constant 0 : i32
    return %c0_i32, %c0_i32_0 : i32, i32
  }
  func.func @transform_5(%arg0: i32) -> (i32, i32, i32) {
    %c0_i32 = arith.constant 0 : i32
    %c0_i32_0 = arith.constant 0 : i32
    %c0_i32_1 = arith.constant 0 : i32
    return %arg0, %c0_i32, %c0_i32_0 : i32, i32, i32
  }
  func.func @transform_6(%arg0: i32) -> (i32, i32) {
    %c0_i32 = arith.constant 0 : i32
    %c0_i32_0 = arith.constant 0 : i32
    %c0_i32_1 = arith.constant 0 : i32
    return %c0_i32, %c0_i32_0 : i32, i32
  }
}

module attributes {stable_mosaic.version = 11 : i64} {
  func.func @_proj_kernel(%arg0: i32, %arg1: i32, %arg2: memref<64x128xbf16, #tpu.memory_space<vmem>>, %arg3: memref<128x128xbf16, #tpu.memory_space<vmem>>, %arg4: memref<1x128xf32, #tpu.memory_space<vmem>>, %arg5: memref<64x128xf32, #tpu.memory_space<vmem>>) attributes {dimension_semantics = [#tpu.dimension_semantics<parallel>, #tpu.dimension_semantics<parallel>], iteration_bounds = array<i64: 1, 1>, scalar_prefetch = 0 : i64, scratch_operands = 0 : i64, tpu.core_type = #tpu.core_type<tc>, window_params = [{transform_indices = @transform_0, window_bounds = array<i64: 64, 128>}, {transform_indices = @transform_1, window_bounds = array<i64: 128, 128>}, {transform_indices = @transform_2, window_bounds = array<i64: 1, 128>}, {transform_indices = @transform_3, window_bounds = array<i64: 64, 128>}]} {
    %c0 = arith.constant 0 : index
    %c0_0 = arith.constant 0 : index
    %0 = vector.load %arg2[%c0, %c0_0] : memref<64x128xbf16, #tpu.memory_space<vmem>>, vector<64x128xbf16>
    %c0_1 = arith.constant 0 : index
    %c0_2 = arith.constant 0 : index
    %1 = vector.load %arg3[%c0_1, %c0_2] : memref<128x128xbf16, #tpu.memory_space<vmem>>, vector<128x128xbf16>
    %cst = arith.constant dense<0.000000e+00> : vector<64x128xf32>
    %2 = tpu.matmul %0, %1, %cst {dimension_numbers = #tpu.dot_dimension_numbers<[1], [0], [0], [1], [0, 0, 1, 1], [], []>} : vector<64x128xbf16>, vector<128x128xbf16>, vector<64x128xf32> -> vector<64x128xf32>
    %c0_3 = arith.constant 0 : index
    %c0_4 = arith.constant 0 : index
    %3 = vector.load %arg4[%c0_3, %c0_4] : memref<1x128xf32, #tpu.memory_space<vmem>>, vector<1x128xf32>
    %4 = vector.broadcast %3 : vector<1x128xf32> to vector<64x128xf32>
    %5 = arith.addf %2, %4 : vector<64x128xf32>
    %c0_5 = arith.constant 0 : index
    %c0_6 = arith.constant 0 : index
    %6 = vector.load %arg5[%c0_5, %c0_6] : memref<64x128xf32, #tpu.memory_space<vmem>>, vector<64x128xf32>
    tpu.vector_store %arg5[%c0_5, %c0_6], %5 {strides = array<i32>} : memref<64x128xf32, #tpu.memory_space<vmem>>, vector<64x128xf32>,
    return
  }
  func.func @transform_0(%arg0: i32, %arg1: i32) -> (i32, i32) {
    %c0_i32 = arith.constant 0 : i32
    %c0_i32_0 = arith.constant 0 : i32
    return %arg0, %c0_i32 : i32, i32
  }
  func.func @transform_1(%arg0: i32, %arg1: i32) -> (i32, i32) {
    %c0_i32 = arith.constant 0 : i32
    %c0_i32_0 = arith.constant 0 : i32
    return %c0_i32, %arg1 : i32, i32
  }
  func.func @transform_2(%arg0: i32, %arg1: i32) -> (i32, i32) {
    %c0_i32 = arith.constant 0 : i32
    %c0_i32_0 = arith.constant 0 : i32
    return %c0_i32, %arg1 : i32, i32
  }
  func.func @transform_3(%arg0: i32, %arg1: i32) -> (i32, i32) {
    %c0_i32 = arith.constant 0 : i32
    return %arg0, %arg1 : i32, i32
  }
}

</mosaic_0001>

<llo_original>
// kernel: encoder_decoder_forward.9
$region0: #{encoder_decoder_forward.9}
  #allocation0 [shape = 'u32[]', space=smem, size = 0x4, offset = 0x4, fixed_abs, tag = 'smem constant byte address 0x4 - core index']
  #allocation1 [shape = 'u32[72,128]{1,0:T(1,128)}', space=vmem, size = 0x9000, scoped, tag = 'internal scratch']
  %s0 = inlined_call_operand.vmem [shape: bf16[8,128], index: 0, kind: input, shape index: {}]
  %s1 = inlined_call_operand.vmem [shape: bf16[128,384], index: 1, kind: input, shape index: {}]
  %s2 = inlined_call_operand.vmem [shape: f32[1,384], index: 2, kind: input, shape index: {}]
  %s3 = inlined_call_operand.vmem [shape: f32[8,384], index: 3, kind: output, shape index: {}]
  %s4 = sld [smem:[#allocation0]]
  $region22: #{encoder_decoder_forward.9} parent=0
    _
  %s6 = ssub.s32 1, %s4
  %s7 = scalar_select 0, %s6, %s4
  // Predicated region
  $region2: #{encoder_decoder_forward.9} parent=0 // pred_check
    _
  $region3: #{encoder_decoder_forward.9} parent=0 // pred_check_branch
    %9 = sbr.rel (0) target = $region5
  $region4: #{encoder_decoder_forward.9} parent=0 // pred_region
    _
  $region5: #{encoder_decoder_forward.9} parent=0 // pred_fallthru
    _
  // Predicated region
  $region6: #{encoder_decoder_forward.9} parent=0 // pred_check
    _
  $region7: #{encoder_decoder_forward.9} parent=0 // pred_check_branch
    %11 = sbr.rel (0) target = $region9
  $region8: #{encoder_decoder_forward.9} parent=0 // pred_region
    _
  $region9: #{encoder_decoder_forward.9} parent=0 // pred_fallthru
    _
  // Predicated region
  $region10: #{encoder_decoder_forward.9} parent=0 // pred_check
    _
  $region11: #{encoder_decoder_forward.9} parent=0 // pred_check_branch
    %13 = sbr.rel (0) target = $region13
  $region12: #{encoder_decoder_forward.9} parent=0 // pred_region
    _
  $region13: #{encoder_decoder_forward.9} parent=0 // pred_fallthru
    _
  %v14 = vld [vmem:[%s0] sm:$0xf]
  %v15 = vld [vmem:[%s1] sm:$0xff]
  %v16 = vld [vmem:[%s1 + $0x8] sm:$0xf]
  %v17 = vld [vmem:[%s1 + $0xc] sm:$0xff]
  %v18 = vld [vmem:[%s1 + $0x14] sm:$0xf]
  %v19 = vld [vmem:[%s1 + $0x18] sm:$0xff]
  %v20 = vld [vmem:[%s1 + $0x20] sm:$0xf]
  %v21 = vld [vmem:[%s1 + $0x24] sm:$0xff]
  %v22 = vld [vmem:[%s1 + $0x2c] sm:$0xf]
  %v23 = vld [vmem:[%s1 + $0x30] sm:$0xff]
  %v24 = vld [vmem:[%s1 + $0x38] sm:$0xf]
  %v25 = vld [vmem:[%s1 + $0x3c] sm:$0xff]
  %v26 = vld [vmem:[%s1 + $0x44] sm:$0xf]
  %v27 = vld [vmem:[%s1 + $0x48] sm:$0xff]
  %v28 = vld [vmem:[%s1 + $0x50] sm:$0xf]
  %v29 = vld [vmem:[%s1 + $0x54] sm:$0xff]
  %v30 = vld [vmem:[%s1 + $0x5c] sm:$0xf]
  %v31 = vld [vmem:[%s1 + $0x60] sm:$0xff]
  %v32 = vld [vmem:[%s1 + $0x68] sm:$0xf]
  %v33 = vld [vmem:[%s1 + $0x6c] sm:$0xff]
  %v34 = vld [vmem:[%s1 + $0x74] sm:$0xf]
  %v35 = vld [vmem:[%s1 + $0x78] sm:$0xff]
  %v36 = vld [vmem:[%s1 + $0x80] sm:$0xf]
  %v37 = vld [vmem:[%s1 + $0x84] sm:$0xff]
  %v38 = vld [vmem:[%s1 + $0x8c] sm:$0xf]
  %v39 = vld [vmem:[%s1 + $0x90] sm:$0xff]
  %v40 = vld [vmem:[%s1 + $0x98] sm:$0xf]
  %v41 = vld [vmem:[%s1 + $0x9c] sm:$0xff]
  %v42 = vld [vmem:[%s1 + $0xa4] sm:$0xf]
  %v43 = vld [vmem:[%s1 + $0xa8] sm:$0xff]
  %v44 = vld [vmem:[%s1 + $0xb0] sm:$0xf]
  %v45 = vld [vmem:[%s1 + $0xb4] sm:$0xff]
  %v46 = vld [vmem:[%s1 + $0xbc] sm:$0xf]
  %v47 = vld [vmem:[%s2] sm:$0x7]
  %v49 = vperm.slane %v47, 0
  %v50 = vperm.slane %v47, 1
  %v51 = vperm.slane %v47, 2
  %v87 = vunpack.c.l.b16 %v15
  %v88 = vunpack.c.h.b16 %v15
  %v89 = vunpack.c.l.b16 %v16
  %v90 = vunpack.c.l.b16 %v17
  %v91 = vunpack.c.h.b16 %v17
  %v92 = vunpack.c.l.b16 %v18
  %v93 = vunpack.c.l.b16 %v19
  %v94 = vunpack.c.h.b16 %v19
  %v95 = vunpack.c.l.b16 %v20
  %v96 = vunpack.c.l.b16 %v21
  %v97 = vunpack.c.h.b16 %v21
  %v98 = vunpack.c.l.b16 %v22
  %v99 = vunpack.c.l.b16 %v23
  %v100 = vunpack.c.h.b16 %v23
  %v101 = vunpack.c.l.b16 %v24
  %v102 = vunpack.c.l.b16 %v25
  %v103 = vunpack.c.h.b16 %v25
  %v104 = vunpack.c.l.b16 %v26
  %v105 = vunpack.c.l.b16 %v27
  %v106 = vunpack.c.h.b16 %v27
  %v107 = vunpack.c.l.b16 %v28
  %v108 = vunpack.c.l.b16 %v29
  %v109 = vunpack.c.h.b16 %v29
  %v110 = vunpack.c.l.b16 %v30
  %v111 = vunpack.c.l.b16 %v31
  %v112 = vunpack.c.h.b16 %v31
  %v113 = vunpack.c.l.b16 %v32
  %v114 = vunpack.c.l.b16 %v33
  %v115 = vunpack.c.h.b16 %v33
  %v116 = vunpack.c.l.b16 %v34
  %v117 = vunpack.c.l.b16 %v35
  %v118 = vunpack.c.h.b16 %v35
  %v119 = vunpack.c.l.b16 %v36
  %v120 = vunpack.c.l.b16 %v37
  %v121 = vunpack.c.h.b16 %v37
  %v122 = vunpack.c.l.b16 %v38
  %v123 = vunpack.c.l.b16 %v39
  %v124 = vunpack.c.h.b16 %v39
  %v125 = vunpack.c.l.b16 %v40
  %v126 = vunpack.c.l.b16 %v41
  %v127 = vunpack.c.h.b16 %v41
  %v128 = vunpack.c.l.b16 %v42
  %v129 = vunpack.c.l.b16 %v43
  %v130 = vunpack.c.h.b16 %v43
  %v131 = vunpack.c.l.b16 %v44
  %v132 = vunpack.c.l.b16 %v45
  %v133 = vunpack.c.h.b16 %v45
  %v134 = vunpack.c.l.b16 %v46
  %v135 = vpack.c.b16 %v90, %v87
  %v136 = vpack.c.b16 %v91, %v88
  %v137 = vpack.c.b16 %v92, %v89
  %v138 = vpack.c.b16 %v96, %v93
  %v139 = vpack.c.b16 %v97, %v94
  %v140 = vpack.c.b16 %v98, %v95
  %v141 = vpack.c.b16 %v102, %v99
  %v142 = vpack.c.b16 %v103, %v100
  %v143 = vpack.c.b16 %v104, %v101
  %v144 = vpack.c.b16 %v108, %v105
  %v145 = vpack.c.b16 %v109, %v106
  %v146 = vpack.c.b16 %v110, %v107
  %v147 = vpack.c.b16 %v114, %v111
  %v148 = vpack.c.b16 %v115, %v112
  %v149 = vpack.c.b16 %v116, %v113
  %v150 = vpack.c.b16 %v120, %v117
  %v151 = vpack.c.b16 %v121, %v118
  %v152 = vpack.c.b16 %v122, %v119
  %v153 = vpack.c.b16 %v126, %v123
  %v154 = vpack.c.b16 %v127, %v124
  %v155 = vpack.c.b16 %v128, %v125
  %v156 = vpack.c.b16 %v132, %v129
  %v157 = vpack.c.b16 %v133, %v130
  %v158 = vpack.c.b16 %v134, %v131
  %183 = vmatpush.bf16.msra.mxu0 %v156
  %184 = vmatpush.bf16.msra.mxu0 %v153
  %185 = vmatpush.bf16.msra.mxu0 %v150
  %186 = vmatpush.bf16.msra.mxu0 %v147
  %187 = vmatpush.bf16.msra.mxu0 %v144
  %188 = vmatpush.bf16.msra.mxu0 %v141
  %189 = vmatpush.bf16.msra.mxu0 %v138
  %190 = vmatpush.bf16.msra.mxu0 %v135
  %191 = vmatmul.bf16.gmra.mxu0 %v14
  %v192 = vpop.f32.mrf.mxu0
  %v193 = vadd.f32 %v49, %v192
  %v194 = vpop.f32.mrf.mxu0
  %195 = vdwg.mxu0
  %196 = vmatpush.bf16.msra.mxu0 %v157
  %197 = vmatpush.bf16.msra.mxu0 %v154
  %198 = vmatpush.bf16.msra.mxu0 %v151
  %199 = vmatpush.bf16.msra.mxu0 %v148
  %200 = vmatpush.bf16.msra.mxu0 %v145
  %201 = vmatpush.bf16.msra.mxu0 %v142
  %202 = vmatpush.bf16.msra.mxu0 %v139
  %203 = vmatpush.bf16.msra.mxu0 %v136
  %204 = vmatmul.bf16.gmra.mxu0 %v14
  %v205 = vpop.f32.mrf.mxu0
  %v206 = vadd.f32 %v50, %v205
  %v207 = vpop.f32.mrf.mxu0
  %208 = vdwg.mxu0
  %209 = vmatpush.bf16.msra.mxu0 %v158
  %210 = vmatpush.bf16.msra.mxu0 %v155
  %211 = vmatpush.bf16.msra.mxu0 %v152
  %212 = vmatpush.bf16.msra.mxu0 %v149
  %213 = vmatpush.bf16.msra.mxu0 %v146
  %214 = vmatpush.bf16.msra.mxu0 %v143
  %215 = vmatpush.bf16.msra.mxu0 %v140
  %216 = vmatpush.bf16.msra.mxu0 %v137
  %217 = vmatmul.bf16.gmra.mxu0 %v14
  %v218 = vpop.f32.mrf.mxu0
  %v219 = vadd.f32 %v51, %v218
  %v220 = vpop.f32.mrf.mxu0
  %221 = vdwg.mxu0
  %222 = vst [vmem:[%s3] sm:$0xff] %v193
  %223 = vst [vmem:[%s3 + $0x8] sm:$0xff] %v206
  %224 = vst [vmem:[%s3 + $0x10] sm:$0xff] %v219
  // Predicated region
  $region14: #{encoder_decoder_forward.9} parent=0 // pred_check
    _
  $region15: #{encoder_decoder_forward.9} parent=0 // pred_check_branch
    %226 = sbr.rel (0) target = $region17
  $region16: #{encoder_decoder_forward.9} parent=0 // pred_region
    _
  $region17: #{encoder_decoder_forward.9} parent=0 // pred_fallthru
    _
  // Predicated region
  $region18: #{encoder_decoder_forward.9} parent=0 // pred_check
    _
  $region19: #{encoder_decoder_forward.9} parent=0 // pred_check_branch
    %228 = sbr.rel (0) target = $region21
  $region20: #{encoder_decoder_forward.9} parent=0 // pred_region
    _
  $region21: #{encoder_decoder_forward.9} parent=0 // pred_fallthru
    _

// kernel: encoder_decoder_forward.6
$region0: #{encoder_decoder_forward.6}
  #allocation0 [shape = 'u32[]', space=smem, size = 0x4, offset = 0x4, fixed_abs, tag = 'smem constant byte address 0x4 - core index']
  #allocation1 [shape = 'u32[72,128]{1,0:T(1,128)}', space=vmem, size = 0x9000, scoped, tag = 'internal scratch']
  %s0 = inlined_call_operand.vmem [shape: bf16[64,128], index: 0, kind: input, shape index: {}]
  %s1 = inlined_call_operand.vmem [shape: bf16[128,384], index: 1, kind: input, shape index: {}]
  %s2 = inlined_call_operand.vmem [shape: f32[1,384], index: 2, kind: input, shape index: {}]
  %s3 = inlined_call_operand.vmem [shape: f32[64,384], index: 3, kind: output, shape index: {}]
  %s4 = sld [smem:[#allocation0]]
  $region22: #{encoder_decoder_forward.6} parent=0
    _
  %s6 = ssub.s32 1, %s4
  %s7 = scalar_select 0, %s6, %s4
  // Predicated region
  $region2: #{encoder_decoder_forward.6} parent=0 // pred_check
    _
  $region3: #{encoder_decoder_forward.6} parent=0 // pred_check_branch
    %9 = sbr.rel (0) target = $region5
  $region4: #{encoder_decoder_forward.6} parent=0 // pred_region
    _
  $region5: #{encoder_decoder_forward.6} parent=0 // pred_fallthru
    _
  // Predicated region
  $region6: #{encoder_decoder_forward.6} parent=0 // pred_check
    _
  $region7: #{encoder_decoder_forward.6} parent=0 // pred_check_branch
    %11 = sbr.rel (0) target = $region9
  $region8: #{encoder_decoder_forward.6} parent=0 // pred_region
    _
  $region9: #{encoder_decoder_forward.6} parent=0 // pred_fallthru
    _
  // Predicated region
  $region10: #{encoder_decoder_forward.6} parent=0 // pred_check
    _
  $region11: #{encoder_decoder_forward.6} parent=0 // pred_check_branch
    %13 = sbr.rel (0) target = $region13
  $region12: #{encoder_decoder_forward.6} parent=0 // pred_region
    _
  $region13: #{encoder_decoder_forward.6} parent=0 // pred_fallthru
    _
  %v14 = vld [vmem:[%s0] sm:$0xf]
  %v15 = vld [vmem:[%s0 + $0x4] sm:$0xf]
  %v16 = vld [vmem:[%s0 + $0x8] sm:$0xf]
  %v17 = vld [vmem:[%s0 + $0xc] sm:$0xf]
  %v18 = vld [vmem:[%s0 + $0x10] sm:$0xf]
  %v19 = vld [vmem:[%s0 + $0x14] sm:$0xf]
  %v20 = vld [vmem:[%s0 + $0x18] sm:$0xf]
  %v21 = vld [vmem:[%s0 + $0x1c] sm:$0xf]
  %v22 = vld [vmem:[%s1] sm:$0xff]
  %v23 = vld [vmem:[%s1 + $0x8] sm:$0xf]
  %v24 = vld [vmem:[%s1 + $0xc] sm:$0xff]
  %v25 = vld [vmem:[%s1 + $0x14] sm:$0xf]
  %v26 = vld [vmem:[%s1 + $0x18] sm:$0xff]
  %v27 = vld [vmem:[%s1 + $0x20] sm:$0xf]
  %v28 = vld [vmem:[%s1 + $0x24] sm:$0xff]
  %v29 = vld [vmem:[%s1 + $0x2c] sm:$0xf]
  %v30 = vld [vmem:[%s1 + $0x30] sm:$0xff]
  %v31 = vld [vmem:[%s1 + $0x38] sm:$0xf]
  %v32 = vld [vmem:[%s1 + $0x3c] sm:$0xff]
  %v33 = vld [vmem:[%s1 + $0x44] sm:$0xf]
  %v34 = vld [vmem:[%s1 + $0x48] sm:$0xff]
  %v35 = vld [vmem:[%s1 + $0x50] sm:$0xf]
  %v36 = vld [vmem:[%s1 + $0x54] sm:$0xff]
  %v37 = vld [vmem:[%s1 + $0x5c] sm:$0xf]
  %v38 = vld [vmem:[%s1 + $0x60] sm:$0xff]
  %v39 = vld [vmem:[%s1 + $0x68] sm:$0xf]
  %v40 = vld [vmem:[%s1 + $0x6c] sm:$0xff]
  %v41 = vld [vmem:[%s1 + $0x74] sm:$0xf]
  %v42 = vld [vmem:[%s1 + $0x78] sm:$0xff]
  %v43 = vld [vmem:[%s1 + $0x80] sm:$0xf]
  %v44 = vld [vmem:[%s1 + $0x84] sm:$0xff]
  %v45 = vld [vmem:[%s1 + $0x8c] sm:$0xf]
  %v46 = vld [vmem:[%s1 + $0x90] sm:$0xff]
  %v47 = vld [vmem:[%s1 + $0x98] sm:$0xf]
  %v48 = vld [vmem:[%s1 + $0x9c] sm:$0xff]
  %v49 = vld [vmem:[%s1 + $0xa4] sm:$0xf]
  %v50 = vld [vmem:[%s1 + $0xa8] sm:$0xff]
  %v51 = vld [vmem:[%s1 + $0xb0] sm:$0xf]
  %v52 = vld [vmem:[%s1 + $0xb4] sm:$0xff]
  %v53 = vld [vmem:[%s1 + $0xbc] sm:$0xf]
  %v54 = vld [vmem:[%s2] sm:$0x7]
  %v56 = vperm.slane %v54, 0
  %v57 = vperm.slane %v54, 1
  %v58 = vperm.slane %v54, 2
  %v70 = vunpack.c.l.b16 %v14
  %v71 = vunpack.c.l.b16 %v15
  %v72 = vunpack.c.l.b16 %v16
  %v73 = vunpack.c.l.b16 %v17
  %v74 = vunpack.c.l.b16 %v18
  %v75 = vunpack.c.l.b16 %v19
  %v76 = vunpack.c.l.b16 %v20
  %v77 = vunpack.c.l.b16 %v21
  %v78 = vpack.c.b16 %v71, %v70
  %v79 = vpack.c.b16 %v73, %v72
  %v80 = vpack.c.b16 %v75, %v74
  %v81 = vpack.c.b16 %v77, %v76
  %v118 = vunpack.c.l.b16 %v22
  %v119 = vunpack.c.h.b16 %v22
  %v120 = vunpack.c.l.b16 %v23
  %v121 = vunpack.c.l.b16 %v24
  %v122 = vunpack.c.h.b16 %v24
  %v123 = vunpack.c.l.b16 %v25
  %v124 = vunpack.c.l.b16 %v26
  %v125 = vunpack.c.h.b16 %v26
  %v126 = vunpack.c.l.b16 %v27
  %v127 = vunpack.c.l.b16 %v28
  %v128 = vunpack.c.h.b16 %v28
  %v129 = vunpack.c.l.b16 %v29
  %v130 = vunpack.c.l.b16 %v30
  %v131 = vunpack.c.h.b16 %v30
  %v132 = vunpack.c.l.b16 %v31
  %v133 = vunpack.c.l.b16 %v32
  %v134 = vunpack.c.h.b16 %v32
  %v135 = vunpack.c.l.b16 %v33
  %v136 = vunpack.c.l.b16 %v34
  %v137 = vunpack.c.h.b16 %v34
  %v138 = vunpack.c.l.b16 %v35
  %v139 = vunpack.c.l.b16 %v36
  %v140 = vunpack.c.h.b16 %v36
  %v141 = vunpack.c.l.b16 %v37
  %v142 = vunpack.c.l.b16 %v38
  %v143 = vunpack.c.h.b16 %v38
  %v144 = vunpack.c.l.b16 %v39
  %v145 = vunpack.c.l.b16 %v40
  %v146 = vunpack.c.h.b16 %v40
  %v147 = vunpack.c.l.b16 %v41
  %v148 = vunpack.c.l.b16 %v42
  %v149 = vunpack.c.h.b16 %v42
  %v150 = vunpack.c.l.b16 %v43
  %v151 = vunpack.c.l.b16 %v44
  %v152 = vunpack.c.h.b16 %v44
  %v153 = vunpack.c.l.b16 %v45
  %v154 = vunpack.c.l.b16 %v46
  %v155 = vunpack.c.h.b16 %v46
  %v156 = vunpack.c.l.b16 %v47
  %v157 = vunpack.c.l.b16 %v48
  %v158 = vunpack.c.h.b16 %v48
  %v159 = vunpack.c.l.b16 %v49
  %v160 = vunpack.c.l.b16 %v50
  %v161 = vunpack.c.h.b16 %v50
  %v162 = vunpack.c.l.b16 %v51
  %v163 = vunpack.c.l.b16 %v52
  %v164 = vunpack.c.h.b16 %v52
  %v165 = vunpack.c.l.b16 %v53
  %v166 = vpack.c.b16 %v121, %v118
  %v167 = vpack.c.b16 %v122, %v119
  %v168 = vpack.c.b16 %v123, %v120
  %v169 = vpack.c.b16 %v127, %v124
  %v170 = vpack.c.b16 %v128, %v125
  %v171 = vpack.c.b16 %v129, %v126
  %v172 = vpack.c.b16 %v133, %v130
  %v173 = vpack.c.b16 %v134, %v131
  %v174 = vpack.c.b16 %v135, %v132
  %v175 = vpack.c.b16 %v139, %v136
  %v176 = vpack.c.b16 %v140, %v137
  %v177 = vpack.c.b16 %v141, %v138
  %v178 = vpack.c.b16 %v145, %v142
  %v179 = vpack.c.b16 %v146, %v143
  %v180 = vpack.c.b16 %v147, %v144
  %v181 = vpack.c.b16 %v151, %v148
  %v182 = vpack.c.b16 %v152, %v149
  %v183 = vpack.c.b16 %v153, %v150
  %v184 = vpack.c.b16 %v157, %v154
  %v185 = vpack.c.b16 %v158, %v155
  %v186 = vpack.c.b16 %v159, %v156
  %v187 = vpack.c.b16 %v163, %v160
  %v188 = vpack.c.b16 %v164, %v161
  %v189 = vpack.c.b16 %v165, %v162
  %214 = vmatpush.bf16.msra.mxu0 %v187
  %215 = vmatpush.bf16.msra.mxu0 %v184
  %216 = vmatpush.bf16.msra.mxu0 %v181
  %217 = vmatpush.bf16.msra.mxu0 %v178
  %218 = vmatpush.bf16.msra.mxu0 %v175
  %219 = vmatpush.bf16.msra.mxu0 %v172
  %220 = vmatpush.bf16.msra.mxu0 %v169
  %221 = vmatpush.bf16.msra.mxu0 %v166
  %222 = vmatmul.bf16.gmra.mxu0 %v78
  %v223 = vpop.f32.mrf.mxu0
  %v224 = vadd.f32 %v56, %v223
  %v225 = vpop.f32.mrf.mxu0
  %v226 = vadd.f32 %v56, %v225
  %227 = vmatmul.bf16.gmra.mxu0 %v79
  %v228 = vpop.f32.mrf.mxu0
  %v229 = vadd.f32 %v56, %v228
  %v230 = vpop.f32.mrf.mxu0
  %v231 = vadd.f32 %v56, %v230
  %232 = vmatmul.bf16.gmra.mxu0 %v80
  %v233 = vpop.f32.mrf.mxu0
  %v234 = vadd.f32 %v56, %v233
  %v235 = vpop.f32.mrf.mxu0
  %v236 = vadd.f32 %v56, %v235
  %237 = vmatmul.bf16.gmra.mxu0 %v81
  %v238 = vpop.f32.mrf.mxu0
  %v239 = vadd.f32 %v56, %v238
  %v240 = vpop.f32.mrf.mxu0
  %v241 = vadd.f32 %v56, %v240
  %242 = vdwg.mxu0
  %243 = vmatpush.bf16.msra.mxu0 %v188
  %244 = vmatpush.bf16.msra.mxu0 %v185
  %245 = vmatpush.bf16.msra.mxu0 %v182
  %246 = vmatpush.bf16.msra.mxu0 %v179
  %247 = vmatpush.bf16.msra.mxu0 %v176
  %248 = vmatpush.bf16.msra.mxu0 %v173
  %249 = vmatpush.bf16.msra.mxu0 %v170
  %250 = vmatpush.bf16.msra.mxu0 %v167
  %251 = vmatmul.bf16.gmra.mxu0 %v78
  %v252 = vpop.f32.mrf.mxu0
  %v253 = vadd.f32 %v57, %v252
  %v254 = vpop.f32.mrf.mxu0
  %v255 = vadd.f32 %v57, %v254
  %256 = vmatmul.bf16.gmra.mxu0 %v79
  %v257 = vpop.f32.mrf.mxu0
  %v258 = vadd.f32 %v57, %v257
  %v259 = vpop.f32.mrf.mxu0
  %v260 = vadd.f32 %v57, %v259
  %261 = vmatmul.bf16.gmra.mxu0 %v80
  %v262 = vpop.f32.mrf.mxu0
  %v263 = vadd.f32 %v57, %v262
  %v264 = vpop.f32.mrf.mxu0
  %v265 = vadd.f32 %v57, %v264
  %266 = vmatmul.bf16.gmra.mxu0 %v81
  %v267 = vpop.f32.mrf.mxu0
  %v268 = vadd.f32 %v57, %v267
  %v269 = vpop.f32.mrf.mxu0
  %v270 = vadd.f32 %v57, %v269
  %271 = vdwg.mxu0
  %272 = vmatpush.bf16.msra.mxu0 %v189
  %273 = vmatpush.bf16.msra.mxu0 %v186
  %274 = vmatpush.bf16.msra.mxu0 %v183
  %275 = vmatpush.bf16.msra.mxu0 %v180
  %276 = vmatpush.bf16.msra.mxu0 %v177
  %277 = vmatpush.bf16.msra.mxu0 %v174
  %278 = vmatpush.bf16.msra.mxu0 %v171
  %279 = vmatpush.bf16.msra.mxu0 %v168
  %280 = vmatmul.bf16.gmra.mxu0 %v78
  %v281 = vpop.f32.mrf.mxu0
  %v282 = vadd.f32 %v58, %v281
  %v283 = vpop.f32.mrf.mxu0
  %v284 = vadd.f32 %v58, %v283
  %285 = vmatmul.bf16.gmra.mxu0 %v79
  %v286 = vpop.f32.mrf.mxu0
  %v287 = vadd.f32 %v58, %v286
  %v288 = vpop.f32.mrf.mxu0
  %v289 = vadd.f32 %v58, %v288
  %290 = vmatmul.bf16.gmra.mxu0 %v80
  %v291 = vpop.f32.mrf.mxu0
  %v292 = vadd.f32 %v58, %v291
  %v293 = vpop.f32.mrf.mxu0
  %v294 = vadd.f32 %v58, %v293
  %295 = vmatmul.bf16.gmra.mxu0 %v81
  %v296 = vpop.f32.mrf.mxu0
  %v297 = vadd.f32 %v58, %v296
  %v298 = vpop.f32.mrf.mxu0
  %v299 = vadd.f32 %v58, %v298
  %300 = vdwg.mxu0
  %301 = vst [vmem:[%s3] sm:$0xff] %v224
  %302 = vst [vmem:[%s3 + $0x8] sm:$0xff] %v253
  %303 = vst [vmem:[%s3 + $0x10] sm:$0xff] %v282
  %304 = vst [vmem:[%s3 + $0x18] sm:$0xff] %v226
  %305 = vst [vmem:[%s3 + $0x20] sm:$0xff] %v255
  %306 = vst [vmem:[%s3 + $0x28] sm:$0xff] %v284
  %307 = vst [vmem:[%s3 + $0x30] sm:$0xff] %v229
  %308 = vst [vmem:[%s3 + $0x38] sm:$0xff] %v258
  %309 = vst [vmem:[%s3 + $0x40] sm:$0xff] %v287
  %310 = vst [vmem:[%s3 + $0x48] sm:$0xff] %v231
  %311 = vst [vmem:[%s3 + $0x50] sm:$0xff] %v260
  %312 = vst [vmem:[%s3 + $0x58] sm:$0xff] %v289
  %313 = vst [vmem:[%s3 + $0x60] sm:$0xff] %v234
  %314 = vst [vmem:[%s3 + $0x68] sm:$0xff] %v263
  %315 = vst [vmem:[%s3 + $0x70] sm:$0xff] %v292
  %316 = vst [vmem:[%s3 + $0x78] sm:$0xff] %v236
  %317 = vst [vmem:[%s3 + $0x80] sm:$0xff] %v265
  %318 = vst [vmem:[%s3 + $0x88] sm:$0xff] %v294
  %319 = vst [vmem:[%s3 + $0x90] sm:$0xff] %v239
  %320 = vst [vmem:[%s3 + $0x98] sm:$0xff] %v268
  %321 = vst [vmem:[%s3 + $0xa0] sm:$0xff] %v297
  %322 = vst [vmem:[%s3 + $0xa8] sm:$0xff] %v241
  %323 = vst [vmem:[%s3 + $0xb0] sm:$0xff] %v270
  %324 = vst [vmem:[%s3 + $0xb8] sm:$0xff] %v299
  // Predicated region
  $region14: #{encoder_decoder_forward.6} parent=0 // pred_check
    _
  $region15: #{encoder_decoder_forward.6} parent=0 // pred_check_branch
    %326 = sbr.rel (0) target = $region17
  $region16: #{encoder_decoder_forward.6} parent=0 // pred_region
    _
  $region17: #{encoder_decoder_forward.6} parent=0 // pred_fallthru
    _
  // Predicated region
  $region18: #{encoder_decoder_forward.6} parent=0 // pred_check
    _
  $region19: #{encoder_decoder_forward.6} parent=0 // pred_check_branch
    %328 = sbr.rel (0) target = $region21
  $region20: #{encoder_decoder_forward.6} parent=0 // pred_region
    _
  $region21: #{encoder_decoder_forward.6} parent=0 // pred_fallthru
    _

// kernel: encoder_decoder_forward.7
$region0: #{encoder_decoder_forward.7}
  #allocation0 [shape = 'u32[]', space=smem, size = 0x4, offset = 0x4, fixed_abs, tag = 'smem constant byte address 0x4 - core index']
  #allocation1 [shape = 'u32[72,128]{1,0:T(1,128)}', space=vmem, size = 0x9000, scoped, tag = 'internal scratch']
  #allocation2 [shape = 'f32[8,128]{1,0:T(8,128)}', space=vmem, size = 0x1000, scoped, tag = 'scratch operand']
  %s0 = inlined_call_operand.vmem [shape: f32[8,8,384], index: 0, kind: input, shape index: {}]
  %s1 = inlined_call_operand.vmem [shape: f32[8,384], index: 1, kind: input, shape index: {}]
  %s2 = inlined_call_operand.vmem [shape: bf16[128,384], index: 2, kind: input, shape index: {}]
  %s3 = inlined_call_operand.vmem [shape: f32[1,384], index: 3, kind: input, shape index: {}]
  %s4 = inlined_call_operand.vmem [shape: f32[8,128], index: 4, kind: input, shape index: {}]
  %s5 = inlined_call_operand.vmem [shape: f32[8,128], index: 5, kind: output, shape index: {}]
  %s6 = sld [smem:[#allocation0]]
  $region34: #{encoder_decoder_forward.7} parent=0
    _
  %s8 = ssub.s32 1, %s6
  %s9 = scalar_select 0, %s8, %s6
  // Predicated region
  $region2: #{encoder_decoder_forward.7} parent=0 // pred_check
    _
  $region3: #{encoder_decoder_forward.7} parent=0 // pred_check_branch
    %11 = sbr.rel (0) target = $region5
  $region4: #{encoder_decoder_forward.7} parent=0 // pred_region
    _
  $region5: #{encoder_decoder_forward.7} parent=0 // pred_fallthru
    _
  // Predicated region
  $region6: #{encoder_decoder_forward.7} parent=0 // pred_check
    _
  $region7: #{encoder_decoder_forward.7} parent=0 // pred_check_branch
    %13 = sbr.rel (0) target = $region9
  $region8: #{encoder_decoder_forward.7} parent=0 // pred_region
    _
  $region9: #{encoder_decoder_forward.7} parent=0 // pred_fallthru
    _
  // Predicated region
  $region10: #{encoder_decoder_forward.7} parent=0 // pred_check
    _
  $region11: #{encoder_decoder_forward.7} parent=0 // pred_check_branch
    %15 = sbr.rel (0) target = $region13
  $region12: #{encoder_decoder_forward.7} parent=0 // pred_region
    _
  $region13: #{encoder_decoder_forward.7} parent=0 // pred_fallthru
    _
  // Predicated region
  $region14: #{encoder_decoder_forward.7} parent=0 // pred_check
    _
  $region15: #{encoder_decoder_forward.7} parent=0 // pred_check_branch
    %17 = sbr.rel (0) target = $region17
  $region16: #{encoder_decoder_forward.7} parent=0 // pred_region
    _
  $region17: #{encoder_decoder_forward.7} parent=0 // pred_fallthru
    _
  // Predicated region
  $region18: #{encoder_decoder_forward.7} parent=0 // pred_check
    _
  $region19: #{encoder_decoder_forward.7} parent=0 // pred_check_branch
    %19 = sbr.rel (0) target = $region21
  $region20: #{encoder_decoder_forward.7} parent=0 // pred_region
    _
  $region21: #{encoder_decoder_forward.7} parent=0 // pred_fallthru
    _
  %p20 = scmp.eq.s32.totalorder 0, 0
  // Predicated region
  $region22: #{encoder_decoder_forward.7} parent=0 // pred_check
    %p21 = pneg %p20
  $region23: #{encoder_decoder_forward.7} parent=0 // pred_check_branch
    %23 = sbr.rel (%p21) target = $region25
  $region24: #{encoder_decoder_forward.7} parent=0 // pred_region
    %v24 = vld [vmem:[%s4] sm:$0xff]
    %25 = vst [vmem:[#allocation2] sm:$0xff] %v24
  $region25: #{encoder_decoder_forward.7} parent=0 // pred_fallthru
    _
  %v26 = vld [vmem:[%s2] sm:$0xff]
  %v27 = vld [vmem:[%s2 + $0x8] sm:$0xf]
  %v28 = vld [vmem:[%s2 + $0xc] sm:$0xff]
  %v29 = vld [vmem:[%s2 + $0x14] sm:$0xf]
  %v30 = vld [vmem:[%s2 + $0x18] sm:$0xff]
  %v31 = vld [vmem:[%s2 + $0x20] sm:$0xf]
  %v32 = vld [vmem:[%s2 + $0x24] sm:$0xff]
  %v33 = vld [vmem:[%s2 + $0x2c] sm:$0xf]
  %v34 = vld [vmem:[%s2 + $0x30] sm:$0xff]
  %v35 = vld [vmem:[%s2 + $0x38] sm:$0xf]
  %v36 = vld [vmem:[%s2 + $0x3c] sm:$0xff]
  %v37 = vld [vmem:[%s2 + $0x44] sm:$0xf]
  %v38 = vld [vmem:[%s2 + $0x48] sm:$0xff]
  %v39 = vld [vmem:[%s2 + $0x50] sm:$0xf]
  %v40 = vld [vmem:[%s2 + $0x54] sm:$0xff]
  %v41 = vld [vmem:[%s2 + $0x5c] sm:$0xf]
  %v42 = vld [vmem:[%s2 + $0x60] sm:$0xff]
  %v43 = vld [vmem:[%s2 + $0x68] sm:$0xf]
  %v44 = vld [vmem:[%s2 + $0x6c] sm:$0xff]
  %v45 = vld [vmem:[%s2 + $0x74] sm:$0xf]
  %v46 = vld [vmem:[%s2 + $0x78] sm:$0xff]
  %v47 = vld [vmem:[%s2 + $0x80] sm:$0xf]
  %v48 = vld [vmem:[%s2 + $0x84] sm:$0xff]
  %v49 = vld [vmem:[%s2 + $0x8c] sm:$0xf]
  %v50 = vld [vmem:[%s2 + $0x90] sm:$0xff]
  %v51 = vld [vmem:[%s2 + $0x98] sm:$0xf]
  %v52 = vld [vmem:[%s2 + $0x9c] sm:$0xff]
  %v53 = vld [vmem:[%s2 + $0xa4] sm:$0xf]
  %v54 = vld [vmem:[%s2 + $0xa8] sm:$0xff]
  %v55 = vld [vmem:[%s2 + $0xb0] sm:$0xf]
  %v56 = vld [vmem:[%s2 + $0xb4] sm:$0xff]
  %v57 = vld [vmem:[%s2 + $0xbc] sm:$0xf]
  %v58 = vld [vmem:[%s3] sm:$0x7]
  %v59 = vld [vmem:[%s1] sm:$0xff]
  %v60 = vld [vmem:[%s1 + $0x8] sm:$0xff]
  %v61 = vld [vmem:[%s1 + $0x10] sm:$0xff]
  %v62 = vld [vmem:[#allocation2] sm:$0xff]
  %v63 = vpack.c.bf16 %v62, %v62
  %v65 = vperm.slane %v58, 0
  %v66 = vperm.slane %v58, 1
  %v67 = vperm.slane %v58, 2
  %v103 = vunpack.c.l.b16 %v26
  %v104 = vunpack.c.h.b16 %v26
  %v105 = vunpack.c.l.b16 %v27
  %v106 = vunpack.c.l.b16 %v28
  %v107 = vunpack.c.h.b16 %v28
  %v108 = vunpack.c.l.b16 %v29
  %v109 = vunpack.c.l.b16 %v30
  %v110 = vunpack.c.h.b16 %v30
  %v111 = vunpack.c.l.b16 %v31
  %v112 = vunpack.c.l.b16 %v32
  %v113 = vunpack.c.h.b16 %v32
  %v114 = vunpack.c.l.b16 %v33
  %v115 = vunpack.c.l.b16 %v34
  %v116 = vunpack.c.h.b16 %v34
  %v117 = vunpack.c.l.b16 %v35
  %v118 = vunpack.c.l.b16 %v36
  %v119 = vunpack.c.h.b16 %v36
  %v120 = vunpack.c.l.b16 %v37
  %v121 = vunpack.c.l.b16 %v38
  %v122 = vunpack.c.h.b16 %v38
  %v123 = vunpack.c.l.b16 %v39
  %v124 = vunpack.c.l.b16 %v40
  %v125 = vunpack.c.h.b16 %v40
  %v126 = vunpack.c.l.b16 %v41
  %v127 = vunpack.c.l.b16 %v42
  %v128 = vunpack.c.h.b16 %v42
  %v129 = vunpack.c.l.b16 %v43
  %v130 = vunpack.c.l.b16 %v44
  %v131 = vunpack.c.h.b16 %v44
  %v132 = vunpack.c.l.b16 %v45
  %v133 = vunpack.c.l.b16 %v46
  %v134 = vunpack.c.h.b16 %v46
  %v135 = vunpack.c.l.b16 %v47
  %v136 = vunpack.c.l.b16 %v48
  %v137 = vunpack.c.h.b16 %v48
  %v138 = vunpack.c.l.b16 %v49
  %v139 = vunpack.c.l.b16 %v50
  %v140 = vunpack.c.h.b16 %v50
  %v141 = vunpack.c.l.b16 %v51
  %v142 = vunpack.c.l.b16 %v52
  %v143 = vunpack.c.h.b16 %v52
  %v144 = vunpack.c.l.b16 %v53
  %v145 = vunpack.c.l.b16 %v54
  %v146 = vunpack.c.h.b16 %v54
  %v147 = vunpack.c.l.b16 %v55
  %v148 = vunpack.c.l.b16 %v56
  %v149 = vunpack.c.h.b16 %v56
  %v150 = vunpack.c.l.b16 %v57
  %v151 = vpack.c.b16 %v106, %v103
  %v152 = vpack.c.b16 %v107, %v104
  %v153 = vpack.c.b16 %v108, %v105
  %v154 = vpack.c.b16 %v112, %v109
  %v155 = vpack.c.b16 %v113, %v110
  %v156 = vpack.c.b16 %v114, %v111
  %v157 = vpack.c.b16 %v118, %v115
  %v158 = vpack.c.b16 %v119, %v116
  %v159 = vpack.c.b16 %v120, %v117
  %v160 = vpack.c.b16 %v124, %v121
  %v161 = vpack.c.b16 %v125, %v122
  %v162 = vpack.c.b16 %v126, %v123
  %v163 = vpack.c.b16 %v130, %v127
  %v164 = vpack.c.b16 %v131, %v128
  %v165 = vpack.c.b16 %v132, %v129
  %v166 = vpack.c.b16 %v136, %v133
  %v167 = vpack.c.b16 %v137, %v134
  %v168 = vpack.c.b16 %v138, %v135
  %v169 = vpack.c.b16 %v142, %v139
  %v170 = vpack.c.b16 %v143, %v140
  %v171 = vpack.c.b16 %v144, %v141
  %v172 = vpack.c.b16 %v148, %v145
  %v173 = vpack.c.b16 %v149, %v146
  %v174 = vpack.c.b16 %v150, %v147
  %199 = vmatpush.bf16.msra.mxu0 %v172
  %200 = vmatpush.bf16.msra.mxu0 %v169
  %201 = vmatpush.bf16.msra.mxu0 %v166
  %202 = vmatpush.bf16.msra.mxu0 %v163
  %203 = vmatpush.bf16.msra.mxu0 %v160
  %204 = vmatpush.bf16.msra.mxu0 %v157
  %205 = vmatpush.bf16.msra.mxu0 %v154
  %206 = vmatpush.bf16.msra.mxu0 %v151
  %207 = vmatmul.bf16.gmra.mxu0 %v63
  %v208 = vpop.f32.mrf.mxu0
  %v209 = vadd.f32 %v65, %v208
  %v210 = vpop.f32.mrf.mxu0
  %211 = vdwg.mxu0
  %212 = vmatpush.bf16.msra.mxu0 %v173
  %213 = vmatpush.bf16.msra.mxu0 %v170
  %214 = vmatpush.bf16.msra.mxu0 %v167
  %215 = vmatpush.bf16.msra.mxu0 %v164
  %216 = vmatpush.bf16.msra.mxu0 %v161
  %217 = vmatpush.bf16.msra.mxu0 %v158
  %218 = vmatpush.bf16.msra.mxu0 %v155
  %219 = vmatpush.bf16.msra.mxu0 %v152
  %220 = vmatmul.bf16.gmra.mxu0 %v63
  %v221 = vpop.f32.mrf.mxu0
  %v222 = vadd.f32 %v66, %v221
  %v223 = vpop.f32.mrf.mxu0
  %224 = vdwg.mxu0
  %225 = vmatpush.bf16.msra.mxu0 %v174
  %226 = vmatpush.bf16.msra.mxu0 %v171
  %227 = vmatpush.bf16.msra.mxu0 %v168
  %228 = vmatpush.bf16.msra.mxu0 %v165
  %229 = vmatpush.bf16.msra.mxu0 %v162
  %230 = vmatpush.bf16.msra.mxu0 %v159
  %231 = vmatpush.bf16.msra.mxu0 %v156
  %232 = vmatpush.bf16.msra.mxu0 %v153
  %233 = vmatmul.bf16.gmra.mxu0 %v63
  %v234 = vpop.f32.mrf.mxu0
  %v235 = vadd.f32 %v67, %v234
  %v236 = vpop.f32.mrf.mxu0
  %237 = vdwg.mxu0
  %v238 = vld [vmem:[%s0] sm:$0xff]
  %v239 = vld [vmem:[%s0 + $0x8] sm:$0xff]
  %v240 = vld [vmem:[%s0 + $0x10] sm:$0xff]
  %v241 = vadd.f32 %v238, %v59
  %v242 = vadd.f32 %v239, %v60
  %v243 = vadd.f32 %v240, %v61
  %v244 = vadd.f32 %v241, %v209
  %v245 = vxor.u32 %v244, 2147483648
  %v246 = vmul.f32 %v245, 1.442695
  %v247 = vpow.pop %v246
  %v248 = vadd.f32 %v247, 1.0
  %v249 = vrcp.pop %v248
  %v250 = vmul.f32 %v248, %v249
  %v251 = vsub.f32 1.0, %v250
  %v252 = vmul.f32 %v249, %v251
  %v253 = vadd.f32 %v249, %v252
  %vm254 = vweird.f32 %v248
  %vm255 = vweird.f32 %v249
  %vm256 = vmor %vm254, %vm255
  %v257 = vsel %vm256, %v249, %v253
  %v258 = vand.u32 2147483647, %v248
  %vm259 = vcmp.eq.f32.partialorder %v258, 8.507059e+37
  %v260 = vand.u32 %v248, 2147483648
  %v261 = vor.u32 1.1754944e-38, %v260
  %v262 = vsel %vm259, %v261, %v257
  %v263 = vmul.f32 1.0, %v262
  %v264 = vadd.f32 %v242, %v222
  %v265 = vxor.u32 %v264, 2147483648
  %v266 = vmul.f32 %v265, 1.442695
  %v267 = vpow.pop %v266
  %v268 = vadd.f32 %v267, 1.0
  %v269 = vrcp.pop %v268
  %v270 = vmul.f32 %v268, %v269
  %v271 = vsub.f32 1.0, %v270
  %v272 = vmul.f32 %v269, %v271
  %v273 = vadd.f32 %v269, %v272
  %vm274 = vweird.f32 %v268
  %vm275 = vweird.f32 %v269
  %vm276 = vmor %vm274, %vm275
  %v277 = vsel %vm276, %v269, %v273
  %v278 = vand.u32 2147483647, %v268
  %vm279 = vcmp.eq.f32.partialorder %v278, 8.507059e+37
  %v280 = vand.u32 %v268, 2147483648
  %v281 = vor.u32 1.1754944e-38, %v280
  %v282 = vsel %vm279, %v281, %v277
  %v283 = vmul.f32 1.0, %v282
  %v284 = vmul.f32 %v263, %v235
  %v285 = vadd.f32 %v243, %v284
  %v286 = vtanh.pop %v285
  %v287 = vsub.f32 1.0, %v283
  %v288 = vmul.f32 %v287, %v286
  %v289 = vmul.f32 %v283, %v62
  %v290 = vadd.f32 %v288, %v289
  %v291 = vpack.c.bf16 %v290, %v290
  %292 = vmatpush.bf16.msra.mxu0 %v172
  %293 = vmatpush.bf16.msra.mxu0 %v169
  %294 = vmatpush.bf16.msra.mxu0 %v166
  %295 = vmatpush.bf16.msra.mxu0 %v163
  %296 = vmatpush.bf16.msra.mxu0 %v160
  %297 = vmatpush.bf16.msra.mxu0 %v157
  %298 = vmatpush.bf16.msra.mxu0 %v154
  %299 = vmatpush.bf16.msra.mxu0 %v151
  %300 = vmatmul.bf16.gmra.mxu0 %v291
  %v301 = vpop.f32.mrf.mxu0
  %v302 = vadd.f32 %v65, %v301
  %v303 = vpop.f32.mrf.mxu0
  %304 = vdwg.mxu0
  %305 = vmatpush.bf16.msra.mxu0 %v173
  %306 = vmatpush.bf16.msra.mxu0 %v170
  %307 = vmatpush.bf16.msra.mxu0 %v167
  %308 = vmatpush.bf16.msra.mxu0 %v164
  %309 = vmatpush.bf16.msra.mxu0 %v161
  %310 = vmatpush.bf16.msra.mxu0 %v158
  %311 = vmatpush.bf16.msra.mxu0 %v155
  %312 = vmatpush.bf16.msra.mxu0 %v152
  %313 = vmatmul.bf16.gmra.mxu0 %v291
  %v314 = vpop.f32.mrf.mxu0
  %v315 = vadd.f32 %v66, %v314
  %v316 = vpop.f32.mrf.mxu0
  %317 = vdwg.mxu0
  %318 = vmatpush.bf16.msra.mxu0 %v174
  %319 = vmatpush.bf16.msra.mxu0 %v171
  %320 = vmatpush.bf16.msra.mxu0 %v168
  %321 = vmatpush.bf16.msra.mxu0 %v165
  %322 = vmatpush.bf16.msra.mxu0 %v162
  %323 = vmatpush.bf16.msra.mxu0 %v159
  %324 = vmatpush.bf16.msra.mxu0 %v156
  %325 = vmatpush.bf16.msra.mxu0 %v153
  %326 = vmatmul.bf16.gmra.mxu0 %v291
  %v327 = vpop.f32.mrf.mxu0
  %v328 = vadd.f32 %v67, %v327
  %v329 = vpop.f32.mrf.mxu0
  %330 = vdwg.mxu0
  %s331 = scalar_lea.vmem %s0, 24
  %v332 = vld [vmem:[%s331] sm:$0xff]
  %v333 = vld [vmem:[%s331 + $0x8] sm:$0xff]
  %v334 = vld [vmem:[%s331 + $0x10] sm:$0xff]
  %v335 = vadd.f32 %v332, %v59
  %v336 = vadd.f32 %v333, %v60
  %v337 = vadd.f32 %v334, %v61
  %v338 = vadd.f32 %v335, %v302
  %v339 = vxor.u32 %v338, 2147483648
  %v340 = vmul.f32 %v339, 1.442695
  %v341 = vpow.pop %v340
  %v342 = vadd.f32 %v341, 1.0
  %v343 = vrcp.pop %v342
  %v344 = vmul.f32 %v342, %v343
  %v345 = vsub.f32 1.0, %v344
  %v346 = vmul.f32 %v343, %v345
  %v347 = vadd.f32 %v343, %v346
  %vm348 = vweird.f32 %v342
  %vm349 = vweird.f32 %v343
  %vm350 = vmor %vm348, %vm349
  %v351 = vsel %vm350, %v343, %v347
  %v352 = vand.u32 2147483647, %v342
  %vm353 = vcmp.eq.f32.partialorder %v352, 8.507059e+37
  %v354 = vand.u32 %v342, 2147483648
  %v355 = vor.u32 1.1754944e-38, %v354
  %v356 = vsel %vm353, %v355, %v351
  %v357 = vmul.f32 1.0, %v356
  %v358 = vadd.f32 %v336, %v315
  %v359 = vxor.u32 %v358, 2147483648
  %v360 = vmul.f32 %v359, 1.442695
  %v361 = vpow.pop %v360
  %v362 = vadd.f32 %v361, 1.0
  %v363 = vrcp.pop %v362
  %v364 = vmul.f32 %v362, %v363
  %v365 = vsub.f32 1.0, %v364
  %v366 = vmul.f32 %v363, %v365
  %v367 = vadd.f32 %v363, %v366
  %vm368 = vweird.f32 %v362
  %vm369 = vweird.f32 %v363
  %vm370 = vmor %vm368, %vm369
  %v371 = vsel %vm370, %v363, %v367
  %v372 = vand.u32 2147483647, %v362
  %vm373 = vcmp.eq.f32.partialorder %v372, 8.507059e+37
  %v374 = vand.u32 %v362, 2147483648
  %v375 = vor.u32 1.1754944e-38, %v374
  %v376 = vsel %vm373, %v375, %v371
  %v377 = vmul.f32 1.0, %v376
  %v378 = vmul.f32 %v357, %v328
  %v379 = vadd.f32 %v337, %v378
  %v380 = vtanh.pop %v379
  %v381 = vsub.f32 1.0, %v377
  %v382 = vmul.f32 %v381, %v380
  %v383 = vmul.f32 %v377, %v290
  %v384 = vadd.f32 %v382, %v383
  %v385 = vpack.c.bf16 %v384, %v384
  %386 = vmatpush.bf16.msra.mxu0 %v172
  %387 = vmatpush.bf16.msra.mxu0 %v169
  %388 = vmatpush.bf16.msra.mxu0 %v166
  %389 = vmatpush.bf16.msra.mxu0 %v163
  %390 = vmatpush.bf16.msra.mxu0 %v160
  %391 = vmatpush.bf16.msra.mxu0 %v157
  %392 = vmatpush.bf16.msra.mxu0 %v154
  %393 = vmatpush.bf16.msra.mxu0 %v151
  %394 = vmatmul.bf16.gmra.mxu0 %v385
  %v395 = vpop.f32.mrf.mxu0
  %v396 = vadd.f32 %v65, %v395
  %v397 = vpop.f32.mrf.mxu0
  %398 = vdwg.mxu0
  %399 = vmatpush.bf16.msra.mxu0 %v173
  %400 = vmatpush.bf16.msra.mxu0 %v170
  %401 = vmatpush.bf16.msra.mxu0 %v167
  %402 = vmatpush.bf16.msra.mxu0 %v164
  %403 = vmatpush.bf16.msra.mxu0 %v161
  %404 = vmatpush.bf16.msra.mxu0 %v158
  %405 = vmatpush.bf16.msra.mxu0 %v155
  %406 = vmatpush.bf16.msra.mxu0 %v152
  %407 = vmatmul.bf16.gmra.mxu0 %v385
  %v408 = vpop.f32.mrf.mxu0
  %v409 = vadd.f32 %v66, %v408
  %v410 = vpop.f32.mrf.mxu0
  %411 = vdwg.mxu0
  %412 = vmatpush.bf16.msra.mxu0 %v174
  %413 = vmatpush.bf16.msra.mxu0 %v171
  %414 = vmatpush.bf16.msra.mxu0 %v168
  %415 = vmatpush.bf16.msra.mxu0 %v165
  %416 = vmatpush.bf16.msra.mxu0 %v162
  %417 = vmatpush.bf16.msra.mxu0 %v159
  %418 = vmatpush.bf16.msra.mxu0 %v156
  %419 = vmatpush.bf16.msra.mxu0 %v153
  %420 = vmatmul.bf16.gmra.mxu0 %v385
  %v421 = vpop.f32.mrf.mxu0
  %v422 = vadd.f32 %v67, %v421
  %v423 = vpop.f32.mrf.mxu0
  %424 = vdwg.mxu0
  %s425 = scalar_lea.vmem %s0, 48
  %v426 = vld [vmem:[%s425] sm:$0xff]
  %v427 = vld [vmem:[%s425 + $0x8] sm:$0xff]
  %v428 = vld [vmem:[%s425 + $0x10] sm:$0xff]
  %v429 = vadd.f32 %v426, %v59
  %v430 = vadd.f32 %v427, %v60
  %v431 = vadd.f32 %v428, %v61
  %v432 = vadd.f32 %v429, %v396
  %v433 = vxor.u32 %v432, 2147483648
  %v434 = vmul.f32 %v433, 1.442695
  %v435 = vpow.pop %v434
  %v436 = vadd.f32 %v435, 1.0
  %v437 = vrcp.pop %v436
  %v438 = vmul.f32 %v436, %v437
  %v439 = vsub.f32 1.0, %v438
  %v440 = vmul.f32 %v437, %v439
  %v441 = vadd.f32 %v437, %v440
  %vm442 = vweird.f32 %v436
  %vm443 = vweird.f32 %v437
  %vm444 = vmor %vm442, %vm443
  %v445 = vsel %vm444, %v437, %v441
  %v446 = vand.u32 2147483647, %v436
  %vm447 = vcmp.eq.f32.partialorder %v446, 8.507059e+37
  %v448 = vand.u32 %v436, 2147483648
  %v449 = vor.u32 1.1754944e-38, %v448
  %v450 = vsel %vm447, %v449, %v445
  %v451 = vmul.f32 1.0, %v450
  %v452 = vadd.f32 %v430, %v409
  %v453 = vxor.u32 %v452, 2147483648
  %v454 = vmul.f32 %v453, 1.442695
  %v455 = vpow.pop %v454
  %v456 = vadd.f32 %v455, 1.0
  %v457 = vrcp.pop %v456
  %v458 = vmul.f32 %v456, %v457
  %v459 = vsub.f32 1.0, %v458
  %v460 = vmul.f32 %v457, %v459
  %v461 = vadd.f32 %v457, %v460
  %vm462 = vweird.f32 %v456
  %vm463 = vweird.f32 %v457
  %vm464 = vmor %vm462, %vm463
  %v465 = vsel %vm464, %v457, %v461
  %v466 = vand.u32 2147483647, %v456
  %vm467 = vcmp.eq.f32.partialorder %v466, 8.507059e+37
  %v468 = vand.u32 %v456, 2147483648
  %v469 = vor.u32 1.1754944e-38, %v468
  %v470 = vsel %vm467, %v469, %v465
  %v471 = vmul.f32 1.0, %v470
  %v472 = vmul.f32 %v451, %v422
  %v473 = vadd.f32 %v431, %v472
  %v474 = vtanh.pop %v473
  %v475 = vsub.f32 1.0, %v471
  %v476 = vmul.f32 %v475, %v474
  %v477 = vmul.f32 %v471, %v384
  %v478 = vadd.f32 %v476, %v477
  %v479 = vpack.c.bf16 %v478, %v478
  %480 = vmatpush.bf16.msra.mxu0 %v172
  %481 = vmatpush.bf16.msra.mxu0 %v169
  %482 = vmatpush.bf16.msra.mxu0 %v166
  %483 = vmatpush.bf16.msra.mxu0 %v163
  %484 = vmatpush.bf16.msra.mxu0 %v160
  %485 = vmatpush.bf16.msra.mxu0 %v157
  %486 = vmatpush.bf16.msra.mxu0 %v154
  %487 = vmatpush.bf16.msra.mxu0 %v151
  %488 = vmatmul.bf16.gmra.mxu0 %v479
  %v489 = vpop.f32.mrf.mxu0
  %v490 = vadd.f32 %v65, %v489
  %v491 = vpop.f32.mrf.mxu0
  %492 = vdwg.mxu0
  %493 = vmatpush.bf16.msra.mxu0 %v173
  %494 = vmatpush.bf16.msra.mxu0 %v170
  %495 = vmatpush.bf16.msra.mxu0 %v167
  %496 = vmatpush.bf16.msra.mxu0 %v164
  %497 = vmatpush.bf16.msra.mxu0 %v161
  %498 = vmatpush.bf16.msra.mxu0 %v158
  %499 = vmatpush.bf16.msra.mxu0 %v155
  %500 = vmatpush.bf16.msra.mxu0 %v152
  %501 = vmatmul.bf16.gmra.mxu0 %v479
  %v502 = vpop.f32.mrf.mxu0
  %v503 = vadd.f32 %v66, %v502
  %v504 = vpop.f32.mrf.mxu0
  %505 = vdwg.mxu0
  %506 = vmatpush.bf16.msra.mxu0 %v174
  %507 = vmatpush.bf16.msra.mxu0 %v171
  %508 = vmatpush.bf16.msra.mxu0 %v168
  %509 = vmatpush.bf16.msra.mxu0 %v165
  %510 = vmatpush.bf16.msra.mxu0 %v162
  %511 = vmatpush.bf16.msra.mxu0 %v159
  %512 = vmatpush.bf16.msra.mxu0 %v156
  %513 = vmatpush.bf16.msra.mxu0 %v153
  %514 = vmatmul.bf16.gmra.mxu0 %v479
  %v515 = vpop.f32.mrf.mxu0
  %v516 = vadd.f32 %v67, %v515
  %v517 = vpop.f32.mrf.mxu0
  %518 = vdwg.mxu0
  %s519 = scalar_lea.vmem %s0, 72
  %v520 = vld [vmem:[%s519] sm:$0xff]
  %v521 = vld [vmem:[%s519 + $0x8] sm:$0xff]
  %v522 = vld [vmem:[%s519 + $0x10] sm:$0xff]
  %v523 = vadd.f32 %v520, %v59
  %v524 = vadd.f32 %v521, %v60
  %v525 = vadd.f32 %v522, %v61
  %v526 = vadd.f32 %v523, %v490
  %v527 = vxor.u32 %v526, 2147483648
  %v528 = vmul.f32 %v527, 1.442695
  %v529 = vpow.pop %v528
  %v530 = vadd.f32 %v529, 1.0
  %v531 = vrcp.pop %v530
  %v532 = vmul.f32 %v530, %v531
  %v533 = vsub.f32 1.0, %v532
  %v534 = vmul.f32 %v531, %v533
  %v535 = vadd.f32 %v531, %v534
  %vm536 = vweird.f32 %v530
  %vm537 = vweird.f32 %v531
  %vm538 = vmor %vm536, %vm537
  %v539 = vsel %vm538, %v531, %v535
  %v540 = vand.u32 2147483647, %v530
  %vm541 = vcmp.eq.f32.partialorder %v540, 8.507059e+37
  %v542 = vand.u32 %v530, 2147483648
  %v543 = vor.u32 1.1754944e-38, %v542
  %v544 = vsel %vm541, %v543, %v539
  %v545 = vmul.f32 1.0, %v544
  %v546 = vadd.f32 %v524, %v503
  %v547 = vxor.u32 %v546, 2147483648
  %v548 = vmul.f32 %v547, 1.442695
  %v549 = vpow.pop %v548
  %v550 = vadd.f32 %v549, 1.0
  %v551 = vrcp.pop %v550
  %v552 = vmul.f32 %v550, %v551
  %v553 = vsub.f32 1.0, %v552
  %v554 = vmul.f32 %v551, %v553
  %v555 = vadd.f32 %v551, %v554
  %vm556 = vweird.f32 %v550
  %vm557 = vweird.f32 %v551
  %vm558 = vmor %vm556, %vm557
  %v559 = vsel %vm558, %v551, %v555
  %v560 = vand.u32 2147483647, %v550
  %vm561 = vcmp.eq.f32.partialorder %v560, 8.507059e+37
  %v562 = vand.u32 %v550, 2147483648
  %v563 = vor.u32 1.1754944e-38, %v562
  %v564 = vsel %vm561, %v563, %v559
  %v565 = vmul.f32 1.0, %v564
  %v566 = vmul.f32 %v545, %v516
  %v567 = vadd.f32 %v525, %v566
  %v568 = vtanh.pop %v567
  %v569 = vsub.f32 1.0, %v565
  %v570 = vmul.f32 %v569, %v568
  %v571 = vmul.f32 %v565, %v478
  %v572 = vadd.f32 %v570, %v571
  %v573 = vpack.c.bf16 %v572, %v572
  %574 = vmatpush.bf16.msra.mxu0 %v172
  %575 = vmatpush.bf16.msra.mxu0 %v169
  %576 = vmatpush.bf16.msra.mxu0 %v166
  %577 = vmatpush.bf16.msra.mxu0 %v163
  %578 = vmatpush.bf16.msra.mxu0 %v160
  %579 = vmatpush.bf16.msra.mxu0 %v157
  %580 = vmatpush.bf16.msra.mxu0 %v154
  %581 = vmatpush.bf16.msra.mxu0 %v151
  %582 = vmatmul.bf16.gmra.mxu0 %v573
  %v583 = vpop.f32.mrf.mxu0
  %v584 = vadd.f32 %v65, %v583
  %v585 = vpop.f32.mrf.mxu0
  %586 = vdwg.mxu0
  %587 = vmatpush.bf16.msra.mxu0 %v173
  %588 = vmatpush.bf16.msra.mxu0 %v170
  %589 = vmatpush.bf16.msra.mxu0 %v167
  %590 = vmatpush.bf16.msra.mxu0 %v164
  %591 = vmatpush.bf16.msra.mxu0 %v161
  %592 = vmatpush.bf16.msra.mxu0 %v158
  %593 = vmatpush.bf16.msra.mxu0 %v155
  %594 = vmatpush.bf16.msra.mxu0 %v152
  %595 = vmatmul.bf16.gmra.mxu0 %v573
  %v596 = vpop.f32.mrf.mxu0
  %v597 = vadd.f32 %v66, %v596
  %v598 = vpop.f32.mrf.mxu0
  %599 = vdwg.mxu0
  %600 = vmatpush.bf16.msra.mxu0 %v174
  %601 = vmatpush.bf16.msra.mxu0 %v171
  %602 = vmatpush.bf16.msra.mxu0 %v168
  %603 = vmatpush.bf16.msra.mxu0 %v165
  %604 = vmatpush.bf16.msra.mxu0 %v162
  %605 = vmatpush.bf16.msra.mxu0 %v159
  %606 = vmatpush.bf16.msra.mxu0 %v156
  %607 = vmatpush.bf16.msra.mxu0 %v153
  %608 = vmatmul.bf16.gmra.mxu0 %v573
  %v609 = vpop.f32.mrf.mxu0
  %v610 = vadd.f32 %v67, %v609
  %v611 = vpop.f32.mrf.mxu0
  %612 = vdwg.mxu0
  %s613 = scalar_lea.vmem %s0, 96
  %v614 = vld [vmem:[%s613] sm:$0xff]
  %v615 = vld [vmem:[%s613 + $0x8] sm:$0xff]
  %v616 = vld [vmem:[%s613 + $0x10] sm:$0xff]
  %v617 = vadd.f32 %v614, %v59
  %v618 = vadd.f32 %v615, %v60
  %v619 = vadd.f32 %v616, %v61
  %v620 = vadd.f32 %v617, %v584
  %v621 = vxor.u32 %v620, 2147483648
  %v622 = vmul.f32 %v621, 1.442695
  %v623 = vpow.pop %v622
  %v624 = vadd.f32 %v623, 1.0
  %v625 = vrcp.pop %v624
  %v626 = vmul.f32 %v624, %v625
  %v627 = vsub.f32 1.0, %v626
  %v628 = vmul.f32 %v625, %v627
  %v629 = vadd.f32 %v625, %v628
  %vm630 = vweird.f32 %v624
  %vm631 = vweird.f32 %v625
  %vm632 = vmor %vm630, %vm631
  %v633 = vsel %vm632, %v625, %v629
  %v634 = vand.u32 2147483647, %v624
  %vm635 = vcmp.eq.f32.partialorder %v634, 8.507059e+37
  %v636 = vand.u32 %v624, 2147483648
  %v637 = vor.u32 1.1754944e-38, %v636
  %v638 = vsel %vm635, %v637, %v633
  %v639 = vmul.f32 1.0, %v638
  %v640 = vadd.f32 %v618, %v597
  %v641 = vxor.u32 %v640, 2147483648
  %v642 = vmul.f32 %v641, 1.442695
  %v643 = vpow.pop %v642
  %v644 = vadd.f32 %v643, 1.0
  %v645 = vrcp.pop %v644
  %v646 = vmul.f32 %v644, %v645
  %v647 = vsub.f32 1.0, %v646
  %v648 = vmul.f32 %v645, %v647
  %v649 = vadd.f32 %v645, %v648
  %vm650 = vweird.f32 %v644
  %vm651 = vweird.f32 %v645
  %vm652 = vmor %vm650, %vm651
  %v653 = vsel %vm652, %v645, %v649
  %v654 = vand.u32 2147483647, %v644
  %vm655 = vcmp.eq.f32.partialorder %v654, 8.507059e+37
  %v656 = vand.u32 %v644, 2147483648
  %v657 = vor.u32 1.1754944e-38, %v656
  %v658 = vsel %vm655, %v657, %v653
  %v659 = vmul.f32 1.0, %v658
  %v660 = vmul.f32 %v639, %v610
  %v661 = vadd.f32 %v619, %v660
  %v662 = vtanh.pop %v661
  %v663 = vsub.f32 1.0, %v659
  %v664 = vmul.f32 %v663, %v662
  %v665 = vmul.f32 %v659, %v572
  %v666 = vadd.f32 %v664, %v665
  %v667 = vpack.c.bf16 %v666, %v666
  %668 = vmatpush.bf16.msra.mxu0 %v172
  %669 = vmatpush.bf16.msra.mxu0 %v169
  %670 = vmatpush.bf16.msra.mxu0 %v166
  %671 = vmatpush.bf16.msra.mxu0 %v163
  %672 = vmatpush.bf16.msra.mxu0 %v160
  %673 = vmatpush.bf16.msra.mxu0 %v157
  %674 = vmatpush.bf16.msra.mxu0 %v154
  %675 = vmatpush.bf16.msra.mxu0 %v151
  %676 = vmatmul.bf16.gmra.mxu0 %v667
  %v677 = vpop.f32.mrf.mxu0
  %v678 = vadd.f32 %v65, %v677
  %v679 = vpop.f32.mrf.mxu0
  %680 = vdwg.mxu0
  %681 = vmatpush.bf16.msra.mxu0 %v173
  %682 = vmatpush.bf16.msra.mxu0 %v170
  %683 = vmatpush.bf16.msra.mxu0 %v167
  %684 = vmatpush.bf16.msra.mxu0 %v164
  %685 = vmatpush.bf16.msra.mxu0 %v161
  %686 = vmatpush.bf16.msra.mxu0 %v158
  %687 = vmatpush.bf16.msra.mxu0 %v155
  %688 = vmatpush.bf16.msra.mxu0 %v152
  %689 = vmatmul.bf16.gmra.mxu0 %v667
  %v690 = vpop.f32.mrf.mxu0
  %v691 = vadd.f32 %v66, %v690
  %v692 = vpop.f32.mrf.mxu0
  %693 = vdwg.mxu0
  %694 = vmatpush.bf16.msra.mxu0 %v174
  %695 = vmatpush.bf16.msra.mxu0 %v171
  %696 = vmatpush.bf16.msra.mxu0 %v168
  %697 = vmatpush.bf16.msra.mxu0 %v165
  %698 = vmatpush.bf16.msra.mxu0 %v162
  %699 = vmatpush.bf16.msra.mxu0 %v159
  %700 = vmatpush.bf16.msra.mxu0 %v156
  %701 = vmatpush.bf16.msra.mxu0 %v153
  %702 = vmatmul.bf16.gmra.mxu0 %v667
  %v703 = vpop.f32.mrf.mxu0
  %v704 = vadd.f32 %v67, %v703
  %v705 = vpop.f32.mrf.mxu0
  %706 = vdwg.mxu0
  %s707 = scalar_lea.vmem %s0, 120
  %v708 = vld [vmem:[%s707] sm:$0xff]
  %v709 = vld [vmem:[%s707 + $0x8] sm:$0xff]
  %v710 = vld [vmem:[%s707 + $0x10] sm:$0xff]
  %v711 = vadd.f32 %v708, %v59
  %v712 = vadd.f32 %v709, %v60
  %v713 = vadd.f32 %v710, %v61
  %v714 = vadd.f32 %v711, %v678
  %v715 = vxor.u32 %v714, 2147483648
  %v716 = vmul.f32 %v715, 1.442695
  %v717 = vpow.pop %v716
  %v718 = vadd.f32 %v717, 1.0
  %v719 = vrcp.pop %v718
  %v720 = vmul.f32 %v718, %v719
  %v721 = vsub.f32 1.0, %v720
  %v722 = vmul.f32 %v719, %v721
  %v723 = vadd.f32 %v719, %v722
  %vm724 = vweird.f32 %v718
  %vm725 = vweird.f32 %v719
  %vm726 = vmor %vm724, %vm725
  %v727 = vsel %vm726, %v719, %v723
  %v728 = vand.u32 2147483647, %v718
  %vm729 = vcmp.eq.f32.partialorder %v728, 8.507059e+37
  %v730 = vand.u32 %v718, 2147483648
  %v731 = vor.u32 1.1754944e-38, %v730
  %v732 = vsel %vm729, %v731, %v727
  %v733 = vmul.f32 1.0, %v732
  %v734 = vadd.f32 %v712, %v691
  %v735 = vxor.u32 %v734, 2147483648
  %v736 = vmul.f32 %v735, 1.442695
  %v737 = vpow.pop %v736
  %v738 = vadd.f32 %v737, 1.0
  %v739 = vrcp.pop %v738
  %v740 = vmul.f32 %v738, %v739
  %v741 = vsub.f32 1.0, %v740
  %v742 = vmul.f32 %v739, %v741
  %v743 = vadd.f32 %v739, %v742
  %vm744 = vweird.f32 %v738
  %vm745 = vweird.f32 %v739
  %vm746 = vmor %vm744, %vm745
  %v747 = vsel %vm746, %v739, %v743
  %v748 = vand.u32 2147483647, %v738
  %vm749 = vcmp.eq.f32.partialorder %v748, 8.507059e+37
  %v750 = vand.u32 %v738, 2147483648
  %v751 = vor.u32 1.1754944e-38, %v750
  %v752 = vsel %vm749, %v751, %v747
  %v753 = vmul.f32 1.0, %v752
  %v754 = vmul.f32 %v733, %v704
  %v755 = vadd.f32 %v713, %v754
  %v756 = vtanh.pop %v755
  %v757 = vsub.f32 1.0, %v753
  %v758 = vmul.f32 %v757, %v756
  %v759 = vmul.f32 %v753, %v666
  %v760 = vadd.f32 %v758, %v759
  %v761 = vpack.c.bf16 %v760, %v760
  %762 = vmatpush.bf16.msra.mxu0 %v172
  %763 = vmatpush.bf16.msra.mxu0 %v169
  %764 = vmatpush.bf16.msra.mxu0 %v166
  %765 = vmatpush.bf16.msra.mxu0 %v163
  %766 = vmatpush.bf16.msra.mxu0 %v160
  %767 = vmatpush.bf16.msra.mxu0 %v157
  %768 = vmatpush.bf16.msra.mxu0 %v154
  %769 = vmatpush.bf16.msra.mxu0 %v151
  %770 = vmatmul.bf16.gmra.mxu0 %v761
  %v771 = vpop.f32.mrf.mxu0
  %v772 = vadd.f32 %v65, %v771
  %v773 = vpop.f32.mrf.mxu0
  %774 = vdwg.mxu0
  %775 = vmatpush.bf16.msra.mxu0 %v173
  %776 = vmatpush.bf16.msra.mxu0 %v170
  %777 = vmatpush.bf16.msra.mxu0 %v167
  %778 = vmatpush.bf16.msra.mxu0 %v164
  %779 = vmatpush.bf16.msra.mxu0 %v161
  %780 = vmatpush.bf16.msra.mxu0 %v158
  %781 = vmatpush.bf16.msra.mxu0 %v155
  %782 = vmatpush.bf16.msra.mxu0 %v152
  %783 = vmatmul.bf16.gmra.mxu0 %v761
  %v784 = vpop.f32.mrf.mxu0
  %v785 = vadd.f32 %v66, %v784
  %v786 = vpop.f32.mrf.mxu0
  %787 = vdwg.mxu0
  %788 = vmatpush.bf16.msra.mxu0 %v174
  %789 = vmatpush.bf16.msra.mxu0 %v171
  %790 = vmatpush.bf16.msra.mxu0 %v168
  %791 = vmatpush.bf16.msra.mxu0 %v165
  %792 = vmatpush.bf16.msra.mxu0 %v162
  %793 = vmatpush.bf16.msra.mxu0 %v159
  %794 = vmatpush.bf16.msra.mxu0 %v156
  %795 = vmatpush.bf16.msra.mxu0 %v153
  %796 = vmatmul.bf16.gmra.mxu0 %v761
  %v797 = vpop.f32.mrf.mxu0
  %v798 = vadd.f32 %v67, %v797
  %v799 = vpop.f32.mrf.mxu0
  %800 = vdwg.mxu0
  %s801 = scalar_lea.vmem %s0, 144
  %v802 = vld [vmem:[%s801] sm:$0xff]
  %v803 = vld [vmem:[%s801 + $0x8] sm:$0xff]
  %v804 = vld [vmem:[%s801 + $0x10] sm:$0xff]
  %v805 = vadd.f32 %v802, %v59
  %v806 = vadd.f32 %v803, %v60
  %v807 = vadd.f32 %v804, %v61
  %v808 = vadd.f32 %v805, %v772
  %v809 = vxor.u32 %v808, 2147483648
  %v810 = vmul.f32 %v809, 1.442695
  %v811 = vpow.pop %v810
  %v812 = vadd.f32 %v811, 1.0
  %v813 = vrcp.pop %v812
  %v814 = vmul.f32 %v812, %v813
  %v815 = vsub.f32 1.0, %v814
  %v816 = vmul.f32 %v813, %v815
  %v817 = vadd.f32 %v813, %v816
  %vm818 = vweird.f32 %v812
  %vm819 = vweird.f32 %v813
  %vm820 = vmor %vm818, %vm819
  %v821 = vsel %vm820, %v813, %v817
  %v822 = vand.u32 2147483647, %v812
  %vm823 = vcmp.eq.f32.partialorder %v822, 8.507059e+37
  %v824 = vand.u32 %v812, 2147483648
  %v825 = vor.u32 1.1754944e-38, %v824
  %v826 = vsel %vm823, %v825, %v821
  %v827 = vmul.f32 1.0, %v826
  %v828 = vadd.f32 %v806, %v785
  %v829 = vxor.u32 %v828, 2147483648
  %v830 = vmul.f32 %v829, 1.442695
  %v831 = vpow.pop %v830
  %v832 = vadd.f32 %v831, 1.0
  %v833 = vrcp.pop %v832
  %v834 = vmul.f32 %v832, %v833
  %v835 = vsub.f32 1.0, %v834
  %v836 = vmul.f32 %v833, %v835
  %v837 = vadd.f32 %v833, %v836
  %vm838 = vweird.f32 %v832
  %vm839 = vweird.f32 %v833
  %vm840 = vmor %vm838, %vm839
  %v841 = vsel %vm840, %v833, %v837
  %v842 = vand.u32 2147483647, %v832
  %vm843 = vcmp.eq.f32.partialorder %v842, 8.507059e+37
  %v844 = vand.u32 %v832, 2147483648
  %v845 = vor.u32 1.1754944e-38, %v844
  %v846 = vsel %vm843, %v845, %v841
  %v847 = vmul.f32 1.0, %v846
  %v848 = vmul.f32 %v827, %v798
  %v849 = vadd.f32 %v807, %v848
  %v850 = vtanh.pop %v849
  %v851 = vsub.f32 1.0, %v847
  %v852 = vmul.f32 %v851, %v850
  %v853 = vmul.f32 %v847, %v760
  %v854 = vadd.f32 %v852, %v853
  %v855 = vpack.c.bf16 %v854, %v854
  %856 = vmatpush.bf16.msra.mxu0 %v172
  %857 = vmatpush.bf16.msra.mxu0 %v169
  %858 = vmatpush.bf16.msra.mxu0 %v166
  %859 = vmatpush.bf16.msra.mxu0 %v163
  %860 = vmatpush.bf16.msra.mxu0 %v160
  %861 = vmatpush.bf16.msra.mxu0 %v157
  %862 = vmatpush.bf16.msra.mxu0 %v154
  %863 = vmatpush.bf16.msra.mxu0 %v151
  %864 = vmatmul.bf16.gmra.mxu0 %v855
  %v865 = vpop.f32.mrf.mxu0
  %v866 = vadd.f32 %v65, %v865
  %v867 = vpop.f32.mrf.mxu0
  %868 = vdwg.mxu0
  %869 = vmatpush.bf16.msra.mxu0 %v173
  %870 = vmatpush.bf16.msra.mxu0 %v170
  %871 = vmatpush.bf16.msra.mxu0 %v167
  %872 = vmatpush.bf16.msra.mxu0 %v164
  %873 = vmatpush.bf16.msra.mxu0 %v161
  %874 = vmatpush.bf16.msra.mxu0 %v158
  %875 = vmatpush.bf16.msra.mxu0 %v155
  %876 = vmatpush.bf16.msra.mxu0 %v152
  %877 = vmatmul.bf16.gmra.mxu0 %v855
  %v878 = vpop.f32.mrf.mxu0
  %v879 = vadd.f32 %v66, %v878
  %v880 = vpop.f32.mrf.mxu0
  %881 = vdwg.mxu0
  %882 = vmatpush.bf16.msra.mxu0 %v174
  %883 = vmatpush.bf16.msra.mxu0 %v171
  %884 = vmatpush.bf16.msra.mxu0 %v168
  %885 = vmatpush.bf16.msra.mxu0 %v165
  %886 = vmatpush.bf16.msra.mxu0 %v162
  %887 = vmatpush.bf16.msra.mxu0 %v159
  %888 = vmatpush.bf16.msra.mxu0 %v156
  %889 = vmatpush.bf16.msra.mxu0 %v153
  %890 = vmatmul.bf16.gmra.mxu0 %v855
  %v891 = vpop.f32.mrf.mxu0
  %v892 = vadd.f32 %v67, %v891
  %v893 = vpop.f32.mrf.mxu0
  %894 = vdwg.mxu0
  %s895 = scalar_lea.vmem %s0, 168
  %v896 = vld [vmem:[%s895] sm:$0xff]
  %v897 = vld [vmem:[%s895 + $0x8] sm:$0xff]
  %v898 = vld [vmem:[%s895 + $0x10] sm:$0xff]
  %v899 = vadd.f32 %v896, %v59
  %v900 = vadd.f32 %v897, %v60
  %v901 = vadd.f32 %v898, %v61
  %v902 = vadd.f32 %v899, %v866
  %v903 = vxor.u32 %v902, 2147483648
  %v904 = vmul.f32 %v903, 1.442695
  %v905 = vpow.pop %v904
  %v906 = vadd.f32 %v905, 1.0
  %v907 = vrcp.pop %v906
  %v908 = vmul.f32 %v906, %v907
  %v909 = vsub.f32 1.0, %v908
  %v910 = vmul.f32 %v907, %v909
  %v911 = vadd.f32 %v907, %v910
  %vm912 = vweird.f32 %v906
  %vm913 = vweird.f32 %v907
  %vm914 = vmor %vm912, %vm913
  %v915 = vsel %vm914, %v907, %v911
  %v916 = vand.u32 2147483647, %v906
  %vm917 = vcmp.eq.f32.partialorder %v916, 8.507059e+37
  %v918 = vand.u32 %v906, 2147483648
  %v919 = vor.u32 1.1754944e-38, %v918
  %v920 = vsel %vm917, %v919, %v915
  %v921 = vmul.f32 1.0, %v920
  %v922 = vadd.f32 %v900, %v879
  %v923 = vxor.u32 %v922, 2147483648
  %v924 = vmul.f32 %v923, 1.442695
  %v925 = vpow.pop %v924
  %v926 = vadd.f32 %v925, 1.0
  %v927 = vrcp.pop %v926
  %v928 = vmul.f32 %v926, %v927
  %v929 = vsub.f32 1.0, %v928
  %v930 = vmul.f32 %v927, %v929
  %v931 = vadd.f32 %v927, %v930
  %vm932 = vweird.f32 %v926
  %vm933 = vweird.f32 %v927
  %vm934 = vmor %vm932, %vm933
  %v935 = vsel %vm934, %v927, %v931
  %v936 = vand.u32 2147483647, %v926
  %vm937 = vcmp.eq.f32.partialorder %v936, 8.507059e+37
  %v938 = vand.u32 %v926, 2147483648
  %v939 = vor.u32 1.1754944e-38, %v938
  %v940 = vsel %vm937, %v939, %v935
  %v941 = vmul.f32 1.0, %v940
  %v942 = vmul.f32 %v921, %v892
  %v943 = vadd.f32 %v901, %v942
  %v944 = vtanh.pop %v943
  %v945 = vsub.f32 1.0, %v941
  %v946 = vmul.f32 %v945, %v944
  %v947 = vmul.f32 %v941, %v854
  %v948 = vadd.f32 %v946, %v947
  %949 = vst [vmem:[#allocation2] sm:$0xff] %v948
  %950 = vst [vmem:[%s5] sm:$0xff] %v948
  // Predicated region
  $region26: #{encoder_decoder_forward.7} parent=0 // pred_check
    _
  $region27: #{encoder_decoder_forward.7} parent=0 // pred_check_branch
    %952 = sbr.rel (0) target = $region29
  $region28: #{encoder_decoder_forward.7} parent=0 // pred_region
    _
  $region29: #{encoder_decoder_forward.7} parent=0 // pred_fallthru
    _
  // Predicated region
  $region30: #{encoder_decoder_forward.7} parent=0 // pred_check
    _
  $region31: #{encoder_decoder_forward.7} parent=0 // pred_check_branch
    %954 = sbr.rel (0) target = $region33
  $region32: #{encoder_decoder_forward.7} parent=0 // pred_region
    _
  $region33: #{encoder_decoder_forward.7} parent=0 // pred_fallthru
    _

// kernel: encoder_decoder_forward.11
$region0: #{encoder_decoder_forward.11}
  #allocation0 [shape = 'u32[]', space=smem, size = 0x4, offset = 0x4, fixed_abs, tag = 'smem constant byte address 0x4 - core index']
  #allocation1 [shape = 'u32[72,128]{1,0:T(1,128)}', space=vmem, size = 0x9000, scoped, tag = 'internal scratch']
  %s0 = inlined_call_operand.vmem [shape: bf16[64,128], index: 0, kind: input, shape index: {}]
  %s1 = inlined_call_operand.vmem [shape: bf16[128,128], index: 1, kind: input, shape index: {}]
  %s2 = inlined_call_operand.vmem [shape: f32[1,128], index: 2, kind: input, shape index: {}]
  %s3 = inlined_call_operand.vmem [shape: f32[64,128], index: 3, kind: output, shape index: {}]
  %s4 = sld [smem:[#allocation0]]
  $region22: #{encoder_decoder_forward.11} parent=0
    _
  %s6 = ssub.s32 1, %s4
  %s7 = scalar_select 0, %s6, %s4
  // Predicated region
  $region2: #{encoder_decoder_forward.11} parent=0 // pred_check
    _
  $region3: #{encoder_decoder_forward.11} parent=0 // pred_check_branch
    %9 = sbr.rel (0) target = $region5
  $region4: #{encoder_decoder_forward.11} parent=0 // pred_region
    _
  $region5: #{encoder_decoder_forward.11} parent=0 // pred_fallthru
    _
  // Predicated region
  $region6: #{encoder_decoder_forward.11} parent=0 // pred_check
    _
  $region7: #{encoder_decoder_forward.11} parent=0 // pred_check_branch
    %11 = sbr.rel (0) target = $region9
  $region8: #{encoder_decoder_forward.11} parent=0 // pred_region
    _
  $region9: #{encoder_decoder_forward.11} parent=0 // pred_fallthru
    _
  // Predicated region
  $region10: #{encoder_decoder_forward.11} parent=0 // pred_check
    _
  $region11: #{encoder_decoder_forward.11} parent=0 // pred_check_branch
    %13 = sbr.rel (0) target = $region13
  $region12: #{encoder_decoder_forward.11} parent=0 // pred_region
    _
  $region13: #{encoder_decoder_forward.11} parent=0 // pred_fallthru
    _
  %v14 = vld [vmem:[%s0] sm:$0xf]
  %v15 = vld [vmem:[%s0 + $0x4] sm:$0xf]
  %v16 = vld [vmem:[%s0 + $0x8] sm:$0xf]
  %v17 = vld [vmem:[%s0 + $0xc] sm:$0xf]
  %v18 = vld [vmem:[%s0 + $0x10] sm:$0xf]
  %v19 = vld [vmem:[%s0 + $0x14] sm:$0xf]
  %v20 = vld [vmem:[%s0 + $0x18] sm:$0xf]
  %v21 = vld [vmem:[%s0 + $0x1c] sm:$0xf]
  %v22 = vld [vmem:[%s1] sm:$0xf]
  %v23 = vld [vmem:[%s1 + $0x4] sm:$0xf]
  %v24 = vld [vmem:[%s1 + $0x8] sm:$0xf]
  %v25 = vld [vmem:[%s1 + $0xc] sm:$0xf]
  %v26 = vld [vmem:[%s1 + $0x10] sm:$0xf]
  %v27 = vld [vmem:[%s1 + $0x14] sm:$0xf]
  %v28 = vld [vmem:[%s1 + $0x18] sm:$0xf]
  %v29 = vld [vmem:[%s1 + $0x1c] sm:$0xf]
  %v30 = vld [vmem:[%s1 + $0x20] sm:$0xf]
  %v31 = vld [vmem:[%s1 + $0x24] sm:$0xf]
  %v32 = vld [vmem:[%s1 + $0x28] sm:$0xf]
  %v33 = vld [vmem:[%s1 + $0x2c] sm:$0xf]
  %v34 = vld [vmem:[%s1 + $0x30] sm:$0xf]
  %v35 = vld [vmem:[%s1 + $0x34] sm:$0xf]
  %v36 = vld [vmem:[%s1 + $0x38] sm:$0xf]
  %v37 = vld [vmem:[%s1 + $0x3c] sm:$0xf]
  %v38 = vld [vmem:[%s2] sm:$0x1]
  %v40 = vperm.slane %v38, 0
  %v50 = vunpack.c.l.b16 %v14
  %v51 = vunpack.c.l.b16 %v15
  %v52 = vunpack.c.l.b16 %v16
  %v53 = vunpack.c.l.b16 %v17
  %v54 = vunpack.c.l.b16 %v18
  %v55 = vunpack.c.l.b16 %v19
  %v56 = vunpack.c.l.b16 %v20
  %v57 = vunpack.c.l.b16 %v21
  %v58 = vpack.c.b16 %v51, %v50
  %v59 = vpack.c.b16 %v53, %v52
  %v60 = vpack.c.b16 %v55, %v54
  %v61 = vpack.c.b16 %v57, %v56
  %v82 = vunpack.c.l.b16 %v22
  %v83 = vunpack.c.l.b16 %v23
  %v84 = vunpack.c.l.b16 %v24
  %v85 = vunpack.c.l.b16 %v25
  %v86 = vunpack.c.l.b16 %v26
  %v87 = vunpack.c.l.b16 %v27
  %v88 = vunpack.c.l.b16 %v28
  %v89 = vunpack.c.l.b16 %v29
  %v90 = vunpack.c.l.b16 %v30
  %v91 = vunpack.c.l.b16 %v31
  %v92 = vunpack.c.l.b16 %v32
  %v93 = vunpack.c.l.b16 %v33
  %v94 = vunpack.c.l.b16 %v34
  %v95 = vunpack.c.l.b16 %v35
  %v96 = vunpack.c.l.b16 %v36
  %v97 = vunpack.c.l.b16 %v37
  %v98 = vpack.c.b16 %v83, %v82
  %v99 = vpack.c.b16 %v85, %v84
  %v100 = vpack.c.b16 %v87, %v86
  %v101 = vpack.c.b16 %v89, %v88
  %v102 = vpack.c.b16 %v91, %v90
  %v103 = vpack.c.b16 %v93, %v92
  %v104 = vpack.c.b16 %v95, %v94
  %v105 = vpack.c.b16 %v97, %v96
  %114 = vmatpush.bf16.msra.mxu0 %v105
  %115 = vmatpush.bf16.msra.mxu0 %v104
  %116 = vmatpush.bf16.msra.mxu0 %v103
  %117 = vmatpush.bf16.msra.mxu0 %v102
  %118 = vmatpush.bf16.msra.mxu0 %v101
  %119 = vmatpush.bf16.msra.mxu0 %v100
  %120 = vmatpush.bf16.msra.mxu0 %v99
  %121 = vmatpush.bf16.msra.mxu0 %v98
  %122 = vmatmul.bf16.gmra.mxu0 %v58
  %v123 = vpop.f32.mrf.mxu0
  %v124 = vadd.f32 %v40, %v123
  %v125 = vpop.f32.mrf.mxu0
  %v126 = vadd.f32 %v40, %v125
  %127 = vmatmul.bf16.gmra.mxu0 %v59
  %v128 = vpop.f32.mrf.mxu0
  %v129 = vadd.f32 %v40, %v128
  %v130 = vpop.f32.mrf.mxu0
  %v131 = vadd.f32 %v40, %v130
  %132 = vmatmul.bf16.gmra.mxu0 %v60
  %v133 = vpop.f32.mrf.mxu0
  %v134 = vadd.f32 %v40, %v133
  %v135 = vpop.f32.mrf.mxu0
  %v136 = vadd.f32 %v40, %v135
  %137 = vmatmul.bf16.gmra.mxu0 %v61
  %v138 = vpop.f32.mrf.mxu0
  %v139 = vadd.f32 %v40, %v138
  %v140 = vpop.f32.mrf.mxu0
  %v141 = vadd.f32 %v40, %v140
  %142 = vdwg.mxu0
  %143 = vst [vmem:[%s3] sm:$0xff] %v124
  %144 = vst [vmem:[%s3 + $0x8] sm:$0xff] %v126
  %145 = vst [vmem:[%s3 + $0x10] sm:$0xff] %v129
  %146 = vst [vmem:[%s3 + $0x18] sm:$0xff] %v131
  %147 = vst [vmem:[%s3 + $0x20] sm:$0xff] %v134
  %148 = vst [vmem:[%s3 + $0x28] sm:$0xff] %v136
  %149 = vst [vmem:[%s3 + $0x30] sm:$0xff] %v139
  %150 = vst [vmem:[%s3 + $0x38] sm:$0xff] %v141
  // Predicated region
  $region14: #{encoder_decoder_forward.11} parent=0 // pred_check
    _
  $region15: #{encoder_decoder_forward.11} parent=0 // pred_check_branch
    %152 = sbr.rel (0) target = $region17
  $region16: #{encoder_decoder_forward.11} parent=0 // pred_region
    _
  $region17: #{encoder_decoder_forward.11} parent=0 // pred_fallthru
    _
  // Predicated region
  $region18: #{encoder_decoder_forward.11} parent=0 // pred_check
    _
  $region19: #{encoder_decoder_forward.11} parent=0 // pred_check_branch
    %154 = sbr.rel (0) target = $region21
  $region20: #{encoder_decoder_forward.11} parent=0 // pred_region
    _
  $region21: #{encoder_decoder_forward.11} parent=0 // pred_fallthru
    _

// kernel: encoder_decoder_forward.10
$region0: #{encoder_decoder_forward.10}
  #allocation0 [shape = 'u32[]', space=smem, size = 0x4, offset = 0x4, fixed_abs, tag = 'smem constant byte address 0x4 - core index']
  #allocation1 [shape = 'u32[72,128]{1,0:T(1,128)}', space=vmem, size = 0x9000, scoped, tag = 'internal scratch']
  #allocation2 [shape = 'f32[8,128]{1,0:T(8,128)}', space=vmem, size = 0x1000, scoped, tag = 'scratch operand']
  %s0 = inlined_call_operand.vmem [shape: f32[8,8,384], index: 0, kind: input, shape index: {}]
  %s1 = inlined_call_operand.vmem [shape: f32[8,384], index: 1, kind: input, shape index: {}]
  %s2 = inlined_call_operand.vmem [shape: bf16[128,384], index: 2, kind: input, shape index: {}]
  %s3 = inlined_call_operand.vmem [shape: f32[1,384], index: 3, kind: input, shape index: {}]
  %s4 = inlined_call_operand.vmem [shape: f32[8,128], index: 4, kind: input, shape index: {}]
  %s5 = inlined_call_operand.vmem [shape: f32[8,8,128], index: 5, kind: output, shape index: {0}]
  %s6 = inlined_call_operand.vmem [shape: f32[8,128], index: 6, kind: output, shape index: {1}]
  %7 = xla_tuple %s5, %s6
  %s8 = sld [smem:[#allocation0]]
  $region42: #{encoder_decoder_forward.10} parent=0
    _
  %s10 = ssub.s32 1, %s8
  %s11 = scalar_select 0, %s10, %s8
  // Predicated region
  $region2: #{encoder_decoder_forward.10} parent=0 // pred_check
    _
  $region3: #{encoder_decoder_forward.10} parent=0 // pred_check_branch
    %13 = sbr.rel (0) target = $region5
  $region4: #{encoder_decoder_forward.10} parent=0 // pred_region
    _
  $region5: #{encoder_decoder_forward.10} parent=0 // pred_fallthru
    _
  // Predicated region
  $region6: #{encoder_decoder_forward.10} parent=0 // pred_check
    _
  $region7: #{encoder_decoder_forward.10} parent=0 // pred_check_branch
    %15 = sbr.rel (0) target = $region9
  $region8: #{encoder_decoder_forward.10} parent=0 // pred_region
    _
  $region9: #{encoder_decoder_forward.10} parent=0 // pred_fallthru
    _
  // Predicated region
  $region10: #{encoder_decoder_forward.10} parent=0 // pred_check
    _
  $region11: #{encoder_decoder_forward.10} parent=0 // pred_check_branch
    %17 = sbr.rel (0) target = $region13
  $region12: #{encoder_decoder_forward.10} parent=0 // pred_region
    _
  $region13: #{encoder_decoder_forward.10} parent=0 // pred_fallthru
    _
  // Predicated region
  $region14: #{encoder_decoder_forward.10} parent=0 // pred_check
    _
  $region15: #{encoder_decoder_forward.10} parent=0 // pred_check_branch
    %19 = sbr.rel (0) target = $region17
  $region16: #{encoder_decoder_forward.10} parent=0 // pred_region
    _
  $region17: #{encoder_decoder_forward.10} parent=0 // pred_fallthru
    _
  // Predicated region
  $region18: #{encoder_decoder_forward.10} parent=0 // pred_check
    _
  $region19: #{encoder_decoder_forward.10} parent=0 // pred_check_branch
    %21 = sbr.rel (0) target = $region21
  $region20: #{encoder_decoder_forward.10} parent=0 // pred_region
    _
  $region21: #{encoder_decoder_forward.10} parent=0 // pred_fallthru
    _
  %p22 = scmp.eq.s32.totalorder 0, 0
  // Predicated region
  $region22: #{encoder_decoder_forward.10} parent=0 // pred_check
    %p23 = pneg %p22
  $region23: #{encoder_decoder_forward.10} parent=0 // pred_check_branch
    %25 = sbr.rel (%p23) target = $region25
  $region24: #{encoder_decoder_forward.10} parent=0 // pred_region
    %v26 = vld [vmem:[%s4] sm:$0xff]
    %27 = vst [vmem:[#allocation2] sm:$0xff] %v26
  $region25: #{encoder_decoder_forward.10} parent=0 // pred_fallthru
    _
  %v28 = vld [vmem:[%s2] sm:$0xff]
  %v29 = vld [vmem:[%s2 + $0x8] sm:$0xf]
  %v30 = vld [vmem:[%s2 + $0xc] sm:$0xff]
  %v31 = vld [vmem:[%s2 + $0x14] sm:$0xf]
  %v32 = vld [vmem:[%s2 + $0x18] sm:$0xff]
  %v33 = vld [vmem:[%s2 + $0x20] sm:$0xf]
  %v34 = vld [vmem:[%s2 + $0x24] sm:$0xff]
  %v35 = vld [vmem:[%s2 + $0x2c] sm:$0xf]
  %v36 = vld [vmem:[%s2 + $0x30] sm:$0xff]
  %v37 = vld [vmem:[%s2 + $0x38] sm:$0xf]
  %v38 = vld [vmem:[%s2 + $0x3c] sm:$0xff]
  %v39 = vld [vmem:[%s2 + $0x44] sm:$0xf]
  %v40 = vld [vmem:[%s2 + $0x48] sm:$0xff]
  %v41 = vld [vmem:[%s2 + $0x50] sm:$0xf]
  %v42 = vld [vmem:[%s2 + $0x54] sm:$0xff]
  %v43 = vld [vmem:[%s2 + $0x5c] sm:$0xf]
  %v44 = vld [vmem:[%s2 + $0x60] sm:$0xff]
  %v45 = vld [vmem:[%s2 + $0x68] sm:$0xf]
  %v46 = vld [vmem:[%s2 + $0x6c] sm:$0xff]
  %v47 = vld [vmem:[%s2 + $0x74] sm:$0xf]
  %v48 = vld [vmem:[%s2 + $0x78] sm:$0xff]
  %v49 = vld [vmem:[%s2 + $0x80] sm:$0xf]
  %v50 = vld [vmem:[%s2 + $0x84] sm:$0xff]
  %v51 = vld [vmem:[%s2 + $0x8c] sm:$0xf]
  %v52 = vld [vmem:[%s2 + $0x90] sm:$0xff]
  %v53 = vld [vmem:[%s2 + $0x98] sm:$0xf]
  %v54 = vld [vmem:[%s2 + $0x9c] sm:$0xff]
  %v55 = vld [vmem:[%s2 + $0xa4] sm:$0xf]
  %v56 = vld [vmem:[%s2 + $0xa8] sm:$0xff]
  %v57 = vld [vmem:[%s2 + $0xb0] sm:$0xf]
  %v58 = vld [vmem:[%s2 + $0xb4] sm:$0xff]
  %v59 = vld [vmem:[%s2 + $0xbc] sm:$0xf]
  %v60 = vld [vmem:[%s3] sm:$0x7]
  %v61 = vld [vmem:[%s1] sm:$0xff]
  %v62 = vld [vmem:[%s1 + $0x8] sm:$0xff]
  %v63 = vld [vmem:[%s1 + $0x10] sm:$0xff]
  %v64 = vld [vmem:[#allocation2] sm:$0xff]
  %v65 = vpack.c.bf16 %v64, %v64
  %v67 = vperm.slane %v60, 0
  %v68 = vperm.slane %v60, 1
  %v69 = vperm.slane %v60, 2
  %v105 = vunpack.c.l.b16 %v28
  %v106 = vunpack.c.h.b16 %v28
  %v107 = vunpack.c.l.b16 %v29
  %v108 = vunpack.c.l.b16 %v30
  %v109 = vunpack.c.h.b16 %v30
  %v110 = vunpack.c.l.b16 %v31
  %v111 = vunpack.c.l.b16 %v32
  %v112 = vunpack.c.h.b16 %v32
  %v113 = vunpack.c.l.b16 %v33
  %v114 = vunpack.c.l.b16 %v34
  %v115 = vunpack.c.h.b16 %v34
  %v116 = vunpack.c.l.b16 %v35
  %v117 = vunpack.c.l.b16 %v36
  %v118 = vunpack.c.h.b16 %v36
  %v119 = vunpack.c.l.b16 %v37
  %v120 = vunpack.c.l.b16 %v38
  %v121 = vunpack.c.h.b16 %v38
  %v122 = vunpack.c.l.b16 %v39
  %v123 = vunpack.c.l.b16 %v40
  %v124 = vunpack.c.h.b16 %v40
  %v125 = vunpack.c.l.b16 %v41
  %v126 = vunpack.c.l.b16 %v42
  %v127 = vunpack.c.h.b16 %v42
  %v128 = vunpack.c.l.b16 %v43
  %v129 = vunpack.c.l.b16 %v44
  %v130 = vunpack.c.h.b16 %v44
  %v131 = vunpack.c.l.b16 %v45
  %v132 = vunpack.c.l.b16 %v46
  %v133 = vunpack.c.h.b16 %v46
  %v134 = vunpack.c.l.b16 %v47
  %v135 = vunpack.c.l.b16 %v48
  %v136 = vunpack.c.h.b16 %v48
  %v137 = vunpack.c.l.b16 %v49
  %v138 = vunpack.c.l.b16 %v50
  %v139 = vunpack.c.h.b16 %v50
  %v140 = vunpack.c.l.b16 %v51
  %v141 = vunpack.c.l.b16 %v52
  %v142 = vunpack.c.h.b16 %v52
  %v143 = vunpack.c.l.b16 %v53
  %v144 = vunpack.c.l.b16 %v54
  %v145 = vunpack.c.h.b16 %v54
  %v146 = vunpack.c.l.b16 %v55
  %v147 = vunpack.c.l.b16 %v56
  %v148 = vunpack.c.h.b16 %v56
  %v149 = vunpack.c.l.b16 %v57
  %v150 = vunpack.c.l.b16 %v58
  %v151 = vunpack.c.h.b16 %v58
  %v152 = vunpack.c.l.b16 %v59
  %v153 = vpack.c.b16 %v108, %v105
  %v154 = vpack.c.b16 %v109, %v106
  %v155 = vpack.c.b16 %v110, %v107
  %v156 = vpack.c.b16 %v114, %v111
  %v157 = vpack.c.b16 %v115, %v112
  %v158 = vpack.c.b16 %v116, %v113
  %v159 = vpack.c.b16 %v120, %v117
  %v160 = vpack.c.b16 %v121, %v118
  %v161 = vpack.c.b16 %v122, %v119
  %v162 = vpack.c.b16 %v126, %v123
  %v163 = vpack.c.b16 %v127, %v124
  %v164 = vpack.c.b16 %v128, %v125
  %v165 = vpack.c.b16 %v132, %v129
  %v166 = vpack.c.b16 %v133, %v130
  %v167 = vpack.c.b16 %v134, %v131
  %v168 = vpack.c.b16 %v138, %v135
  %v169 = vpack.c.b16 %v139, %v136
  %v170 = vpack.c.b16 %v140, %v137
  %v171 = vpack.c.b16 %v144, %v141
  %v172 = vpack.c.b16 %v145, %v142
  %v173 = vpack.c.b16 %v146, %v143
  %v174 = vpack.c.b16 %v150, %v147
  %v175 = vpack.c.b16 %v151, %v148
  %v176 = vpack.c.b16 %v152, %v149
  %201 = vmatpush.bf16.msra.mxu0 %v174
  %202 = vmatpush.bf16.msra.mxu0 %v171
  %203 = vmatpush.bf16.msra.mxu0 %v168
  %204 = vmatpush.bf16.msra.mxu0 %v165
  %205 = vmatpush.bf16.msra.mxu0 %v162
  %206 = vmatpush.bf16.msra.mxu0 %v159
  %207 = vmatpush.bf16.msra.mxu0 %v156
  %208 = vmatpush.bf16.msra.mxu0 %v153
  %209 = vmatmul.bf16.gmra.mxu0 %v65
  %v210 = vpop.f32.mrf.mxu0
  %v211 = vadd.f32 %v67, %v210
  %v212 = vpop.f32.mrf.mxu0
  %213 = vdwg.mxu0
  %214 = vmatpush.bf16.msra.mxu0 %v175
  %215 = vmatpush.bf16.msra.mxu0 %v172
  %216 = vmatpush.bf16.msra.mxu0 %v169
  %217 = vmatpush.bf16.msra.mxu0 %v166
  %218 = vmatpush.bf16.msra.mxu0 %v163
  %219 = vmatpush.bf16.msra.mxu0 %v160
  %220 = vmatpush.bf16.msra.mxu0 %v157
  %221 = vmatpush.bf16.msra.mxu0 %v154
  %222 = vmatmul.bf16.gmra.mxu0 %v65
  %v223 = vpop.f32.mrf.mxu0
  %v224 = vadd.f32 %v68, %v223
  %v225 = vpop.f32.mrf.mxu0
  %226 = vdwg.mxu0
  %227 = vmatpush.bf16.msra.mxu0 %v176
  %228 = vmatpush.bf16.msra.mxu0 %v173
  %229 = vmatpush.bf16.msra.mxu0 %v170
  %230 = vmatpush.bf16.msra.mxu0 %v167
  %231 = vmatpush.bf16.msra.mxu0 %v164
  %232 = vmatpush.bf16.msra.mxu0 %v161
  %233 = vmatpush.bf16.msra.mxu0 %v158
  %234 = vmatpush.bf16.msra.mxu0 %v155
  %235 = vmatmul.bf16.gmra.mxu0 %v65
  %v236 = vpop.f32.mrf.mxu0
  %v237 = vadd.f32 %v69, %v236
  %v238 = vpop.f32.mrf.mxu0
  %239 = vdwg.mxu0
  %v240 = vld [vmem:[%s0] sm:$0xff]
  %v241 = vld [vmem:[%s0 + $0x8] sm:$0xff]
  %v242 = vld [vmem:[%s0 + $0x10] sm:$0xff]
  %v243 = vadd.f32 %v240, %v61
  %v244 = vadd.f32 %v241, %v62
  %v245 = vadd.f32 %v242, %v63
  %v246 = vadd.f32 %v243, %v211
  %v247 = vxor.u32 %v246, 2147483648
  %v248 = vmul.f32 %v247, 1.442695
  %v249 = vpow.pop %v248
  %v250 = vadd.f32 %v249, 1.0
  %v251 = vrcp.pop %v250
  %v252 = vmul.f32 %v250, %v251
  %v253 = vsub.f32 1.0, %v252
  %v254 = vmul.f32 %v251, %v253
  %v255 = vadd.f32 %v251, %v254
  %vm256 = vweird.f32 %v250
  %vm257 = vweird.f32 %v251
  %vm258 = vmor %vm256, %vm257
  %v259 = vsel %vm258, %v251, %v255
  %v260 = vand.u32 2147483647, %v250
  %vm261 = vcmp.eq.f32.partialorder %v260, 8.507059e+37
  %v262 = vand.u32 %v250, 2147483648
  %v263 = vor.u32 1.1754944e-38, %v262
  %v264 = vsel %vm261, %v263, %v259
  %v265 = vmul.f32 1.0, %v264
  %v266 = vadd.f32 %v244, %v224
  %v267 = vxor.u32 %v266, 2147483648
  %v268 = vmul.f32 %v267, 1.442695
  %v269 = vpow.pop %v268
  %v270 = vadd.f32 %v269, 1.0
  %v271 = vrcp.pop %v270
  %v272 = vmul.f32 %v270, %v271
  %v273 = vsub.f32 1.0, %v272
  %v274 = vmul.f32 %v271, %v273
  %v275 = vadd.f32 %v271, %v274
  %vm276 = vweird.f32 %v270
  %vm277 = vweird.f32 %v271
  %vm278 = vmor %vm276, %vm277
  %v279 = vsel %vm278, %v271, %v275
  %v280 = vand.u32 2147483647, %v270
  %vm281 = vcmp.eq.f32.partialorder %v280, 8.507059e+37
  %v282 = vand.u32 %v270, 2147483648
  %v283 = vor.u32 1.1754944e-38, %v282
  %v284 = vsel %vm281, %v283, %v279
  %v285 = vmul.f32 1.0, %v284
  %v286 = vmul.f32 %v265, %v237
  %v287 = vadd.f32 %v245, %v286
  %v288 = vtanh.pop %v287
  %v289 = vsub.f32 1.0, %v285
  %v290 = vmul.f32 %v289, %v288
  %v291 = vmul.f32 %v285, %v64
  %v292 = vadd.f32 %v290, %v291
  %293 = vst [vmem:[%s5] sm:$0xff] %v292
  %v294 = vpack.c.bf16 %v292, %v292
  %295 = vmatpush.bf16.msra.mxu0 %v174
  %296 = vmatpush.bf16.msra.mxu0 %v171
  %297 = vmatpush.bf16.msra.mxu0 %v168
  %298 = vmatpush.bf16.msra.mxu0 %v165
  %299 = vmatpush.bf16.msra.mxu0 %v162
  %300 = vmatpush.bf16.msra.mxu0 %v159
  %301 = vmatpush.bf16.msra.mxu0 %v156
  %302 = vmatpush.bf16.msra.mxu0 %v153
  %303 = vmatmul.bf16.gmra.mxu0 %v294
  %v304 = vpop.f32.mrf.mxu0
  %v305 = vadd.f32 %v67, %v304
  %v306 = vpop.f32.mrf.mxu0
  %307 = vdwg.mxu0
  %308 = vmatpush.bf16.msra.mxu0 %v175
  %309 = vmatpush.bf16.msra.mxu0 %v172
  %310 = vmatpush.bf16.msra.mxu0 %v169
  %311 = vmatpush.bf16.msra.mxu0 %v166
  %312 = vmatpush.bf16.msra.mxu0 %v163
  %313 = vmatpush.bf16.msra.mxu0 %v160
  %314 = vmatpush.bf16.msra.mxu0 %v157
  %315 = vmatpush.bf16.msra.mxu0 %v154
  %316 = vmatmul.bf16.gmra.mxu0 %v294
  %v317 = vpop.f32.mrf.mxu0
  %v318 = vadd.f32 %v68, %v317
  %v319 = vpop.f32.mrf.mxu0
  %320 = vdwg.mxu0
  %321 = vmatpush.bf16.msra.mxu0 %v176
  %322 = vmatpush.bf16.msra.mxu0 %v173
  %323 = vmatpush.bf16.msra.mxu0 %v170
  %324 = vmatpush.bf16.msra.mxu0 %v167
  %325 = vmatpush.bf16.msra.mxu0 %v164
  %326 = vmatpush.bf16.msra.mxu0 %v161
  %327 = vmatpush.bf16.msra.mxu0 %v158
  %328 = vmatpush.bf16.msra.mxu0 %v155
  %329 = vmatmul.bf16.gmra.mxu0 %v294
  %v330 = vpop.f32.mrf.mxu0
  %v331 = vadd.f32 %v69, %v330
  %v332 = vpop.f32.mrf.mxu0
  %333 = vdwg.mxu0
  %s334 = scalar_lea.vmem %s0, 24
  %v335 = vld [vmem:[%s334] sm:$0xff]
  %v336 = vld [vmem:[%s334 + $0x8] sm:$0xff]
  %v337 = vld [vmem:[%s334 + $0x10] sm:$0xff]
  %v338 = vadd.f32 %v335, %v61
  %v339 = vadd.f32 %v336, %v62
  %v340 = vadd.f32 %v337, %v63
  %v341 = vadd.f32 %v338, %v305
  %v342 = vxor.u32 %v341, 2147483648
  %v343 = vmul.f32 %v342, 1.442695
  %v344 = vpow.pop %v343
  %v345 = vadd.f32 %v344, 1.0
  %v346 = vrcp.pop %v345
  %v347 = vmul.f32 %v345, %v346
  %v348 = vsub.f32 1.0, %v347
  %v349 = vmul.f32 %v346, %v348
  %v350 = vadd.f32 %v346, %v349
  %vm351 = vweird.f32 %v345
  %vm352 = vweird.f32 %v346
  %vm353 = vmor %vm351, %vm352
  %v354 = vsel %vm353, %v346, %v350
  %v355 = vand.u32 2147483647, %v345
  %vm356 = vcmp.eq.f32.partialorder %v355, 8.507059e+37
  %v357 = vand.u32 %v345, 2147483648
  %v358 = vor.u32 1.1754944e-38, %v357
  %v359 = vsel %vm356, %v358, %v354
  %v360 = vmul.f32 1.0, %v359
  %v361 = vadd.f32 %v339, %v318
  %v362 = vxor.u32 %v361, 2147483648
  %v363 = vmul.f32 %v362, 1.442695
  %v364 = vpow.pop %v363
  %v365 = vadd.f32 %v364, 1.0
  %v366 = vrcp.pop %v365
  %v367 = vmul.f32 %v365, %v366
  %v368 = vsub.f32 1.0, %v367
  %v369 = vmul.f32 %v366, %v368
  %v370 = vadd.f32 %v366, %v369
  %vm371 = vweird.f32 %v365
  %vm372 = vweird.f32 %v366
  %vm373 = vmor %vm371, %vm372
  %v374 = vsel %vm373, %v366, %v370
  %v375 = vand.u32 2147483647, %v365
  %vm376 = vcmp.eq.f32.partialorder %v375, 8.507059e+37
  %v377 = vand.u32 %v365, 2147483648
  %v378 = vor.u32 1.1754944e-38, %v377
  %v379 = vsel %vm376, %v378, %v374
  %v380 = vmul.f32 1.0, %v379
  %v381 = vmul.f32 %v360, %v331
  %v382 = vadd.f32 %v340, %v381
  %v383 = vtanh.pop %v382
  %v384 = vsub.f32 1.0, %v380
  %v385 = vmul.f32 %v384, %v383
  %v386 = vmul.f32 %v380, %v292
  %v387 = vadd.f32 %v385, %v386
  %s388 = scalar_lea.vmem %s5, 8
  %389 = vst [vmem:[%s388] sm:$0xff] %v387
  %v390 = vpack.c.bf16 %v387, %v387
  %391 = vmatpush.bf16.msra.mxu0 %v174
  %392 = vmatpush.bf16.msra.mxu0 %v171
  %393 = vmatpush.bf16.msra.mxu0 %v168
  %394 = vmatpush.bf16.msra.mxu0 %v165
  %395 = vmatpush.bf16.msra.mxu0 %v162
  %396 = vmatpush.bf16.msra.mxu0 %v159
  %397 = vmatpush.bf16.msra.mxu0 %v156
  %398 = vmatpush.bf16.msra.mxu0 %v153
  %399 = vmatmul.bf16.gmra.mxu0 %v390
  %v400 = vpop.f32.mrf.mxu0
  %v401 = vadd.f32 %v67, %v400
  %v402 = vpop.f32.mrf.mxu0
  %403 = vdwg.mxu0
  %404 = vmatpush.bf16.msra.mxu0 %v175
  %405 = vmatpush.bf16.msra.mxu0 %v172
  %406 = vmatpush.bf16.msra.mxu0 %v169
  %407 = vmatpush.bf16.msra.mxu0 %v166
  %408 = vmatpush.bf16.msra.mxu0 %v163
  %409 = vmatpush.bf16.msra.mxu0 %v160
  %410 = vmatpush.bf16.msra.mxu0 %v157
  %411 = vmatpush.bf16.msra.mxu0 %v154
  %412 = vmatmul.bf16.gmra.mxu0 %v390
  %v413 = vpop.f32.mrf.mxu0
  %v414 = vadd.f32 %v68, %v413
  %v415 = vpop.f32.mrf.mxu0
  %416 = vdwg.mxu0
  %417 = vmatpush.bf16.msra.mxu0 %v176
  %418 = vmatpush.bf16.msra.mxu0 %v173
  %419 = vmatpush.bf16.msra.mxu0 %v170
  %420 = vmatpush.bf16.msra.mxu0 %v167
  %421 = vmatpush.bf16.msra.mxu0 %v164
  %422 = vmatpush.bf16.msra.mxu0 %v161
  %423 = vmatpush.bf16.msra.mxu0 %v158
  %424 = vmatpush.bf16.msra.mxu0 %v155
  %425 = vmatmul.bf16.gmra.mxu0 %v390
  %v426 = vpop.f32.mrf.mxu0
  %v427 = vadd.f32 %v69, %v426
  %v428 = vpop.f32.mrf.mxu0
  %429 = vdwg.mxu0
  %s430 = scalar_lea.vmem %s0, 48
  %v431 = vld [vmem:[%s430] sm:$0xff]
  %v432 = vld [vmem:[%s430 + $0x8] sm:$0xff]
  %v433 = vld [vmem:[%s430 + $0x10] sm:$0xff]
  %v434 = vadd.f32 %v431, %v61
  %v435 = vadd.f32 %v432, %v62
  %v436 = vadd.f32 %v433, %v63
  %v437 = vadd.f32 %v434, %v401
  %v438 = vxor.u32 %v437, 2147483648
  %v439 = vmul.f32 %v438, 1.442695
  %v440 = vpow.pop %v439
  %v441 = vadd.f32 %v440, 1.0
  %v442 = vrcp.pop %v441
  %v443 = vmul.f32 %v441, %v442
  %v444 = vsub.f32 1.0, %v443
  %v445 = vmul.f32 %v442, %v444
  %v446 = vadd.f32 %v442, %v445
  %vm447 = vweird.f32 %v441
  %vm448 = vweird.f32 %v442
  %vm449 = vmor %vm447, %vm448
  %v450 = vsel %vm449, %v442, %v446
  %v451 = vand.u32 2147483647, %v441
  %vm452 = vcmp.eq.f32.partialorder %v451, 8.507059e+37
  %v453 = vand.u32 %v441, 2147483648
  %v454 = vor.u32 1.1754944e-38, %v453
  %v455 = vsel %vm452, %v454, %v450
  %v456 = vmul.f32 1.0, %v455
  %v457 = vadd.f32 %v435, %v414
  %v458 = vxor.u32 %v457, 2147483648
  %v459 = vmul.f32 %v458, 1.442695
  %v460 = vpow.pop %v459
  %v461 = vadd.f32 %v460, 1.0
  %v462 = vrcp.pop %v461
  %v463 = vmul.f32 %v461, %v462
  %v464 = vsub.f32 1.0, %v463
  %v465 = vmul.f32 %v462, %v464
  %v466 = vadd.f32 %v462, %v465
  %vm467 = vweird.f32 %v461
  %vm468 = vweird.f32 %v462
  %vm469 = vmor %vm467, %vm468
  %v470 = vsel %vm469, %v462, %v466
  %v471 = vand.u32 2147483647, %v461
  %vm472 = vcmp.eq.f32.partialorder %v471, 8.507059e+37
  %v473 = vand.u32 %v461, 2147483648
  %v474 = vor.u32 1.1754944e-38, %v473
  %v475 = vsel %vm472, %v474, %v470
  %v476 = vmul.f32 1.0, %v475
  %v477 = vmul.f32 %v456, %v427
  %v478 = vadd.f32 %v436, %v477
  %v479 = vtanh.pop %v478
  %v480 = vsub.f32 1.0, %v476
  %v481 = vmul.f32 %v480, %v479
  %v482 = vmul.f32 %v476, %v387
  %v483 = vadd.f32 %v481, %v482
  %s484 = scalar_lea.vmem %s5, 16
  %485 = vst [vmem:[%s484] sm:$0xff] %v483
  %v486 = vpack.c.bf16 %v483, %v483
  %487 = vmatpush.bf16.msra.mxu0 %v174
  %488 = vmatpush.bf16.msra.mxu0 %v171
  %489 = vmatpush.bf16.msra.mxu0 %v168
  %490 = vmatpush.bf16.msra.mxu0 %v165
  %491 = vmatpush.bf16.msra.mxu0 %v162
  %492 = vmatpush.bf16.msra.mxu0 %v159
  %493 = vmatpush.bf16.msra.mxu0 %v156
  %494 = vmatpush.bf16.msra.mxu0 %v153
  %495 = vmatmul.bf16.gmra.mxu0 %v486
  %v496 = vpop.f32.mrf.mxu0
  %v497 = vadd.f32 %v67, %v496
  %v498 = vpop.f32.mrf.mxu0
  %499 = vdwg.mxu0
  %500 = vmatpush.bf16.msra.mxu0 %v175
  %501 = vmatpush.bf16.msra.mxu0 %v172
  %502 = vmatpush.bf16.msra.mxu0 %v169
  %503 = vmatpush.bf16.msra.mxu0 %v166
  %504 = vmatpush.bf16.msra.mxu0 %v163
  %505 = vmatpush.bf16.msra.mxu0 %v160
  %506 = vmatpush.bf16.msra.mxu0 %v157
  %507 = vmatpush.bf16.msra.mxu0 %v154
  %508 = vmatmul.bf16.gmra.mxu0 %v486
  %v509 = vpop.f32.mrf.mxu0
  %v510 = vadd.f32 %v68, %v509
  %v511 = vpop.f32.mrf.mxu0
  %512 = vdwg.mxu0
  %513 = vmatpush.bf16.msra.mxu0 %v176
  %514 = vmatpush.bf16.msra.mxu0 %v173
  %515 = vmatpush.bf16.msra.mxu0 %v170
  %516 = vmatpush.bf16.msra.mxu0 %v167
  %517 = vmatpush.bf16.msra.mxu0 %v164
  %518 = vmatpush.bf16.msra.mxu0 %v161
  %519 = vmatpush.bf16.msra.mxu0 %v158
  %520 = vmatpush.bf16.msra.mxu0 %v155
  %521 = vmatmul.bf16.gmra.mxu0 %v486
  %v522 = vpop.f32.mrf.mxu0
  %v523 = vadd.f32 %v69, %v522
  %v524 = vpop.f32.mrf.mxu0
  %525 = vdwg.mxu0
  %s526 = scalar_lea.vmem %s0, 72
  %v527 = vld [vmem:[%s526] sm:$0xff]
  %v528 = vld [vmem:[%s526 + $0x8] sm:$0xff]
  %v529 = vld [vmem:[%s526 + $0x10] sm:$0xff]
  %v530 = vadd.f32 %v527, %v61
  %v531 = vadd.f32 %v528, %v62
  %v532 = vadd.f32 %v529, %v63
  %v533 = vadd.f32 %v530, %v497
  %v534 = vxor.u32 %v533, 2147483648
  %v535 = vmul.f32 %v534, 1.442695
  %v536 = vpow.pop %v535
  %v537 = vadd.f32 %v536, 1.0
  %v538 = vrcp.pop %v537
  %v539 = vmul.f32 %v537, %v538
  %v540 = vsub.f32 1.0, %v539
  %v541 = vmul.f32 %v538, %v540
  %v542 = vadd.f32 %v538, %v541
  %vm543 = vweird.f32 %v537
  %vm544 = vweird.f32 %v538
  %vm545 = vmor %vm543, %vm544
  %v546 = vsel %vm545, %v538, %v542
  %v547 = vand.u32 2147483647, %v537
  %vm548 = vcmp.eq.f32.partialorder %v547, 8.507059e+37
  %v549 = vand.u32 %v537, 2147483648
  %v550 = vor.u32 1.1754944e-38, %v549
  %v551 = vsel %vm548, %v550, %v546
  %v552 = vmul.f32 1.0, %v551
  %v553 = vadd.f32 %v531, %v510
  %v554 = vxor.u32 %v553, 2147483648
  %v555 = vmul.f32 %v554, 1.442695
  %v556 = vpow.pop %v555
  %v557 = vadd.f32 %v556, 1.0
  %v558 = vrcp.pop %v557
  %v559 = vmul.f32 %v557, %v558
  %v560 = vsub.f32 1.0, %v559
  %v561 = vmul.f32 %v558, %v560
  %v562 = vadd.f32 %v558, %v561
  %vm563 = vweird.f32 %v557
  %vm564 = vweird.f32 %v558
  %vm565 = vmor %vm563, %vm564
  %v566 = vsel %vm565, %v558, %v562
  %v567 = vand.u32 2147483647, %v557
  %vm568 = vcmp.eq.f32.partialorder %v567, 8.507059e+37
  %v569 = vand.u32 %v557, 2147483648
  %v570 = vor.u32 1.1754944e-38, %v569
  %v571 = vsel %vm568, %v570, %v566
  %v572 = vmul.f32 1.0, %v571
  %v573 = vmul.f32 %v552, %v523
  %v574 = vadd.f32 %v532, %v573
  %v575 = vtanh.pop %v574
  %v576 = vsub.f32 1.0, %v572
  %v577 = vmul.f32 %v576, %v575
  %v578 = vmul.f32 %v572, %v483
  %v579 = vadd.f32 %v577, %v578
  %s580 = scalar_lea.vmem %s5, 24
  %581 = vst [vmem:[%s580] sm:$0xff] %v579
  %v582 = vpack.c.bf16 %v579, %v579
  %583 = vmatpush.bf16.msra.mxu0 %v174
  %584 = vmatpush.bf16.msra.mxu0 %v171
  %585 = vmatpush.bf16.msra.mxu0 %v168
  %586 = vmatpush.bf16.msra.mxu0 %v165
  %587 = vmatpush.bf16.msra.mxu0 %v162
  %588 = vmatpush.bf16.msra.mxu0 %v159
  %589 = vmatpush.bf16.msra.mxu0 %v156
  %590 = vmatpush.bf16.msra.mxu0 %v153
  %591 = vmatmul.bf16.gmra.mxu0 %v582
  %v592 = vpop.f32.mrf.mxu0
  %v593 = vadd.f32 %v67, %v592
  %v594 = vpop.f32.mrf.mxu0
  %595 = vdwg.mxu0
  %596 = vmatpush.bf16.msra.mxu0 %v175
  %597 = vmatpush.bf16.msra.mxu0 %v172
  %598 = vmatpush.bf16.msra.mxu0 %v169
  %599 = vmatpush.bf16.msra.mxu0 %v166
  %600 = vmatpush.bf16.msra.mxu0 %v163
  %601 = vmatpush.bf16.msra.mxu0 %v160
  %602 = vmatpush.bf16.msra.mxu0 %v157
  %603 = vmatpush.bf16.msra.mxu0 %v154
  %604 = vmatmul.bf16.gmra.mxu0 %v582
  %v605 = vpop.f32.mrf.mxu0
  %v606 = vadd.f32 %v68, %v605
  %v607 = vpop.f32.mrf.mxu0
  %608 = vdwg.mxu0
  %609 = vmatpush.bf16.msra.mxu0 %v176
  %610 = vmatpush.bf16.msra.mxu0 %v173
  %611 = vmatpush.bf16.msra.mxu0 %v170
  %612 = vmatpush.bf16.msra.mxu0 %v167
  %613 = vmatpush.bf16.msra.mxu0 %v164
  %614 = vmatpush.bf16.msra.mxu0 %v161
  %615 = vmatpush.bf16.msra.mxu0 %v158
  %616 = vmatpush.bf16.msra.mxu0 %v155
  %617 = vmatmul.bf16.gmra.mxu0 %v582
  %v618 = vpop.f32.mrf.mxu0
  %v619 = vadd.f32 %v69, %v618
  %v620 = vpop.f32.mrf.mxu0
  %621 = vdwg.mxu0
  %s622 = scalar_lea.vmem %s0, 96
  %v623 = vld [vmem:[%s622] sm:$0xff]
  %v624 = vld [vmem:[%s622 + $0x8] sm:$0xff]
  %v625 = vld [vmem:[%s622 + $0x10] sm:$0xff]
  %v626 = vadd.f32 %v623, %v61
  %v627 = vadd.f32 %v624, %v62
  %v628 = vadd.f32 %v625, %v63
  %v629 = vadd.f32 %v626, %v593
  %v630 = vxor.u32 %v629, 2147483648
  %v631 = vmul.f32 %v630, 1.442695
  %v632 = vpow.pop %v631
  %v633 = vadd.f32 %v632, 1.0
  %v634 = vrcp.pop %v633
  %v635 = vmul.f32 %v633, %v634
  %v636 = vsub.f32 1.0, %v635
  %v637 = vmul.f32 %v634, %v636
  %v638 = vadd.f32 %v634, %v637
  %vm639 = vweird.f32 %v633
  %vm640 = vweird.f32 %v634
  %vm641 = vmor %vm639, %vm640
  %v642 = vsel %vm641, %v634, %v638
  %v643 = vand.u32 2147483647, %v633
  %vm644 = vcmp.eq.f32.partialorder %v643, 8.507059e+37
  %v645 = vand.u32 %v633, 2147483648
  %v646 = vor.u32 1.1754944e-38, %v645
  %v647 = vsel %vm644, %v646, %v642
  %v648 = vmul.f32 1.0, %v647
  %v649 = vadd.f32 %v627, %v606
  %v650 = vxor.u32 %v649, 2147483648
  %v651 = vmul.f32 %v650, 1.442695
  %v652 = vpow.pop %v651
  %v653 = vadd.f32 %v652, 1.0
  %v654 = vrcp.pop %v653
  %v655 = vmul.f32 %v653, %v654
  %v656 = vsub.f32 1.0, %v655
  %v657 = vmul.f32 %v654, %v656
  %v658 = vadd.f32 %v654, %v657
  %vm659 = vweird.f32 %v653
  %vm660 = vweird.f32 %v654
  %vm661 = vmor %vm659, %vm660
  %v662 = vsel %vm661, %v654, %v658
  %v663 = vand.u32 2147483647, %v653
  %vm664 = vcmp.eq.f32.partialorder %v663, 8.507059e+37
  %v665 = vand.u32 %v653, 2147483648
  %v666 = vor.u32 1.1754944e-38, %v665
  %v667 = vsel %vm664, %v666, %v662
  %v668 = vmul.f32 1.0, %v667
  %v669 = vmul.f32 %v648, %v619
  %v670 = vadd.f32 %v628, %v669
  %v671 = vtanh.pop %v670
  %v672 = vsub.f32 1.0, %v668
  %v673 = vmul.f32 %v672, %v671
  %v674 = vmul.f32 %v668, %v579
  %v675 = vadd.f32 %v673, %v674
  %s676 = scalar_lea.vmem %s5, 32
  %677 = vst [vmem:[%s676] sm:$0xff] %v675
  %v678 = vpack.c.bf16 %v675, %v675
  %679 = vmatpush.bf16.msra.mxu0 %v174
  %680 = vmatpush.bf16.msra.mxu0 %v171
  %681 = vmatpush.bf16.msra.mxu0 %v168
  %682 = vmatpush.bf16.msra.mxu0 %v165
  %683 = vmatpush.bf16.msra.mxu0 %v162
  %684 = vmatpush.bf16.msra.mxu0 %v159
  %685 = vmatpush.bf16.msra.mxu0 %v156
  %686 = vmatpush.bf16.msra.mxu0 %v153
  %687 = vmatmul.bf16.gmra.mxu0 %v678
  %v688 = vpop.f32.mrf.mxu0
  %v689 = vadd.f32 %v67, %v688
  %v690 = vpop.f32.mrf.mxu0
  %691 = vdwg.mxu0
  %692 = vmatpush.bf16.msra.mxu0 %v175
  %693 = vmatpush.bf16.msra.mxu0 %v172
  %694 = vmatpush.bf16.msra.mxu0 %v169
  %695 = vmatpush.bf16.msra.mxu0 %v166
  %696 = vmatpush.bf16.msra.mxu0 %v163
  %697 = vmatpush.bf16.msra.mxu0 %v160
  %698 = vmatpush.bf16.msra.mxu0 %v157
  %699 = vmatpush.bf16.msra.mxu0 %v154
  %700 = vmatmul.bf16.gmra.mxu0 %v678
  %v701 = vpop.f32.mrf.mxu0
  %v702 = vadd.f32 %v68, %v701
  %v703 = vpop.f32.mrf.mxu0
  %704 = vdwg.mxu0
  %705 = vmatpush.bf16.msra.mxu0 %v176
  %706 = vmatpush.bf16.msra.mxu0 %v173
  %707 = vmatpush.bf16.msra.mxu0 %v170
  %708 = vmatpush.bf16.msra.mxu0 %v167
  %709 = vmatpush.bf16.msra.mxu0 %v164
  %710 = vmatpush.bf16.msra.mxu0 %v161
  %711 = vmatpush.bf16.msra.mxu0 %v158
  %712 = vmatpush.bf16.msra.mxu0 %v155
  %713 = vmatmul.bf16.gmra.mxu0 %v678
  %v714 = vpop.f32.mrf.mxu0
  %v715 = vadd.f32 %v69, %v714
  %v716 = vpop.f32.mrf.mxu0
  %717 = vdwg.mxu0
  %s718 = scalar_lea.vmem %s0, 120
  %v719 = vld [vmem:[%s718] sm:$0xff]
  %v720 = vld [vmem:[%s718 + $0x8] sm:$0xff]
  %v721 = vld [vmem:[%s718 + $0x10] sm:$0xff]
  %v722 = vadd.f32 %v719, %v61
  %v723 = vadd.f32 %v720, %v62
  %v724 = vadd.f32 %v721, %v63
  %v725 = vadd.f32 %v722, %v689
  %v726 = vxor.u32 %v725, 2147483648
  %v727 = vmul.f32 %v726, 1.442695
  %v728 = vpow.pop %v727
  %v729 = vadd.f32 %v728, 1.0
  %v730 = vrcp.pop %v729
  %v731 = vmul.f32 %v729, %v730
  %v732 = vsub.f32 1.0, %v731
  %v733 = vmul.f32 %v730, %v732
  %v734 = vadd.f32 %v730, %v733
  %vm735 = vweird.f32 %v729
  %vm736 = vweird.f32 %v730
  %vm737 = vmor %vm735, %vm736
  %v738 = vsel %vm737, %v730, %v734
  %v739 = vand.u32 2147483647, %v729
  %vm740 = vcmp.eq.f32.partialorder %v739, 8.507059e+37
  %v741 = vand.u32 %v729, 2147483648
  %v742 = vor.u32 1.1754944e-38, %v741
  %v743 = vsel %vm740, %v742, %v738
  %v744 = vmul.f32 1.0, %v743
  %v745 = vadd.f32 %v723, %v702
  %v746 = vxor.u32 %v745, 2147483648
  %v747 = vmul.f32 %v746, 1.442695
  %v748 = vpow.pop %v747
  %v749 = vadd.f32 %v748, 1.0
  %v750 = vrcp.pop %v749
  %v751 = vmul.f32 %v749, %v750
  %v752 = vsub.f32 1.0, %v751
  %v753 = vmul.f32 %v750, %v752
  %v754 = vadd.f32 %v750, %v753
  %vm755 = vweird.f32 %v749
  %vm756 = vweird.f32 %v750
  %vm757 = vmor %vm755, %vm756
  %v758 = vsel %vm757, %v750, %v754
  %v759 = vand.u32 2147483647, %v749
  %vm760 = vcmp.eq.f32.partialorder %v759, 8.507059e+37
  %v761 = vand.u32 %v749, 2147483648
  %v762 = vor.u32 1.1754944e-38, %v761
  %v763 = vsel %vm760, %v762, %v758
  %v764 = vmul.f32 1.0, %v763
  %v765 = vmul.f32 %v744, %v715
  %v766 = vadd.f32 %v724, %v765
  %v767 = vtanh.pop %v766
  %v768 = vsub.f32 1.0, %v764
  %v769 = vmul.f32 %v768, %v767
  %v770 = vmul.f32 %v764, %v675
  %v771 = vadd.f32 %v769, %v770
  %s772 = scalar_lea.vmem %s5, 40
  %773 = vst [vmem:[%s772] sm:$0xff] %v771
  %v774 = vpack.c.bf16 %v771, %v771
  %775 = vmatpush.bf16.msra.mxu0 %v174
  %776 = vmatpush.bf16.msra.mxu0 %v171
  %777 = vmatpush.bf16.msra.mxu0 %v168
  %778 = vmatpush.bf16.msra.mxu0 %v165
  %779 = vmatpush.bf16.msra.mxu0 %v162
  %780 = vmatpush.bf16.msra.mxu0 %v159
  %781 = vmatpush.bf16.msra.mxu0 %v156
  %782 = vmatpush.bf16.msra.mxu0 %v153
  %783 = vmatmul.bf16.gmra.mxu0 %v774
  %v784 = vpop.f32.mrf.mxu0
  %v785 = vadd.f32 %v67, %v784
  %v786 = vpop.f32.mrf.mxu0
  %787 = vdwg.mxu0
  %788 = vmatpush.bf16.msra.mxu0 %v175
  %789 = vmatpush.bf16.msra.mxu0 %v172
  %790 = vmatpush.bf16.msra.mxu0 %v169
  %791 = vmatpush.bf16.msra.mxu0 %v166
  %792 = vmatpush.bf16.msra.mxu0 %v163
  %793 = vmatpush.bf16.msra.mxu0 %v160
  %794 = vmatpush.bf16.msra.mxu0 %v157
  %795 = vmatpush.bf16.msra.mxu0 %v154
  %796 = vmatmul.bf16.gmra.mxu0 %v774
  %v797 = vpop.f32.mrf.mxu0
  %v798 = vadd.f32 %v68, %v797
  %v799 = vpop.f32.mrf.mxu0
  %800 = vdwg.mxu0
  %801 = vmatpush.bf16.msra.mxu0 %v176
  %802 = vmatpush.bf16.msra.mxu0 %v173
  %803 = vmatpush.bf16.msra.mxu0 %v170
  %804 = vmatpush.bf16.msra.mxu0 %v167
  %805 = vmatpush.bf16.msra.mxu0 %v164
  %806 = vmatpush.bf16.msra.mxu0 %v161
  %807 = vmatpush.bf16.msra.mxu0 %v158
  %808 = vmatpush.bf16.msra.mxu0 %v155
  %809 = vmatmul.bf16.gmra.mxu0 %v774
  %v810 = vpop.f32.mrf.mxu0
  %v811 = vadd.f32 %v69, %v810
  %v812 = vpop.f32.mrf.mxu0
  %813 = vdwg.mxu0
  %s814 = scalar_lea.vmem %s0, 144
  %v815 = vld [vmem:[%s814] sm:$0xff]
  %v816 = vld [vmem:[%s814 + $0x8] sm:$0xff]
  %v817 = vld [vmem:[%s814 + $0x10] sm:$0xff]
  %v818 = vadd.f32 %v815, %v61
  %v819 = vadd.f32 %v816, %v62
  %v820 = vadd.f32 %v817, %v63
  %v821 = vadd.f32 %v818, %v785
  %v822 = vxor.u32 %v821, 2147483648
  %v823 = vmul.f32 %v822, 1.442695
  %v824 = vpow.pop %v823
  %v825 = vadd.f32 %v824, 1.0
  %v826 = vrcp.pop %v825
  %v827 = vmul.f32 %v825, %v826
  %v828 = vsub.f32 1.0, %v827
  %v829 = vmul.f32 %v826, %v828
  %v830 = vadd.f32 %v826, %v829
  %vm831 = vweird.f32 %v825
  %vm832 = vweird.f32 %v826
  %vm833 = vmor %vm831, %vm832
  %v834 = vsel %vm833, %v826, %v830
  %v835 = vand.u32 2147483647, %v825
  %vm836 = vcmp.eq.f32.partialorder %v835, 8.507059e+37
  %v837 = vand.u32 %v825, 2147483648
  %v838 = vor.u32 1.1754944e-38, %v837
  %v839 = vsel %vm836, %v838, %v834
  %v840 = vmul.f32 1.0, %v839
  %v841 = vadd.f32 %v819, %v798
  %v842 = vxor.u32 %v841, 2147483648
  %v843 = vmul.f32 %v842, 1.442695
  %v844 = vpow.pop %v843
  %v845 = vadd.f32 %v844, 1.0
  %v846 = vrcp.pop %v845
  %v847 = vmul.f32 %v845, %v846
  %v848 = vsub.f32 1.0, %v847
  %v849 = vmul.f32 %v846, %v848
  %v850 = vadd.f32 %v846, %v849
  %vm851 = vweird.f32 %v845
  %vm852 = vweird.f32 %v846
  %vm853 = vmor %vm851, %vm852
  %v854 = vsel %vm853, %v846, %v850
  %v855 = vand.u32 2147483647, %v845
  %vm856 = vcmp.eq.f32.partialorder %v855, 8.507059e+37
  %v857 = vand.u32 %v845, 2147483648
  %v858 = vor.u32 1.1754944e-38, %v857
  %v859 = vsel %vm856, %v858, %v854
  %v860 = vmul.f32 1.0, %v859
  %v861 = vmul.f32 %v840, %v811
  %v862 = vadd.f32 %v820, %v861
  %v863 = vtanh.pop %v862
  %v864 = vsub.f32 1.0, %v860
  %v865 = vmul.f32 %v864, %v863
  %v866 = vmul.f32 %v860, %v771
  %v867 = vadd.f32 %v865, %v866
  %s868 = scalar_lea.vmem %s5, 48
  %869 = vst [vmem:[%s868] sm:$0xff] %v867
  %v870 = vpack.c.bf16 %v867, %v867
  %871 = vmatpush.bf16.msra.mxu0 %v174
  %872 = vmatpush.bf16.msra.mxu0 %v171
  %873 = vmatpush.bf16.msra.mxu0 %v168
  %874 = vmatpush.bf16.msra.mxu0 %v165
  %875 = vmatpush.bf16.msra.mxu0 %v162
  %876 = vmatpush.bf16.msra.mxu0 %v159
  %877 = vmatpush.bf16.msra.mxu0 %v156
  %878 = vmatpush.bf16.msra.mxu0 %v153
  %879 = vmatmul.bf16.gmra.mxu0 %v870
  %v880 = vpop.f32.mrf.mxu0
  %v881 = vadd.f32 %v67, %v880
  %v882 = vpop.f32.mrf.mxu0
  %883 = vdwg.mxu0
  %884 = vmatpush.bf16.msra.mxu0 %v175
  %885 = vmatpush.bf16.msra.mxu0 %v172
  %886 = vmatpush.bf16.msra.mxu0 %v169
  %887 = vmatpush.bf16.msra.mxu0 %v166
  %888 = vmatpush.bf16.msra.mxu0 %v163
  %889 = vmatpush.bf16.msra.mxu0 %v160
  %890 = vmatpush.bf16.msra.mxu0 %v157
  %891 = vmatpush.bf16.msra.mxu0 %v154
  %892 = vmatmul.bf16.gmra.mxu0 %v870
  %v893 = vpop.f32.mrf.mxu0
  %v894 = vadd.f32 %v68, %v893
  %v895 = vpop.f32.mrf.mxu0
  %896 = vdwg.mxu0
  %897 = vmatpush.bf16.msra.mxu0 %v176
  %898 = vmatpush.bf16.msra.mxu0 %v173
  %899 = vmatpush.bf16.msra.mxu0 %v170
  %900 = vmatpush.bf16.msra.mxu0 %v167
  %901 = vmatpush.bf16.msra.mxu0 %v164
  %902 = vmatpush.bf16.msra.mxu0 %v161
  %903 = vmatpush.bf16.msra.mxu0 %v158
  %904 = vmatpush.bf16.msra.mxu0 %v155
  %905 = vmatmul.bf16.gmra.mxu0 %v870
  %v906 = vpop.f32.mrf.mxu0
  %v907 = vadd.f32 %v69, %v906
  %v908 = vpop.f32.mrf.mxu0
  %909 = vdwg.mxu0
  %s910 = scalar_lea.vmem %s0, 168
  %v911 = vld [vmem:[%s910] sm:$0xff]
  %v912 = vld [vmem:[%s910 + $0x8] sm:$0xff]
  %v913 = vld [vmem:[%s910 + $0x10] sm:$0xff]
  %v914 = vadd.f32 %v911, %v61
  %v915 = vadd.f32 %v912, %v62
  %v916 = vadd.f32 %v913, %v63
  %v917 = vadd.f32 %v914, %v881
  %v918 = vxor.u32 %v917, 2147483648
  %v919 = vmul.f32 %v918, 1.442695
  %v920 = vpow.pop %v919
  %v921 = vadd.f32 %v920, 1.0
  %v922 = vrcp.pop %v921
  %v923 = vmul.f32 %v921, %v922
  %v924 = vsub.f32 1.0, %v923
  %v925 = vmul.f32 %v922, %v924
  %v926 = vadd.f32 %v922, %v925
  %vm927 = vweird.f32 %v921
  %vm928 = vweird.f32 %v922
  %vm929 = vmor %vm927, %vm928
  %v930 = vsel %vm929, %v922, %v926
  %v931 = vand.u32 2147483647, %v921
  %vm932 = vcmp.eq.f32.partialorder %v931, 8.507059e+37
  %v933 = vand.u32 %v921, 2147483648
  %v934 = vor.u32 1.1754944e-38, %v933
  %v935 = vsel %vm932, %v934, %v930
  %v936 = vmul.f32 1.0, %v935
  %v937 = vadd.f32 %v915, %v894
  %v938 = vxor.u32 %v937, 2147483648
  %v939 = vmul.f32 %v938, 1.442695
  %v940 = vpow.pop %v939
  %v941 = vadd.f32 %v940, 1.0
  %v942 = vrcp.pop %v941
  %v943 = vmul.f32 %v941, %v942
  %v944 = vsub.f32 1.0, %v943
  %v945 = vmul.f32 %v942, %v944
  %v946 = vadd.f32 %v942, %v945
  %vm947 = vweird.f32 %v941
  %vm948 = vweird.f32 %v942
  %vm949 = vmor %vm947, %vm948
  %v950 = vsel %vm949, %v942, %v946
  %v951 = vand.u32 2147483647, %v941
  %vm952 = vcmp.eq.f32.partialorder %v951, 8.507059e+37
  %v953 = vand.u32 %v941, 2147483648
  %v954 = vor.u32 1.1754944e-38, %v953
  %v955 = vsel %vm952, %v954, %v950
  %v956 = vmul.f32 1.0, %v955
  %v957 = vmul.f32 %v936, %v907
  %v958 = vadd.f32 %v916, %v957
  %v959 = vtanh.pop %v958
  %v960 = vsub.f32 1.0, %v956
  %v961 = vmul.f32 %v960, %v959
  %v962 = vmul.f32 %v956, %v867
  %v963 = vadd.f32 %v961, %v962
  %s964 = scalar_lea.vmem %s5, 56
  %965 = vst [vmem:[%s964] sm:$0xff] %v963
  %966 = vst [vmem:[#allocation2] sm:$0xff] %v963
  %967 = vst [vmem:[%s6] sm:$0xff] %v963
  // Predicated region
  $region26: #{encoder_decoder_forward.10} parent=0 // pred_check
    _
  $region27: #{encoder_decoder_forward.10} parent=0 // pred_check_branch
    %969 = sbr.rel (0) target = $region29
  $region28: #{encoder_decoder_forward.10} parent=0 // pred_region
    _
  $region29: #{encoder_decoder_forward.10} parent=0 // pred_fallthru
    _
  // Predicated region
  $region30: #{encoder_decoder_forward.10} parent=0 // pred_check
    _
  $region31: #{encoder_decoder_forward.10} parent=0 // pred_check_branch
    %971 = sbr.rel (0) target = $region33
  $region32: #{encoder_decoder_forward.10} parent=0 // pred_region
    _
  $region33: #{encoder_decoder_forward.10} parent=0 // pred_fallthru
    _
  // Predicated region
  $region34: #{encoder_decoder_forward.10} parent=0 // pred_check
    _
  $region35: #{encoder_decoder_forward.10} parent=0 // pred_check_branch
    %973 = sbr.rel (0) target = $region37
  $region36: #{encoder_decoder_forward.10} parent=0 // pred_region
    _
  $region37: #{encoder_decoder_forward.10} parent=0 // pred_fallthru
    _
  // Predicated region
  $region38: #{encoder_decoder_forward.10} parent=0 // pred_check
    _
  $region39: #{encoder_decoder_forward.10} parent=0 // pred_check_branch
    %975 = sbr.rel (0) target = $region41
  $region40: #{encoder_decoder_forward.10} parent=0 // pred_region
    _
  $region41: #{encoder_decoder_forward.10} parent=0 // pred_fallthru
    _

</llo_original>
